<compile_context>
chip_gen: v5e
topology: v5e:2x2
jax: 0.10.0
libtpu: 0.0.40
codegen_flags: <defaults>
</compile_context>

<pallas_src>
import jax
import jax.numpy as jnp
from jax import lax
from jax.experimental import pallas as pl
from jax.experimental.pallas import tpu as pltpu


# ---------------- fused Pallas kernel ----------------

def _lrelu(v):
    return jnp.where(v > 0, v, 0.2 * v)


def dqn_fused_kernel(x_ref, w1_ref, t1_ref, w2_ref, t2_ref, mask_ref,
                     wf1_ref, bf1_ref, wf2_ref, bf2_ref, wf3_ref, bf3_ref,
                     o_ref, h1e_ref, z1_ref):
    # x_ref : (N, Cin, Pext)   padded-flattened input, Pext = Hp*Wp + 2*(Wp+1)
    # w*_ref: (9, Cout, Cin)   conv taps (BN scale folded in), t*: (Cout, 1) shift
    # wf1   : (C2, Pp, hidden) fc1 weight re-laid-out on the padded grid
    n, _, pext = x_ref.shape
    c2 = w2_ref.shape[1]
    pp = mask_ref.shape[1]                 # Hp * Wp
    wp = (pext - pp) // 2 - 1              # padded image width
    margin = wp + 1
    offs = [dy * wp + dx for dy in range(3) for dx in range(3)]

    def conv9(w_ref, src):                 # src: (Cin, Pext) -> (Cout, Pp)
        acc = jnp.dot(w_ref[0], src[:, 0:pp], preferred_element_type=jnp.float32)
        for k in range(1, 9):
            s = offs[k]
            acc = acc + jnp.dot(w_ref[k], src[:, s:s + pp],
                                preferred_element_type=jnp.float32)
        return acc

    mask = mask_ref[...]                   # (1, Pp) interior mask (1 inside, 0 border)
    bf1 = bf1_ref[...]                     # (1, hidden)
    h1e_ref[...] = jnp.zeros_like(h1e_ref)  # zero margins once

    for b in range(n):                     # tiny static batch loop
        # conv1 + folded BN/bias + LeakyReLU; border pixels re-zeroed so the
        # slab itself provides conv2's zero padding.
        h1 = _lrelu(conv9(w1_ref, x_ref[b]) + t1_ref[...]) * mask      # (C1, Pp)
        h1e_ref[b, :, margin:margin + pp] = h1

        # conv2 + folded BN/bias + LeakyReLU (border columns are garbage, but
        # the matching fc1 weight rows are zero so they never contribute).
        h2 = _lrelu(conv9(w2_ref, h1e_ref[b]) + t2_ref[...])           # (C2, Pp)

        # fc1 for this sample: flatten-free channel-wise accumulation.
        acc = bf1                                                       # (1, hidden)
        for c in range(c2):
            acc = acc + jnp.dot(h2[c:c + 1, :], wf1_ref[c],
                                preferred_element_type=jnp.float32)
        z1_ref[b:b + 1, :] = _lrelu(acc)

    # fc2 / fc3 on the (N, hidden) slab.
    z = z1_ref[...]
    z = _lrelu(jnp.dot(z, wf2_ref[...], preferred_element_type=jnp.float32)
               + bf2_ref[...])
    o_ref[...] = (jnp.dot(z, wf3_ref[...], preferred_element_type=jnp.float32)
                  + bf3_ref[...])


def _vmem():
    return pl.BlockSpec(memory_space=pltpu.MemorySpace.VMEM)


# ---------------- wrapper ----------------

def avgpool2(x):
    # F.interpolate(scale_factor=0.5, mode='area') == 2x2 non-overlapping mean (NCHW)
    n, c, h, w = x.shape
    return x.reshape(n, c, h // 2, 2, w // 2, 2).mean(axis=(3, 5))


@jax.jit
def dqn_forward(p, image, subject):
    yi = jnp.concatenate([avgpool2(image), avgpool2(subject)], axis=1)   # (N, 2, H, W)
    n, cin, h, w = yi.shape
    hp, wp = h + 2, w + 2
    pp = hp * wp
    margin = wp + 1

    # Padded-grid, flattened, with extra zero margin so all 9 conv shifts are
    # static in-bounds slices.
    x = jnp.pad(yi, ((0, 0), (0, 0), (1, 1), (1, 1))).reshape(n, cin, pp)
    x = jnp.pad(x, ((0, 0), (0, 0), (margin, margin)))                   # (N, 2, Pext)

    c1 = p['w1'].shape[1]
    hidden = p['wf2'].shape[1]
    d_out = p['wf3'].shape[1]
    pext = x.shape[2]

    args = (x, p['w1'], p['t1'], p['w2'], p['t2'], p['mask'],
            p['wf1'], p['bf1'], p['wf2'], p['bf2'], p['wf3'], p['bf3'])

    return pl.pallas_call(
        dqn_fused_kernel,
        out_shape=jax.ShapeDtypeStruct((n, d_out), jnp.float32),
        in_specs=[_vmem() for _ in args],
        out_specs=_vmem(),
        scratch_shapes=[pltpu.VMEM((n, c1, pext), jnp.float32),   # padded h1 slab
                        pltpu.VMEM((n, hidden), jnp.float32)],    # fc1 output
    )(*args)


# ---------------- parameter init (raw + kernel-layout) ----------------

def fold_bn(gamma, beta, mean, var, eps=1e-5):
    scale = gamma / jnp.sqrt(var + eps)
    shift = beta - mean * scale
    return scale, shift


def init_params(key, channel1, channel2, hidden, d_image, d_dict):
    h = w = d_image                              # (d_image - 3 + 2) // 1 + 1 == d_image
    hp, wp = h + 2, w + 2
    pp = hp * wp
    flat_dim = channel2 * h * w
    ks = jax.random.split(key, 16)

    raw = dict(
        cw1=jax.random.normal(ks[0], (channel1, 2, 3, 3), jnp.float32) * 0.1,
        cb1=jax.random.normal(ks[1], (channel1,), jnp.float32) * 0.1,
        g1=1.0 + 0.1 * jax.random.normal(ks[2], (channel1,), jnp.float32),
        be1=0.1 * jax.random.normal(ks[3], (channel1,), jnp.float32),
        m1=0.1 * jax.random.normal(ks[4], (channel1,), jnp.float32),
        v1=0.5 + jax.random.uniform(ks[5], (channel1,), jnp.float32),
        cw2=jax.random.normal(ks[6], (channel2, channel1, 3, 3), jnp.float32) * 0.1,
        cb2=jax.random.normal(ks[7], (channel2,), jnp.float32) * 0.1,
        g2=1.0 + 0.1 * jax.random.normal(ks[8], (channel2,), jnp.float32),
        be2=0.1 * jax.random.normal(ks[9], (channel2,), jnp.float32),
        m2=0.1 * jax.random.normal(ks[10], (channel2,), jnp.float32),
        v2=0.5 + jax.random.uniform(ks[11], (channel2,), jnp.float32),
        lw1=jax.random.normal(ks[12], (hidden, flat_dim), jnp.float32) * 0.05,
        lb1=jnp.zeros((hidden,), jnp.float32),
        lw2=jax.random.normal(ks[13], (hidden, hidden), jnp.float32) * 0.1,
        lb2=0.1 * jax.random.normal(ks[14], (hidden,), jnp.float32),
        lw3=jax.random.normal(ks[15], (d_dict, hidden), jnp.float32) * 0.1,
        lb3=jnp.zeros((d_dict,), jnp.float32),
    )

    s1, sh1 = fold_bn(raw['g1'], raw['be1'], raw['m1'], raw['v1'])
    s2, sh2 = fold_bn(raw['g2'], raw['be2'], raw['m2'], raw['v2'])

    def conv_taps(cw, scale):                    # OIHW -> (9, O, I), BN scale folded
        wsc = cw * scale[:, None, None, None]
        return wsc.transpose(2, 3, 0, 1).reshape(9, cw.shape[0], cw.shape[1])

    # interior mask on the padded grid
    mask = jnp.zeros((hp, wp), jnp.float32).at[1:h + 1, 1:w + 1].set(1.0).reshape(1, pp)

    # fc1 weight: (hidden, C2*H*W) with PyTorch NCHW flatten order -> (C2, Pp, hidden)
    # on the padded grid, zero rows at border positions.
    wf1 = raw['lw1'].T.reshape(channel2, h, w, hidden)
    wf1 = jnp.pad(wf1, ((0, 0), (1, 1), (1, 1), (0, 0))).reshape(channel2, pp, hidden)

    kernel_params = dict(
        w1=conv_taps(raw['cw1'], s1),
        t1=(raw['cb1'] * s1 + sh1).reshape(channel1, 1),
        w2=conv_taps(raw['cw2'], s2),
        t2=(raw['cb2'] * s2 + sh2).reshape(channel2, 1),
        mask=mask,
        wf1=wf1, bf1=raw['lb1'].reshape(1, -1),
        wf2=raw['lw2'].T, bf2=raw['lb2'].reshape(1, -1),
        wf3=raw['lw3'].T, bf3=raw['lb3'].reshape(1, -1),
    )
    return raw, kernel_params


# ---------------- pure-JAX reference (verification) ----------------

def ref_forward(raw, image, subject):
    yi = jnp.concatenate([avgpool2(image), avgpool2(subject)], axis=1)

    def conv(x, w, b):
        return lax.conv_general_dilated(
            x, w, (1, 1), 'SAME',
            dimension_numbers=('NCHW', 'OIHW', 'NCHW')) + b[None, :, None, None]

    def bn(x, g, beta, m, v):
        return ((x - m[None, :, None, None]) /
                jnp.sqrt(v[None, :, None, None] + 1e-5)) * g[None, :, None, None] \
               + beta[None, :, None, None]

    def lrelu(x):
        return jnp.where(x > 0, x, 0.2 * x)

    h = lrelu(bn(conv(yi, raw['cw1'], raw['cb1']), raw['g1'], raw['be1'], raw['m1'], raw['v1']))
    h = lrelu(bn(conv(h, raw['cw2'], raw['cb2']), raw['g2'], raw['be2'], raw['m2'], raw['v2']))
    flat = h.reshape(h.shape[0], -1)                     # PyTorch NCHW flatten
    h = lrelu(flat @ raw['lw1'].T + raw['lb1'])
    h = lrelu(h @ raw['lw2'].T + raw['lb2'])
    return h @ raw['lw3'].T + raw['lb3']


if __name__ == "__main__":
    # param dict implied by DQN.__init__: d_image = 8 (post-downsample spatial),
    # conv_channel1 = 8, conv_channel2 = 16, d_hidden = 32, d_dict = 10
    channel1, channel2, hidden, d_image, d_dict = 8, 16, 32, 8, 10
    batch = 2

    key = jax.random.PRNGKey(0)
    k_img, k_sub, k_par = jax.random.split(key, 3)
    image = jax.random.normal(k_img, (batch, 1, 2 * d_image, 2 * d_image), jnp.float32)
    subject = jax.random.normal(k_sub, (batch, 1, 2 * d_image, 2 * d_image), jnp.float32)

    raw, params = init_params(k_par, channel1, channel2, hidden, d_image, d_dict)

    out = jax.block_until_ready(dqn_forward(params, image, subject))
    ref = jax.block_until_ready(ref_forward(raw, image, subject))

    assert out.shape == (batch, d_dict), out.shape
    assert jnp.allclose(out, ref, atol=1e-3, rtol=1e-3), \
        f"mismatch: max abs err {jnp.max(jnp.abs(out - ref))}"

    print("KERNEL_OK")
</pallas_src>

<mosaic_0001>
module attributes {stable_mosaic.version = 11 : i64} {
  func.func @dqn_fused_kernel(%arg0: memref<2x2x122xf32, #tpu.memory_space<vmem>>, %arg1: memref<9x8x2xf32, #tpu.memory_space<vmem>>, %arg2: memref<8x1xf32, #tpu.memory_space<vmem>>, %arg3: memref<9x16x8xf32, #tpu.memory_space<vmem>>, %arg4: memref<16x1xf32, #tpu.memory_space<vmem>>, %arg5: memref<1x100xf32, #tpu.memory_space<vmem>>, %arg6: memref<16x100x32xf32, #tpu.memory_space<vmem>>, %arg7: memref<1x32xf32, #tpu.memory_space<vmem>>, %arg8: memref<32x32xf32, #tpu.memory_space<vmem>>, %arg9: memref<1x32xf32, #tpu.memory_space<vmem>>, %arg10: memref<32x10xf32, #tpu.memory_space<vmem>>, %arg11: memref<1x10xf32, #tpu.memory_space<vmem>>, %arg12: memref<2x10xf32, #tpu.memory_space<vmem>>, %arg13: memref<2x8x122xf32, #tpu.memory_space<vmem>>, %arg14: memref<2x32xf32, #tpu.memory_space<vmem>>) attributes {dimension_semantics = [], scalar_prefetch = 0 : i64, scratch_operands = 2 : i64, tpu.core_type = #tpu.core_type<tc>} {
    %c0 = arith.constant 0 : index
    %c0_0 = arith.constant 0 : index
    %0 = vector.load %arg5[%c0, %c0_0] : memref<1x100xf32, #tpu.memory_space<vmem>>, vector<1x100xf32>
    %c0_1 = arith.constant 0 : index
    %c0_2 = arith.constant 0 : index
    %1 = vector.load %arg7[%c0_1, %c0_2] : memref<1x32xf32, #tpu.memory_space<vmem>>, vector<1x32xf32>
    %cst = arith.constant 0.000000e+00 : f32
    %2 = vector.broadcast %cst : f32 to vector<2x8x122xf32>
    %c0_3 = arith.constant 0 : index
    %c0_4 = arith.constant 0 : index
    %c0_5 = arith.constant 0 : index
    %3 = vector.load %arg13[%c0_3, %c0_4, %c0_5] : memref<2x8x122xf32, #tpu.memory_space<vmem>>, vector<2x8x122xf32>
    tpu.vector_store %arg13[%c0_3, %c0_4, %c0_5], %2 {strides = array<i32>} : memref<2x8x122xf32, #tpu.memory_space<vmem>>, vector<2x8x122xf32>,
    %c0_6 = arith.constant 0 : index
    %c0_7 = arith.constant 0 : index
    %c0_8 = arith.constant 0 : index
    %4 = vector.load %arg0[%c0_6, %c0_7, %c0_8] : memref<2x2x122xf32, #tpu.memory_space<vmem>>, vector<1x2x122xf32>
    %5 = vector.shape_cast %4 : vector<1x2x122xf32> to vector<2x122xf32>
    %c0_9 = arith.constant 0 : index
    %c0_10 = arith.constant 0 : index
    %c0_11 = arith.constant 0 : index
    %6 = vector.load %arg1[%c0_9, %c0_10, %c0_11] : memref<9x8x2xf32, #tpu.memory_space<vmem>>, vector<1x8x2xf32>
    %7 = vector.shape_cast %6 : vector<1x8x2xf32> to vector<8x2xf32>
    %8 = vector.extract_strided_slice %5 {offsets = [0, 0], sizes = [2, 100], strides = [1, 1]} : vector<2x122xf32> to vector<2x100xf32>
    %cst_12 = arith.constant dense<0.000000e+00> : vector<8x100xf32>
    %9 = tpu.matmul %7, %8, %cst_12 {dimension_numbers = #tpu.dot_dimension_numbers<[1], [0], [0], [1], [0, 0, 1, 1], [], []>} : vector<8x2xf32>, vector<2x100xf32>, vector<8x100xf32> -> vector<8x100xf32>
    %c1 = arith.constant 1 : index
    %c0_13 = arith.constant 0 : index
    %c0_14 = arith.constant 0 : index
    %10 = vector.load %arg1[%c1, %c0_13, %c0_14] : memref<9x8x2xf32, #tpu.memory_space<vmem>>, vector<1x8x2xf32>
    %11 = vector.shape_cast %10 : vector<1x8x2xf32> to vector<8x2xf32>
    %12 = vector.extract_strided_slice %5 {offsets = [0, 1], sizes = [2, 100], strides = [1, 1]} : vector<2x122xf32> to vector<2x100xf32>
    %cst_15 = arith.constant dense<0.000000e+00> : vector<8x100xf32>
    %13 = tpu.matmul %11, %12, %cst_15 {dimension_numbers = #tpu.dot_dimension_numbers<[1], [0], [0], [1], [0, 0, 1, 1], [], []>} : vector<8x2xf32>, vector<2x100xf32>, vector<8x100xf32> -> vector<8x100xf32>
    %14 = arith.addf %9, %13 : vector<8x100xf32>
    %c2 = arith.constant 2 : index
    %c0_16 = arith.constant 0 : index
    %c0_17 = arith.constant 0 : index
    %15 = vector.load %arg1[%c2, %c0_16, %c0_17] : memref<9x8x2xf32, #tpu.memory_space<vmem>>, vector<1x8x2xf32>
    %16 = vector.shape_cast %15 : vector<1x8x2xf32> to vector<8x2xf32>
    %17 = vector.extract_strided_slice %5 {offsets = [0, 2], sizes = [2, 100], strides = [1, 1]} : vector<2x122xf32> to vector<2x100xf32>
    %cst_18 = arith.constant dense<0.000000e+00> : vector<8x100xf32>
    %18 = tpu.matmul %16, %17, %cst_18 {dimension_numbers = #tpu.dot_dimension_numbers<[1], [0], [0], [1], [0, 0, 1, 1], [], []>} : vector<8x2xf32>, vector<2x100xf32>, vector<8x100xf32> -> vector<8x100xf32>
    %19 = arith.addf %14, %18 : vector<8x100xf32>
    %c3 = arith.constant 3 : index
    %c0_19 = arith.constant 0 : index
    %c0_20 = arith.constant 0 : index
    %20 = vector.load %arg1[%c3, %c0_19, %c0_20] : memref<9x8x2xf32, #tpu.memory_space<vmem>>, vector<1x8x2xf32>
    %21 = vector.shape_cast %20 : vector<1x8x2xf32> to vector<8x2xf32>
    %22 = vector.extract_strided_slice %5 {offsets = [0, 10], sizes = [2, 100], strides = [1, 1]} : vector<2x122xf32> to vector<2x100xf32>
    %cst_21 = arith.constant dense<0.000000e+00> : vector<8x100xf32>
    %23 = tpu.matmul %21, %22, %cst_21 {dimension_numbers = #tpu.dot_dimension_numbers<[1], [0], [0], [1], [0, 0, 1, 1], [], []>} : vector<8x2xf32>, vector<2x100xf32>, vector<8x100xf32> -> vector<8x100xf32>
    %24 = arith.addf %19, %23 : vector<8x100xf32>
    %c4 = arith.constant 4 : index
    %c0_22 = arith.constant 0 : index
    %c0_23 = arith.constant 0 : index
    %25 = vector.load %arg1[%c4, %c0_22, %c0_23] : memref<9x8x2xf32, #tpu.memory_space<vmem>>, vector<1x8x2xf32>
    %26 = vector.shape_cast %25 : vector<1x8x2xf32> to vector<8x2xf32>
    %27 = vector.extract_strided_slice %5 {offsets = [0, 11], sizes = [2, 100], strides = [1, 1]} : vector<2x122xf32> to vector<2x100xf32>
    %cst_24 = arith.constant dense<0.000000e+00> : vector<8x100xf32>
    %28 = tpu.matmul %26, %27, %cst_24 {dimension_numbers = #tpu.dot_dimension_numbers<[1], [0], [0], [1], [0, 0, 1, 1], [], []>} : vector<8x2xf32>, vector<2x100xf32>, vector<8x100xf32> -> vector<8x100xf32>
    %29 = arith.addf %24, %28 : vector<8x100xf32>
    %c5 = arith.constant 5 : index
    %c0_25 = arith.constant 0 : index
    %c0_26 = arith.constant 0 : index
    %30 = vector.load %arg1[%c5, %c0_25, %c0_26] : memref<9x8x2xf32, #tpu.memory_space<vmem>>, vector<1x8x2xf32>
    %31 = vector.shape_cast %30 : vector<1x8x2xf32> to vector<8x2xf32>
    %32 = vector.extract_strided_slice %5 {offsets = [0, 12], sizes = [2, 100], strides = [1, 1]} : vector<2x122xf32> to vector<2x100xf32>
    %cst_27 = arith.constant dense<0.000000e+00> : vector<8x100xf32>
    %33 = tpu.matmul %31, %32, %cst_27 {dimension_numbers = #tpu.dot_dimension_numbers<[1], [0], [0], [1], [0, 0, 1, 1], [], []>} : vector<8x2xf32>, vector<2x100xf32>, vector<8x100xf32> -> vector<8x100xf32>
    %34 = arith.addf %29, %33 : vector<8x100xf32>
    %c6 = arith.constant 6 : index
    %c0_28 = arith.constant 0 : index
    %c0_29 = arith.constant 0 : index
    %35 = vector.load %arg1[%c6, %c0_28, %c0_29] : memref<9x8x2xf32, #tpu.memory_space<vmem>>, vector<1x8x2xf32>
    %36 = vector.shape_cast %35 : vector<1x8x2xf32> to vector<8x2xf32>
    %37 = vector.extract_strided_slice %5 {offsets = [0, 20], sizes = [2, 100], strides = [1, 1]} : vector<2x122xf32> to vector<2x100xf32>
    %cst_30 = arith.constant dense<0.000000e+00> : vector<8x100xf32>
    %38 = tpu.matmul %36, %37, %cst_30 {dimension_numbers = #tpu.dot_dimension_numbers<[1], [0], [0], [1], [0, 0, 1, 1], [], []>} : vector<8x2xf32>, vector<2x100xf32>, vector<8x100xf32> -> vector<8x100xf32>
    %39 = arith.addf %34, %38 : vector<8x100xf32>
    %c7 = arith.constant 7 : index
    %c0_31 = arith.constant 0 : index
    %c0_32 = arith.constant 0 : index
    %40 = vector.load %arg1[%c7, %c0_31, %c0_32] : memref<9x8x2xf32, #tpu.memory_space<vmem>>, vector<1x8x2xf32>
    %41 = vector.shape_cast %40 : vector<1x8x2xf32> to vector<8x2xf32>
    %42 = vector.extract_strided_slice %5 {offsets = [0, 21], sizes = [2, 100], strides = [1, 1]} : vector<2x122xf32> to vector<2x100xf32>
    %cst_33 = arith.constant dense<0.000000e+00> : vector<8x100xf32>
    %43 = tpu.matmul %41, %42, %cst_33 {dimension_numbers = #tpu.dot_dimension_numbers<[1], [0], [0], [1], [0, 0, 1, 1], [], []>} : vector<8x2xf32>, vector<2x100xf32>, vector<8x100xf32> -> vector<8x100xf32>
    %44 = arith.addf %39, %43 : vector<8x100xf32>
    %c8 = arith.constant 8 : index
    %c0_34 = arith.constant 0 : index
    %c0_35 = arith.constant 0 : index
    %45 = vector.load %arg1[%c8, %c0_34, %c0_35] : memref<9x8x2xf32, #tpu.memory_space<vmem>>, vector<1x8x2xf32>
    %46 = vector.shape_cast %45 : vector<1x8x2xf32> to vector<8x2xf32>
    %47 = vector.extract_strided_slice %5 {offsets = [0, 22], sizes = [2, 100], strides = [1, 1]} : vector<2x122xf32> to vector<2x100xf32>
    %cst_36 = arith.constant dense<0.000000e+00> : vector<8x100xf32>
    %48 = tpu.matmul %46, %47, %cst_36 {dimension_numbers = #tpu.dot_dimension_numbers<[1], [0], [0], [1], [0, 0, 1, 1], [], []>} : vector<8x2xf32>, vector<2x100xf32>, vector<8x100xf32> -> vector<8x100xf32>
    %49 = arith.addf %44, %48 : vector<8x100xf32>
    %c0_37 = arith.constant 0 : index
    %c0_38 = arith.constant 0 : index
    %50 = vector.load %arg2[%c0_37, %c0_38] : memref<8x1xf32, #tpu.memory_space<vmem>>, vector<8x1xf32>
    %51 = vector.broadcast %50 : vector<8x1xf32> to vector<8x100xf32>
    %52 = arith.addf %49, %51 : vector<8x100xf32>
    %cst_39 = arith.constant 0.000000e+00 : f32
    %53 = vector.broadcast %cst_39 : f32 to vector<8x100xf32>
    %54 = arith.cmpf ogt, %52, %53 : vector<8x100xf32>
    %cst_40 = arith.constant 2.000000e-01 : f32
    %55 = vector.broadcast %cst_40 : f32 to vector<8x100xf32>
    %56 = arith.mulf %55, %52 : vector<8x100xf32>
    %57 = arith.select %54, %52, %56 : vector<8x100xi1>, vector<8x100xf32>
    %58 = vector.broadcast %0 : vector<1x100xf32> to vector<8x100xf32>
    %59 = arith.mulf %57, %58 : vector<8x100xf32>
    %c0_41 = arith.constant 0 : index
    %c0_42 = arith.constant 0 : index
    %c11 = arith.constant 11 : index
    %60 = vector.load %arg13[%c0_41, %c0_42, %c11] : memref<2x8x122xf32, #tpu.memory_space<vmem>>, vector<1x8x100xf32>
    %61 = vector.shape_cast %60 : vector<1x8x100xf32> to vector<8x100xf32>
    %62 = vector.shape_cast %59 : vector<8x100xf32> to vector<1x8x100xf32>
    tpu.vector_store %arg13[%c0_41, %c0_42, %c11], %62 {strides = array<i32>} : memref<2x8x122xf32, #tpu.memory_space<vmem>>, vector<1x8x100xf32>,
    %c0_43 = arith.constant 0 : index
    %c0_44 = arith.constant 0 : index
    %c0_45 = arith.constant 0 : index
    %63 = vector.load %arg13[%c0_43, %c0_44, %c0_45] : memref<2x8x122xf32, #tpu.memory_space<vmem>>, vector<1x8x122xf32>
    %64 = vector.shape_cast %63 : vector<1x8x122xf32> to vector<8x122xf32>
    %c0_46 = arith.constant 0 : index
    %c0_47 = arith.constant 0 : index
    %c0_48 = arith.constant 0 : index
    %65 = vector.load %arg3[%c0_46, %c0_47, %c0_48] : memref<9x16x8xf32, #tpu.memory_space<vmem>>, vector<1x16x8xf32>
    %66 = vector.shape_cast %65 : vector<1x16x8xf32> to vector<16x8xf32>
    %67 = vector.extract_strided_slice %64 {offsets = [0, 0], sizes = [8, 100], strides = [1, 1]} : vector<8x122xf32> to vector<8x100xf32>
    %cst_49 = arith.constant dense<0.000000e+00> : vector<16x100xf32>
    %68 = tpu.matmul %66, %67, %cst_49 {dimension_numbers = #tpu.dot_dimension_numbers<[1], [0], [0], [1], [0, 0, 1, 1], [], []>} : vector<16x8xf32>, vector<8x100xf32>, vector<16x100xf32> -> vector<16x100xf32>
    %c1_50 = arith.constant 1 : index
    %c0_51 = arith.constant 0 : index
    %c0_52 = arith.constant 0 : index
    %69 = vector.load %arg3[%c1_50, %c0_51, %c0_52] : memref<9x16x8xf32, #tpu.memory_space<vmem>>, vector<1x16x8xf32>
    %70 = vector.shape_cast %69 : vector<1x16x8xf32> to vector<16x8xf32>
    %71 = vector.extract_strided_slice %64 {offsets = [0, 1], sizes = [8, 100], strides = [1, 1]} : vector<8x122xf32> to vector<8x100xf32>
    %cst_53 = arith.constant dense<0.000000e+00> : vector<16x100xf32>
    %72 = tpu.matmul %70, %71, %cst_53 {dimension_numbers = #tpu.dot_dimension_numbers<[1], [0], [0], [1], [0, 0, 1, 1], [], []>} : vector<16x8xf32>, vector<8x100xf32>, vector<16x100xf32> -> vector<16x100xf32>
    %73 = arith.addf %68, %72 : vector<16x100xf32>
    %c2_54 = arith.constant 2 : index
    %c0_55 = arith.constant 0 : index
    %c0_56 = arith.constant 0 : index
    %74 = vector.load %arg3[%c2_54, %c0_55, %c0_56] : memref<9x16x8xf32, #tpu.memory_space<vmem>>, vector<1x16x8xf32>
    %75 = vector.shape_cast %74 : vector<1x16x8xf32> to vector<16x8xf32>
    %76 = vector.extract_strided_slice %64 {offsets = [0, 2], sizes = [8, 100], strides = [1, 1]} : vector<8x122xf32> to vector<8x100xf32>
    %cst_57 = arith.constant dense<0.000000e+00> : vector<16x100xf32>
    %77 = tpu.matmul %75, %76, %cst_57 {dimension_numbers = #tpu.dot_dimension_numbers<[1], [0], [0], [1], [0, 0, 1, 1], [], []>} : vector<16x8xf32>, vector<8x100xf32>, vector<16x100xf32> -> vector<16x100xf32>
    %78 = arith.addf %73, %77 : vector<16x100xf32>
    %c3_58 = arith.constant 3 : index
    %c0_59 = arith.constant 0 : index
    %c0_60 = arith.constant 0 : index
    %79 = vector.load %arg3[%c3_58, %c0_59, %c0_60] : memref<9x16x8xf32, #tpu.memory_space<vmem>>, vector<1x16x8xf32>
    %80 = vector.shape_cast %79 : vector<1x16x8xf32> to vector<16x8xf32>
    %81 = vector.extract_strided_slice %64 {offsets = [0, 10], sizes = [8, 100], strides = [1, 1]} : vector<8x122xf32> to vector<8x100xf32>
    %cst_61 = arith.constant dense<0.000000e+00> : vector<16x100xf32>
    %82 = tpu.matmul %80, %81, %cst_61 {dimension_numbers = #tpu.dot_dimension_numbers<[1], [0], [0], [1], [0, 0, 1, 1], [], []>} : vector<16x8xf32>, vector<8x100xf32>, vector<16x100xf32> -> vector<16x100xf32>
    %83 = arith.addf %78, %82 : vector<16x100xf32>
    %c4_62 = arith.constant 4 : index
    %c0_63 = arith.constant 0 : index
    %c0_64 = arith.constant 0 : index
    %84 = vector.load %arg3[%c4_62, %c0_63, %c0_64] : memref<9x16x8xf32, #tpu.memory_space<vmem>>, vector<1x16x8xf32>
    %85 = vector.shape_cast %84 : vector<1x16x8xf32> to vector<16x8xf32>
    %86 = vector.extract_strided_slice %64 {offsets = [0, 11], sizes = [8, 100], strides = [1, 1]} : vector<8x122xf32> to vector<8x100xf32>
    %cst_65 = arith.constant dense<0.000000e+00> : vector<16x100xf32>
    %87 = tpu.matmul %85, %86, %cst_65 {dimension_numbers = #tpu.dot_dimension_numbers<[1], [0], [0], [1], [0, 0, 1, 1], [], []>} : vector<16x8xf32>, vector<8x100xf32>, vector<16x100xf32> -> vector<16x100xf32>
    %88 = arith.addf %83, %87 : vector<16x100xf32>
    %c5_66 = arith.constant 5 : index
    %c0_67 = arith.constant 0 : index
    %c0_68 = arith.constant 0 : index
    %89 = vector.load %arg3[%c5_66, %c0_67, %c0_68] : memref<9x16x8xf32, #tpu.memory_space<vmem>>, vector<1x16x8xf32>
    %90 = vector.shape_cast %89 : vector<1x16x8xf32> to vector<16x8xf32>
    %91 = vector.extract_strided_slice %64 {offsets = [0, 12], sizes = [8, 100], strides = [1, 1]} : vector<8x122xf32> to vector<8x100xf32>
    %cst_69 = arith.constant dense<0.000000e+00> : vector<16x100xf32>
    %92 = tpu.matmul %90, %91, %cst_69 {dimension_numbers = #tpu.dot_dimension_numbers<[1], [0], [0], [1], [0, 0, 1, 1], [], []>} : vector<16x8xf32>, vector<8x100xf32>, vector<16x100xf32> -> vector<16x100xf32>
    %93 = arith.addf %88, %92 : vector<16x100xf32>
    %c6_70 = arith.constant 6 : index
    %c0_71 = arith.constant 0 : index
    %c0_72 = arith.constant 0 : index
    %94 = vector.load %arg3[%c6_70, %c0_71, %c0_72] : memref<9x16x8xf32, #tpu.memory_space<vmem>>, vector<1x16x8xf32>
    %95 = vector.shape_cast %94 : vector<1x16x8xf32> to vector<16x8xf32>
    %96 = vector.extract_strided_slice %64 {offsets = [0, 20], sizes = [8, 100], strides = [1, 1]} : vector<8x122xf32> to vector<8x100xf32>
    %cst_73 = arith.constant dense<0.000000e+00> : vector<16x100xf32>
    %97 = tpu.matmul %95, %96, %cst_73 {dimension_numbers = #tpu.dot_dimension_numbers<[1], [0], [0], [1], [0, 0, 1, 1], [], []>} : vector<16x8xf32>, vector<8x100xf32>, vector<16x100xf32> -> vector<16x100xf32>
    %98 = arith.addf %93, %97 : vector<16x100xf32>
    %c7_74 = arith.constant 7 : index
    %c0_75 = arith.constant 0 : index
    %c0_76 = arith.constant 0 : index
    %99 = vector.load %arg3[%c7_74, %c0_75, %c0_76] : memref<9x16x8xf32, #tpu.memory_space<vmem>>, vector<1x16x8xf32>
    %100 = vector.shape_cast %99 : vector<1x16x8xf32> to vector<16x8xf32>
    %101 = vector.extract_strided_slice %64 {offsets = [0, 21], sizes = [8, 100], strides = [1, 1]} : vector<8x122xf32> to vector<8x100xf32>
    %cst_77 = arith.constant dense<0.000000e+00> : vector<16x100xf32>
    %102 = tpu.matmul %100, %101, %cst_77 {dimension_numbers = #tpu.dot_dimension_numbers<[1], [0], [0], [1], [0, 0, 1, 1], [], []>} : vector<16x8xf32>, vector<8x100xf32>, vector<16x100xf32> -> vector<16x100xf32>
    %103 = arith.addf %98, %102 : vector<16x100xf32>
    %c8_78 = arith.constant 8 : index
    %c0_79 = arith.constant 0 : index
    %c0_80 = arith.constant 0 : index
    %104 = vector.load %arg3[%c8_78, %c0_79, %c0_80] : memref<9x16x8xf32, #tpu.memory_space<vmem>>, vector<1x16x8xf32>
    %105 = vector.shape_cast %104 : vector<1x16x8xf32> to vector<16x8xf32>
    %106 = vector.extract_strided_slice %64 {offsets = [0, 22], sizes = [8, 100], strides = [1, 1]} : vector<8x122xf32> to vector<8x100xf32>
    %cst_81 = arith.constant dense<0.000000e+00> : vector<16x100xf32>
    %107 = tpu.matmul %105, %106, %cst_81 {dimension_numbers = #tpu.dot_dimension_numbers<[1], [0], [0], [1], [0, 0, 1, 1], [], []>} : vector<16x8xf32>, vector<8x100xf32>, vector<16x100xf32> -> vector<16x100xf32>
    %108 = arith.addf %103, %107 : vector<16x100xf32>
    %c0_82 = arith.constant 0 : index
    %c0_83 = arith.constant 0 : index
    %109 = vector.load %arg4[%c0_82, %c0_83] : memref<16x1xf32, #tpu.memory_space<vmem>>, vector<16x1xf32>
    %110 = vector.broadcast %109 : vector<16x1xf32> to vector<16x100xf32>
    %111 = arith.addf %108, %110 : vector<16x100xf32>
    %cst_84 = arith.constant 0.000000e+00 : f32
    %112 = vector.broadcast %cst_84 : f32 to vector<16x100xf32>
    %113 = arith.cmpf ogt, %111, %112 : vector<16x100xf32>
    %cst_85 = arith.constant 2.000000e-01 : f32
    %114 = vector.broadcast %cst_85 : f32 to vector<16x100xf32>
    %115 = arith.mulf %114, %111 : vector<16x100xf32>
    %116 = arith.select %113, %111, %115 : vector<16x100xi1>, vector<16x100xf32>
    %117 = vector.extract_strided_slice %116 {offsets = [0, 0], sizes = [1, 100], strides = [1, 1]} : vector<16x100xf32> to vector<1x100xf32>
    %c0_86 = arith.constant 0 : index
    %c0_87 = arith.constant 0 : index
    %c0_88 = arith.constant 0 : index
    %118 = vector.load %arg6[%c0_86, %c0_87, %c0_88] : memref<16x100x32xf32, #tpu.memory_space<vmem>>, vector<1x100x32xf32>
    %119 = vector.shape_cast %118 : vector<1x100x32xf32> to vector<100x32xf32>
    %cst_89 = arith.constant dense<0.000000e+00> : vector<1x32xf32>
    %120 = tpu.matmul %117, %119, %cst_89 {dimension_numbers = #tpu.dot_dimension_numbers<[1], [0], [0], [1], [0, 0, 1, 1], [], []>} : vector<1x100xf32>, vector<100x32xf32>, vector<1x32xf32> -> vector<1x32xf32>
    %121 = arith.addf %1, %120 : vector<1x32xf32>
    %122 = vector.extract_strided_slice %116 {offsets = [1, 0], sizes = [1, 100], strides = [1, 1]} : vector<16x100xf32> to vector<1x100xf32>
    %c1_90 = arith.constant 1 : index
    %c0_91 = arith.constant 0 : index
    %c0_92 = arith.constant 0 : index
    %123 = vector.load %arg6[%c1_90, %c0_91, %c0_92] : memref<16x100x32xf32, #tpu.memory_space<vmem>>, vector<1x100x32xf32>
    %124 = vector.shape_cast %123 : vector<1x100x32xf32> to vector<100x32xf32>
    %cst_93 = arith.constant dense<0.000000e+00> : vector<1x32xf32>
    %125 = tpu.matmul %122, %124, %cst_93 {dimension_numbers = #tpu.dot_dimension_numbers<[1], [0], [0], [1], [0, 0, 1, 1], [], []>} : vector<1x100xf32>, vector<100x32xf32>, vector<1x32xf32> -> vector<1x32xf32>
    %126 = arith.addf %121, %125 : vector<1x32xf32>
    %127 = vector.extract_strided_slice %116 {offsets = [2, 0], sizes = [1, 100], strides = [1, 1]} : vector<16x100xf32> to vector<1x100xf32>
    %c2_94 = arith.constant 2 : index
    %c0_95 = arith.constant 0 : index
    %c0_96 = arith.constant 0 : index
    %128 = vector.load %arg6[%c2_94, %c0_95, %c0_96] : memref<16x100x32xf32, #tpu.memory_space<vmem>>, vector<1x100x32xf32>
    %129 = vector.shape_cast %128 : vector<1x100x32xf32> to vector<100x32xf32>
    %cst_97 = arith.constant dense<0.000000e+00> : vector<1x32xf32>
    %130 = tpu.matmul %127, %129, %cst_97 {dimension_numbers = #tpu.dot_dimension_numbers<[1], [0], [0], [1], [0, 0, 1, 1], [], []>} : vector<1x100xf32>, vector<100x32xf32>, vector<1x32xf32> -> vector<1x32xf32>
    %131 = arith.addf %126, %130 : vector<1x32xf32>
    %132 = vector.extract_strided_slice %116 {offsets = [3, 0], sizes = [1, 100], strides = [1, 1]} : vector<16x100xf32> to vector<1x100xf32>
    %c3_98 = arith.constant 3 : index
    %c0_99 = arith.constant 0 : index
    %c0_100 = arith.constant 0 : index
    %133 = vector.load %arg6[%c3_98, %c0_99, %c0_100] : memref<16x100x32xf32, #tpu.memory_space<vmem>>, vector<1x100x32xf32>
    %134 = vector.shape_cast %133 : vector<1x100x32xf32> to vector<100x32xf32>
    %cst_101 = arith.constant dense<0.000000e+00> : vector<1x32xf32>
    %135 = tpu.matmul %132, %134, %cst_101 {dimension_numbers = #tpu.dot_dimension_numbers<[1], [0], [0], [1], [0, 0, 1, 1], [], []>} : vector<1x100xf32>, vector<100x32xf32>, vector<1x32xf32> -> vector<1x32xf32>
    %136 = arith.addf %131, %135 : vector<1x32xf32>
    %137 = vector.extract_strided_slice %116 {offsets = [4, 0], sizes = [1, 100], strides = [1, 1]} : vector<16x100xf32> to vector<1x100xf32>
    %c4_102 = arith.constant 4 : index
    %c0_103 = arith.constant 0 : index
    %c0_104 = arith.constant 0 : index
    %138 = vector.load %arg6[%c4_102, %c0_103, %c0_104] : memref<16x100x32xf32, #tpu.memory_space<vmem>>, vector<1x100x32xf32>
    %139 = vector.shape_cast %138 : vector<1x100x32xf32> to vector<100x32xf32>
    %cst_105 = arith.constant dense<0.000000e+00> : vector<1x32xf32>
    %140 = tpu.matmul %137, %139, %cst_105 {dimension_numbers = #tpu.dot_dimension_numbers<[1], [0], [0], [1], [0, 0, 1, 1], [], []>} : vector<1x100xf32>, vector<100x32xf32>, vector<1x32xf32> -> vector<1x32xf32>
    %141 = arith.addf %136, %140 : vector<1x32xf32>
    %142 = vector.extract_strided_slice %116 {offsets = [5, 0], sizes = [1, 100], strides = [1, 1]} : vector<16x100xf32> to vector<1x100xf32>
    %c5_106 = arith.constant 5 : index
    %c0_107 = arith.constant 0 : index
    %c0_108 = arith.constant 0 : index
    %143 = vector.load %arg6[%c5_106, %c0_107, %c0_108] : memref<16x100x32xf32, #tpu.memory_space<vmem>>, vector<1x100x32xf32>
    %144 = vector.shape_cast %143 : vector<1x100x32xf32> to vector<100x32xf32>
    %cst_109 = arith.constant dense<0.000000e+00> : vector<1x32xf32>
    %145 = tpu.matmul %142, %144, %cst_109 {dimension_numbers = #tpu.dot_dimension_numbers<[1], [0], [0], [1], [0, 0, 1, 1], [], []>} : vector<1x100xf32>, vector<100x32xf32>, vector<1x32xf32> -> vector<1x32xf32>
    %146 = arith.addf %141, %145 : vector<1x32xf32>
    %147 = vector.extract_strided_slice %116 {offsets = [6, 0], sizes = [1, 100], strides = [1, 1]} : vector<16x100xf32> to vector<1x100xf32>
    %c6_110 = arith.constant 6 : index
    %c0_111 = arith.constant 0 : index
    %c0_112 = arith.constant 0 : index
    %148 = vector.load %arg6[%c6_110, %c0_111, %c0_112] : memref<16x100x32xf32, #tpu.memory_space<vmem>>, vector<1x100x32xf32>
    %149 = vector.shape_cast %148 : vector<1x100x32xf32> to vector<100x32xf32>
    %cst_113 = arith.constant dense<0.000000e+00> : vector<1x32xf32>
    %150 = tpu.matmul %147, %149, %cst_113 {dimension_numbers = #tpu.dot_dimension_numbers<[1], [0], [0], [1], [0, 0, 1, 1], [], []>} : vector<1x100xf32>, vector<100x32xf32>, vector<1x32xf32> -> vector<1x32xf32>
    %151 = arith.addf %146, %150 : vector<1x32xf32>
    %152 = vector.extract_strided_slice %116 {offsets = [7, 0], sizes = [1, 100], strides = [1, 1]} : vector<16x100xf32> to vector<1x100xf32>
    %c7_114 = arith.constant 7 : index
    %c0_115 = arith.constant 0 : index
    %c0_116 = arith.constant 0 : index
    %153 = vector.load %arg6[%c7_114, %c0_115, %c0_116] : memref<16x100x32xf32, #tpu.memory_space<vmem>>, vector<1x100x32xf32>
    %154 = vector.shape_cast %153 : vector<1x100x32xf32> to vector<100x32xf32>
    %cst_117 = arith.constant dense<0.000000e+00> : vector<1x32xf32>
    %155 = tpu.matmul %152, %154, %cst_117 {dimension_numbers = #tpu.dot_dimension_numbers<[1], [0], [0], [1], [0, 0, 1, 1], [], []>} : vector<1x100xf32>, vector<100x32xf32>, vector<1x32xf32> -> vector<1x32xf32>
    %156 = arith.addf %151, %155 : vector<1x32xf32>
    %157 = vector.extract_strided_slice %116 {offsets = [8, 0], sizes = [1, 100], strides = [1, 1]} : vector<16x100xf32> to vector<1x100xf32>
    %c8_118 = arith.constant 8 : index
    %c0_119 = arith.constant 0 : index
    %c0_120 = arith.constant 0 : index
    %158 = vector.load %arg6[%c8_118, %c0_119, %c0_120] : memref<16x100x32xf32, #tpu.memory_space<vmem>>, vector<1x100x32xf32>
    %159 = vector.shape_cast %158 : vector<1x100x32xf32> to vector<100x32xf32>
    %cst_121 = arith.constant dense<0.000000e+00> : vector<1x32xf32>
    %160 = tpu.matmul %157, %159, %cst_121 {dimension_numbers = #tpu.dot_dimension_numbers<[1], [0], [0], [1], [0, 0, 1, 1], [], []>} : vector<1x100xf32>, vector<100x32xf32>, vector<1x32xf32> -> vector<1x32xf32>
    %161 = arith.addf %156, %160 : vector<1x32xf32>
    %162 = vector.extract_strided_slice %116 {offsets = [9, 0], sizes = [1, 100], strides = [1, 1]} : vector<16x100xf32> to vector<1x100xf32>
    %c9 = arith.constant 9 : index
    %c0_122 = arith.constant 0 : index
    %c0_123 = arith.constant 0 : index
    %163 = vector.load %arg6[%c9, %c0_122, %c0_123] : memref<16x100x32xf32, #tpu.memory_space<vmem>>, vector<1x100x32xf32>
    %164 = vector.shape_cast %163 : vector<1x100x32xf32> to vector<100x32xf32>
    %cst_124 = arith.constant dense<0.000000e+00> : vector<1x32xf32>
    %165 = tpu.matmul %162, %164, %cst_124 {dimension_numbers = #tpu.dot_dimension_numbers<[1], [0], [0], [1], [0, 0, 1, 1], [], []>} : vector<1x100xf32>, vector<100x32xf32>, vector<1x32xf32> -> vector<1x32xf32>
    %166 = arith.addf %161, %165 : vector<1x32xf32>
    %167 = vector.extract_strided_slice %116 {offsets = [10, 0], sizes = [1, 100], strides = [1, 1]} : vector<16x100xf32> to vector<1x100xf32>
    %c10 = arith.constant 10 : index
    %c0_125 = arith.constant 0 : index
    %c0_126 = arith.constant 0 : index
    %168 = vector.load %arg6[%c10, %c0_125, %c0_126] : memref<16x100x32xf32, #tpu.memory_space<vmem>>, vector<1x100x32xf32>
    %169 = vector.shape_cast %168 : vector<1x100x32xf32> to vector<100x32xf32>
    %cst_127 = arith.constant dense<0.000000e+00> : vector<1x32xf32>
    %170 = tpu.matmul %167, %169, %cst_127 {dimension_numbers = #tpu.dot_dimension_numbers<[1], [0], [0], [1], [0, 0, 1, 1], [], []>} : vector<1x100xf32>, vector<100x32xf32>, vector<1x32xf32> -> vector<1x32xf32>
    %171 = arith.addf %166, %170 : vector<1x32xf32>
    %172 = vector.extract_strided_slice %116 {offsets = [11, 0], sizes = [1, 100], strides = [1, 1]} : vector<16x100xf32> to vector<1x100xf32>
    %c11_128 = arith.constant 11 : index
    %c0_129 = arith.constant 0 : index
    %c0_130 = arith.constant 0 : index
    %173 = vector.load %arg6[%c11_128, %c0_129, %c0_130] : memref<16x100x32xf32, #tpu.memory_space<vmem>>, vector<1x100x32xf32>
    %174 = vector.shape_cast %173 : vector<1x100x32xf32> to vector<100x32xf32>
    %cst_131 = arith.constant dense<0.000000e+00> : vector<1x32xf32>
    %175 = tpu.matmul %172, %174, %cst_131 {dimension_numbers = #tpu.dot_dimension_numbers<[1], [0], [0], [1], [0, 0, 1, 1], [], []>} : vector<1x100xf32>, vector<100x32xf32>, vector<1x32xf32> -> vector<1x32xf32>
    %176 = arith.addf %171, %175 : vector<1x32xf32>
    %177 = vector.extract_strided_slice %116 {offsets = [12, 0], sizes = [1, 100], strides = [1, 1]} : vector<16x100xf32> to vector<1x100xf32>
    %c12 = arith.constant 12 : index
    %c0_132 = arith.constant 0 : index
    %c0_133 = arith.constant 0 : index
    %178 = vector.load %arg6[%c12, %c0_132, %c0_133] : memref<16x100x32xf32, #tpu.memory_space<vmem>>, vector<1x100x32xf32>
    %179 = vector.shape_cast %178 : vector<1x100x32xf32> to vector<100x32xf32>
    %cst_134 = arith.constant dense<0.000000e+00> : vector<1x32xf32>
    %180 = tpu.matmul %177, %179, %cst_134 {dimension_numbers = #tpu.dot_dimension_numbers<[1], [0], [0], [1], [0, 0, 1, 1], [], []>} : vector<1x100xf32>, vector<100x32xf32>, vector<1x32xf32> -> vector<1x32xf32>
    %181 = arith.addf %176, %180 : vector<1x32xf32>
    %182 = vector.extract_strided_slice %116 {offsets = [13, 0], sizes = [1, 100], strides = [1, 1]} : vector<16x100xf32> to vector<1x100xf32>
    %c13 = arith.constant 13 : index
    %c0_135 = arith.constant 0 : index
    %c0_136 = arith.constant 0 : index
    %183 = vector.load %arg6[%c13, %c0_135, %c0_136] : memref<16x100x32xf32, #tpu.memory_space<vmem>>, vector<1x100x32xf32>
    %184 = vector.shape_cast %183 : vector<1x100x32xf32> to vector<100x32xf32>
    %cst_137 = arith.constant dense<0.000000e+00> : vector<1x32xf32>
    %185 = tpu.matmul %182, %184, %cst_137 {dimension_numbers = #tpu.dot_dimension_numbers<[1], [0], [0], [1], [0, 0, 1, 1], [], []>} : vector<1x100xf32>, vector<100x32xf32>, vector<1x32xf32> -> vector<1x32xf32>
    %186 = arith.addf %181, %185 : vector<1x32xf32>
    %187 = vector.extract_strided_slice %116 {offsets = [14, 0], sizes = [1, 100], strides = [1, 1]} : vector<16x100xf32> to vector<1x100xf32>
    %c14 = arith.constant 14 : index
    %c0_138 = arith.constant 0 : index
    %c0_139 = arith.constant 0 : index
    %188 = vector.load %arg6[%c14, %c0_138, %c0_139] : memref<16x100x32xf32, #tpu.memory_space<vmem>>, vector<1x100x32xf32>
    %189 = vector.shape_cast %188 : vector<1x100x32xf32> to vector<100x32xf32>
    %cst_140 = arith.constant dense<0.000000e+00> : vector<1x32xf32>
    %190 = tpu.matmul %187, %189, %cst_140 {dimension_numbers = #tpu.dot_dimension_numbers<[1], [0], [0], [1], [0, 0, 1, 1], [], []>} : vector<1x100xf32>, vector<100x32xf32>, vector<1x32xf32> -> vector<1x32xf32>
    %191 = arith.addf %186, %190 : vector<1x32xf32>
    %192 = vector.extract_strided_slice %116 {offsets = [15, 0], sizes = [1, 100], strides = [1, 1]} : vector<16x100xf32> to vector<1x100xf32>
    %c15 = arith.constant 15 : index
    %c0_141 = arith.constant 0 : index
    %c0_142 = arith.constant 0 : index
    %193 = vector.load %arg6[%c15, %c0_141, %c0_142] : memref<16x100x32xf32, #tpu.memory_space<vmem>>, vector<1x100x32xf32>
    %194 = vector.shape_cast %193 : vector<1x100x32xf32> to vector<100x32xf32>
    %cst_143 = arith.constant dense<0.000000e+00> : vector<1x32xf32>
    %195 = tpu.matmul %192, %194, %cst_143 {dimension_numbers = #tpu.dot_dimension_numbers<[1], [0], [0], [1], [0, 0, 1, 1], [], []>} : vector<1x100xf32>, vector<100x32xf32>, vector<1x32xf32> -> vector<1x32xf32>
    %196 = arith.addf %191, %195 : vector<1x32xf32>
    %cst_144 = arith.constant 0.000000e+00 : f32
    %197 = vector.broadcast %cst_144 : f32 to vector<1x32xf32>
    %198 = arith.cmpf ogt, %196, %197 : vector<1x32xf32>
    %cst_145 = arith.constant 2.000000e-01 : f32
    %199 = vector.broadcast %cst_145 : f32 to vector<1x32xf32>
    %200 = arith.mulf %199, %196 : vector<1x32xf32>
    %201 = arith.select %198, %196, %200 : vector<1x32xi1>, vector<1x32xf32>
    %c0_146 = arith.constant 0 : index
    %c0_147 = arith.constant 0 : index
    %202 = vector.load %arg14[%c0_146, %c0_147] : memref<2x32xf32, #tpu.memory_space<vmem>>, vector<1x32xf32>
    tpu.vector_store %arg14[%c0_146, %c0_147], %201 {strides = array<i32>} : memref<2x32xf32, #tpu.memory_space<vmem>>, vector<1x32xf32>,
    %c1_148 = arith.constant 1 : index
    %c0_149 = arith.constant 0 : index
    %c0_150 = arith.constant 0 : index
    %203 = vector.load %arg0[%c1_148, %c0_149, %c0_150] : memref<2x2x122xf32, #tpu.memory_space<vmem>>, vector<1x2x122xf32>
    %204 = vector.shape_cast %203 : vector<1x2x122xf32> to vector<2x122xf32>
    %c0_151 = arith.constant 0 : index
    %c0_152 = arith.constant 0 : index
    %c0_153 = arith.constant 0 : index
    %205 = vector.load %arg1[%c0_151, %c0_152, %c0_153] : memref<9x8x2xf32, #tpu.memory_space<vmem>>, vector<1x8x2xf32>
    %206 = vector.shape_cast %205 : vector<1x8x2xf32> to vector<8x2xf32>
    %207 = vector.extract_strided_slice %204 {offsets = [0, 0], sizes = [2, 100], strides = [1, 1]} : vector<2x122xf32> to vector<2x100xf32>
    %cst_154 = arith.constant dense<0.000000e+00> : vector<8x100xf32>
    %208 = tpu.matmul %206, %207, %cst_154 {dimension_numbers = #tpu.dot_dimension_numbers<[1], [0], [0], [1], [0, 0, 1, 1], [], []>} : vector<8x2xf32>, vector<2x100xf32>, vector<8x100xf32> -> vector<8x100xf32>
    %c1_155 = arith.constant 1 : index
    %c0_156 = arith.constant 0 : index
    %c0_157 = arith.constant 0 : index
    %209 = vector.load %arg1[%c1_155, %c0_156, %c0_157] : memref<9x8x2xf32, #tpu.memory_space<vmem>>, vector<1x8x2xf32>
    %210 = vector.shape_cast %209 : vector<1x8x2xf32> to vector<8x2xf32>
    %211 = vector.extract_strided_slice %204 {offsets = [0, 1], sizes = [2, 100], strides = [1, 1]} : vector<2x122xf32> to vector<2x100xf32>
    %cst_158 = arith.constant dense<0.000000e+00> : vector<8x100xf32>
    %212 = tpu.matmul %210, %211, %cst_158 {dimension_numbers = #tpu.dot_dimension_numbers<[1], [0], [0], [1], [0, 0, 1, 1], [], []>} : vector<8x2xf32>, vector<2x100xf32>, vector<8x100xf32> -> vector<8x100xf32>
    %213 = arith.addf %208, %212 : vector<8x100xf32>
    %c2_159 = arith.constant 2 : index
    %c0_160 = arith.constant 0 : index
    %c0_161 = arith.constant 0 : index
    %214 = vector.load %arg1[%c2_159, %c0_160, %c0_161] : memref<9x8x2xf32, #tpu.memory_space<vmem>>, vector<1x8x2xf32>
    %215 = vector.shape_cast %214 : vector<1x8x2xf32> to vector<8x2xf32>
    %216 = vector.extract_strided_slice %204 {offsets = [0, 2], sizes = [2, 100], strides = [1, 1]} : vector<2x122xf32> to vector<2x100xf32>
    %cst_162 = arith.constant dense<0.000000e+00> : vector<8x100xf32>
    %217 = tpu.matmul %215, %216, %cst_162 {dimension_numbers = #tpu.dot_dimension_numbers<[1], [0], [0], [1], [0, 0, 1, 1], [], []>} : vector<8x2xf32>, vector<2x100xf32>, vector<8x100xf32> -> vector<8x100xf32>
    %218 = arith.addf %213, %217 : vector<8x100xf32>
    %c3_163 = arith.constant 3 : index
    %c0_164 = arith.constant 0 : index
    %c0_165 = arith.constant 0 : index
    %219 = vector.load %arg1[%c3_163, %c0_164, %c0_165] : memref<9x8x2xf32, #tpu.memory_space<vmem>>, vector<1x8x2xf32>
    %220 = vector.shape_cast %219 : vector<1x8x2xf32> to vector<8x2xf32>
    %221 = vector.extract_strided_slice %204 {offsets = [0, 10], sizes = [2, 100], strides = [1, 1]} : vector<2x122xf32> to vector<2x100xf32>
    %cst_166 = arith.constant dense<0.000000e+00> : vector<8x100xf32>
    %222 = tpu.matmul %220, %221, %cst_166 {dimension_numbers = #tpu.dot_dimension_numbers<[1], [0], [0], [1], [0, 0, 1, 1], [], []>} : vector<8x2xf32>, vector<2x100xf32>, vector<8x100xf32> -> vector<8x100xf32>
    %223 = arith.addf %218, %222 : vector<8x100xf32>
    %c4_167 = arith.constant 4 : index
    %c0_168 = arith.constant 0 : index
    %c0_169 = arith.constant 0 : index
    %224 = vector.load %arg1[%c4_167, %c0_168, %c0_169] : memref<9x8x2xf32, #tpu.memory_space<vmem>>, vector<1x8x2xf32>
    %225 = vector.shape_cast %224 : vector<1x8x2xf32> to vector<8x2xf32>
    %226 = vector.extract_strided_slice %204 {offsets = [0, 11], sizes = [2, 100], strides = [1, 1]} : vector<2x122xf32> to vector<2x100xf32>
    %cst_170 = arith.constant dense<0.000000e+00> : vector<8x100xf32>
    %227 = tpu.matmul %225, %226, %cst_170 {dimension_numbers = #tpu.dot_dimension_numbers<[1], [0], [0], [1], [0, 0, 1, 1], [], []>} : vector<8x2xf32>, vector<2x100xf32>, vector<8x100xf32> -> vector<8x100xf32>
    %228 = arith.addf %223, %227 : vector<8x100xf32>
    %c5_171 = arith.constant 5 : index
    %c0_172 = arith.constant 0 : index
    %c0_173 = arith.constant 0 : index
    %229 = vector.load %arg1[%c5_171, %c0_172, %c0_173] : memref<9x8x2xf32, #tpu.memory_space<vmem>>, vector<1x8x2xf32>
    %230 = vector.shape_cast %229 : vector<1x8x2xf32> to vector<8x2xf32>
    %231 = vector.extract_strided_slice %204 {offsets = [0, 12], sizes = [2, 100], strides = [1, 1]} : vector<2x122xf32> to vector<2x100xf32>
    %cst_174 = arith.constant dense<0.000000e+00> : vector<8x100xf32>
    %232 = tpu.matmul %230, %231, %cst_174 {dimension_numbers = #tpu.dot_dimension_numbers<[1], [0], [0], [1], [0, 0, 1, 1], [], []>} : vector<8x2xf32>, vector<2x100xf32>, vector<8x100xf32> -> vector<8x100xf32>
    %233 = arith.addf %228, %232 : vector<8x100xf32>
    %c6_175 = arith.constant 6 : index
    %c0_176 = arith.constant 0 : index
    %c0_177 = arith.constant 0 : index
    %234 = vector.load %arg1[%c6_175, %c0_176, %c0_177] : memref<9x8x2xf32, #tpu.memory_space<vmem>>, vector<1x8x2xf32>
    %235 = vector.shape_cast %234 : vector<1x8x2xf32> to vector<8x2xf32>
    %236 = vector.extract_strided_slice %204 {offsets = [0, 20], sizes = [2, 100], strides = [1, 1]} : vector<2x122xf32> to vector<2x100xf32>
    %cst_178 = arith.constant dense<0.000000e+00> : vector<8x100xf32>
    %237 = tpu.matmul %235, %236, %cst_178 {dimension_numbers = #tpu.dot_dimension_numbers<[1], [0], [0], [1], [0, 0, 1, 1], [], []>} : vector<8x2xf32>, vector<2x100xf32>, vector<8x100xf32> -> vector<8x100xf32>
    %238 = arith.addf %233, %237 : vector<8x100xf32>
    %c7_179 = arith.constant 7 : index
    %c0_180 = arith.constant 0 : index
    %c0_181 = arith.constant 0 : index
    %239 = vector.load %arg1[%c7_179, %c0_180, %c0_181] : memref<9x8x2xf32, #tpu.memory_space<vmem>>, vector<1x8x2xf32>
    %240 = vector.shape_cast %239 : vector<1x8x2xf32> to vector<8x2xf32>
    %241 = vector.extract_strided_slice %204 {offsets = [0, 21], sizes = [2, 100], strides = [1, 1]} : vector<2x122xf32> to vector<2x100xf32>
    %cst_182 = arith.constant dense<0.000000e+00> : vector<8x100xf32>
    %242 = tpu.matmul %240, %241, %cst_182 {dimension_numbers = #tpu.dot_dimension_numbers<[1], [0], [0], [1], [0, 0, 1, 1], [], []>} : vector<8x2xf32>, vector<2x100xf32>, vector<8x100xf32> -> vector<8x100xf32>
    %243 = arith.addf %238, %242 : vector<8x100xf32>
    %c8_183 = arith.constant 8 : index
    %c0_184 = arith.constant 0 : index
    %c0_185 = arith.constant 0 : index
    %244 = vector.load %arg1[%c8_183, %c0_184, %c0_185] : memref<9x8x2xf32, #tpu.memory_space<vmem>>, vector<1x8x2xf32>
    %245 = vector.shape_cast %244 : vector<1x8x2xf32> to vector<8x2xf32>
    %246 = vector.extract_strided_slice %204 {offsets = [0, 22], sizes = [2, 100], strides = [1, 1]} : vector<2x122xf32> to vector<2x100xf32>
    %cst_186 = arith.constant dense<0.000000e+00> : vector<8x100xf32>
    %247 = tpu.matmul %245, %246, %cst_186 {dimension_numbers = #tpu.dot_dimension_numbers<[1], [0], [0], [1], [0, 0, 1, 1], [], []>} : vector<8x2xf32>, vector<2x100xf32>, vector<8x100xf32> -> vector<8x100xf32>
    %248 = arith.addf %243, %247 : vector<8x100xf32>
    %c0_187 = arith.constant 0 : index
    %c0_188 = arith.constant 0 : index
    %249 = vector.load %arg2[%c0_187, %c0_188] : memref<8x1xf32, #tpu.memory_space<vmem>>, vector<8x1xf32>
    %250 = vector.broadcast %249 : vector<8x1xf32> to vector<8x100xf32>
    %251 = arith.addf %248, %250 : vector<8x100xf32>
    %cst_189 = arith.constant 0.000000e+00 : f32
    %252 = vector.broadcast %cst_189 : f32 to vector<8x100xf32>
    %253 = arith.cmpf ogt, %251, %252 : vector<8x100xf32>
    %cst_190 = arith.constant 2.000000e-01 : f32
    %254 = vector.broadcast %cst_190 : f32 to vector<8x100xf32>
    %255 = arith.mulf %254, %251 : vector<8x100xf32>
    %256 = arith.select %253, %251, %255 : vector<8x100xi1>, vector<8x100xf32>
    %257 = vector.broadcast %0 : vector<1x100xf32> to vector<8x100xf32>
    %258 = arith.mulf %256, %257 : vector<8x100xf32>
    %c1_191 = arith.constant 1 : index
    %c0_192 = arith.constant 0 : index
    %c11_193 = arith.constant 11 : index
    %259 = vector.load %arg13[%c1_191, %c0_192, %c11_193] : memref<2x8x122xf32, #tpu.memory_space<vmem>>, vector<1x8x100xf32>
    %260 = vector.shape_cast %259 : vector<1x8x100xf32> to vector<8x100xf32>
    %261 = vector.shape_cast %258 : vector<8x100xf32> to vector<1x8x100xf32>
    tpu.vector_store %arg13[%c1_191, %c0_192, %c11_193], %261 {strides = array<i32>} : memref<2x8x122xf32, #tpu.memory_space<vmem>>, vector<1x8x100xf32>,
    %c1_194 = arith.constant 1 : index
    %c0_195 = arith.constant 0 : index
    %c0_196 = arith.constant 0 : index
    %262 = vector.load %arg13[%c1_194, %c0_195, %c0_196] : memref<2x8x122xf32, #tpu.memory_space<vmem>>, vector<1x8x122xf32>
    %263 = vector.shape_cast %262 : vector<1x8x122xf32> to vector<8x122xf32>
    %c0_197 = arith.constant 0 : index
    %c0_198 = arith.constant 0 : index
    %c0_199 = arith.constant 0 : index
    %264 = vector.load %arg3[%c0_197, %c0_198, %c0_199] : memref<9x16x8xf32, #tpu.memory_space<vmem>>, vector<1x16x8xf32>
    %265 = vector.shape_cast %264 : vector<1x16x8xf32> to vector<16x8xf32>
    %266 = vector.extract_strided_slice %263 {offsets = [0, 0], sizes = [8, 100], strides = [1, 1]} : vector<8x122xf32> to vector<8x100xf32>
    %cst_200 = arith.constant dense<0.000000e+00> : vector<16x100xf32>
    %267 = tpu.matmul %265, %266, %cst_200 {dimension_numbers = #tpu.dot_dimension_numbers<[1], [0], [0], [1], [0, 0, 1, 1], [], []>} : vector<16x8xf32>, vector<8x100xf32>, vector<16x100xf32> -> vector<16x100xf32>
    %c1_201 = arith.constant 1 : index
    %c0_202 = arith.constant 0 : index
    %c0_203 = arith.constant 0 : index
    %268 = vector.load %arg3[%c1_201, %c0_202, %c0_203] : memref<9x16x8xf32, #tpu.memory_space<vmem>>, vector<1x16x8xf32>
    %269 = vector.shape_cast %268 : vector<1x16x8xf32> to vector<16x8xf32>
    %270 = vector.extract_strided_slice %263 {offsets = [0, 1], sizes = [8, 100], strides = [1, 1]} : vector<8x122xf32> to vector<8x100xf32>
    %cst_204 = arith.constant dense<0.000000e+00> : vector<16x100xf32>
    %271 = tpu.matmul %269, %270, %cst_204 {dimension_numbers = #tpu.dot_dimension_numbers<[1], [0], [0], [1], [0, 0, 1, 1], [], []>} : vector<16x8xf32>, vector<8x100xf32>, vector<16x100xf32> -> vector<16x100xf32>
    %272 = arith.addf %267, %271 : vector<16x100xf32>
    %c2_205 = arith.constant 2 : index
    %c0_206 = arith.constant 0 : index
    %c0_207 = arith.constant 0 : index
    %273 = vector.load %arg3[%c2_205, %c0_206, %c0_207] : memref<9x16x8xf32, #tpu.memory_space<vmem>>, vector<1x16x8xf32>
    %274 = vector.shape_cast %273 : vector<1x16x8xf32> to vector<16x8xf32>
    %275 = vector.extract_strided_slice %263 {offsets = [0, 2], sizes = [8, 100], strides = [1, 1]} : vector<8x122xf32> to vector<8x100xf32>
    %cst_208 = arith.constant dense<0.000000e+00> : vector<16x100xf32>
    %276 = tpu.matmul %274, %275, %cst_208 {dimension_numbers = #tpu.dot_dimension_numbers<[1], [0], [0], [1], [0, 0, 1, 1], [], []>} : vector<16x8xf32>, vector<8x100xf32>, vector<16x100xf32> -> vector<16x100xf32>
    %277 = arith.addf %272, %276 : vector<16x100xf32>
    %c3_209 = arith.constant 3 : index
    %c0_210 = arith.constant 0 : index
    %c0_211 = arith.constant 0 : index
    %278 = vector.load %arg3[%c3_209, %c0_210, %c0_211] : memref<9x16x8xf32, #tpu.memory_space<vmem>>, vector<1x16x8xf32>
    %279 = vector.shape_cast %278 : vector<1x16x8xf32> to vector<16x8xf32>
    %280 = vector.extract_strided_slice %263 {offsets = [0, 10], sizes = [8, 100], strides = [1, 1]} : vector<8x122xf32> to vector<8x100xf32>
    %cst_212 = arith.constant dense<0.000000e+00> : vector<16x100xf32>
    %281 = tpu.matmul %279, %280, %cst_212 {dimension_numbers = #tpu.dot_dimension_numbers<[1], [0], [0], [1], [0, 0, 1, 1], [], []>} : vector<16x8xf32>, vector<8x100xf32>, vector<16x100xf32> -> vector<16x100xf32>
    %282 = arith.addf %277, %281 : vector<16x100xf32>
    %c4_213 = arith.constant 4 : index
    %c0_214 = arith.constant 0 : index
    %c0_215 = arith.constant 0 : index
    %283 = vector.load %arg3[%c4_213, %c0_214, %c0_215] : memref<9x16x8xf32, #tpu.memory_space<vmem>>, vector<1x16x8xf32>
    %284 = vector.shape_cast %283 : vector<1x16x8xf32> to vector<16x8xf32>
    %285 = vector.extract_strided_slice %263 {offsets = [0, 11], sizes = [8, 100], strides = [1, 1]} : vector<8x122xf32> to vector<8x100xf32>
    %cst_216 = arith.constant dense<0.000000e+00> : vector<16x100xf32>
    %286 = tpu.matmul %284, %285, %cst_216 {dimension_numbers = #tpu.dot_dimension_numbers<[1], [0], [0], [1], [0, 0, 1, 1], [], []>} : vector<16x8xf32>, vector<8x100xf32>, vector<16x100xf32> -> vector<16x100xf32>
    %287 = arith.addf %282, %286 : vector<16x100xf32>
    %c5_217 = arith.constant 5 : index
    %c0_218 = arith.constant 0 : index
    %c0_219 = arith.constant 0 : index
    %288 = vector.load %arg3[%c5_217, %c0_218, %c0_219] : memref<9x16x8xf32, #tpu.memory_space<vmem>>, vector<1x16x8xf32>
    %289 = vector.shape_cast %288 : vector<1x16x8xf32> to vector<16x8xf32>
    %290 = vector.extract_strided_slice %263 {offsets = [0, 12], sizes = [8, 100], strides = [1, 1]} : vector<8x122xf32> to vector<8x100xf32>
    %cst_220 = arith.constant dense<0.000000e+00> : vector<16x100xf32>
    %291 = tpu.matmul %289, %290, %cst_220 {dimension_numbers = #tpu.dot_dimension_numbers<[1], [0], [0], [1], [0, 0, 1, 1], [], []>} : vector<16x8xf32>, vector<8x100xf32>, vector<16x100xf32> -> vector<16x100xf32>
    %292 = arith.addf %287, %291 : vector<16x100xf32>
    %c6_221 = arith.constant 6 : index
    %c0_222 = arith.constant 0 : index
    %c0_223 = arith.constant 0 : index
    %293 = vector.load %arg3[%c6_221, %c0_222, %c0_223] : memref<9x16x8xf32, #tpu.memory_space<vmem>>, vector<1x16x8xf32>
    %294 = vector.shape_cast %293 : vector<1x16x8xf32> to vector<16x8xf32>
    %295 = vector.extract_strided_slice %263 {offsets = [0, 20], sizes = [8, 100], strides = [1, 1]} : vector<8x122xf32> to vector<8x100xf32>
    %cst_224 = arith.constant dense<0.000000e+00> : vector<16x100xf32>
    %296 = tpu.matmul %294, %295, %cst_224 {dimension_numbers = #tpu.dot_dimension_numbers<[1], [0], [0], [1], [0, 0, 1, 1], [], []>} : vector<16x8xf32>, vector<8x100xf32>, vector<16x100xf32> -> vector<16x100xf32>
    %297 = arith.addf %292, %296 : vector<16x100xf32>
    %c7_225 = arith.constant 7 : index
    %c0_226 = arith.constant 0 : index
    %c0_227 = arith.constant 0 : index
    %298 = vector.load %arg3[%c7_225, %c0_226, %c0_227] : memref<9x16x8xf32, #tpu.memory_space<vmem>>, vector<1x16x8xf32>
    %299 = vector.shape_cast %298 : vector<1x16x8xf32> to vector<16x8xf32>
    %300 = vector.extract_strided_slice %263 {offsets = [0, 21], sizes = [8, 100], strides = [1, 1]} : vector<8x122xf32> to vector<8x100xf32>
    %cst_228 = arith.constant dense<0.000000e+00> : vector<16x100xf32>
    %301 = tpu.matmul %299, %300, %cst_228 {dimension_numbers = #tpu.dot_dimension_numbers<[1], [0], [0], [1], [0, 0, 1, 1], [], []>} : vector<16x8xf32>, vector<8x100xf32>, vector<16x100xf32> -> vector<16x100xf32>
    %302 = arith.addf %297, %301 : vector<16x100xf32>
    %c8_229 = arith.constant 8 : index
    %c0_230 = arith.constant 0 : index
    %c0_231 = arith.constant 0 : index
    %303 = vector.load %arg3[%c8_229, %c0_230, %c0_231] : memref<9x16x8xf32, #tpu.memory_space<vmem>>, vector<1x16x8xf32>
    %304 = vector.shape_cast %303 : vector<1x16x8xf32> to vector<16x8xf32>
    %305 = vector.extract_strided_slice %263 {offsets = [0, 22], sizes = [8, 100], strides = [1, 1]} : vector<8x122xf32> to vector<8x100xf32>
    %cst_232 = arith.constant dense<0.000000e+00> : vector<16x100xf32>
    %306 = tpu.matmul %304, %305, %cst_232 {dimension_numbers = #tpu.dot_dimension_numbers<[1], [0], [0], [1], [0, 0, 1, 1], [], []>} : vector<16x8xf32>, vector<8x100xf32>, vector<16x100xf32> -> vector<16x100xf32>
    %307 = arith.addf %302, %306 : vector<16x100xf32>
    %c0_233 = arith.constant 0 : index
    %c0_234 = arith.constant 0 : index
    %308 = vector.load %arg4[%c0_233, %c0_234] : memref<16x1xf32, #tpu.memory_space<vmem>>, vector<16x1xf32>
    %309 = vector.broadcast %308 : vector<16x1xf32> to vector<16x100xf32>
    %310 = arith.addf %307, %309 : vector<16x100xf32>
    %cst_235 = arith.constant 0.000000e+00 : f32
    %311 = vector.broadcast %cst_235 : f32 to vector<16x100xf32>
    %312 = arith.cmpf ogt, %310, %311 : vector<16x100xf32>
    %cst_236 = arith.constant 2.000000e-01 : f32
    %313 = vector.broadcast %cst_236 : f32 to vector<16x100xf32>
    %314 = arith.mulf %313, %310 : vector<16x100xf32>
    %315 = arith.select %312, %310, %314 : vector<16x100xi1>, vector<16x100xf32>
    %316 = vector.extract_strided_slice %315 {offsets = [0, 0], sizes = [1, 100], strides = [1, 1]} : vector<16x100xf32> to vector<1x100xf32>
    %c0_237 = arith.constant 0 : index
    %c0_238 = arith.constant 0 : index
    %c0_239 = arith.constant 0 : index
    %317 = vector.load %arg6[%c0_237, %c0_238, %c0_239] : memref<16x100x32xf32, #tpu.memory_space<vmem>>, vector<1x100x32xf32>
    %318 = vector.shape_cast %317 : vector<1x100x32xf32> to vector<100x32xf32>
    %cst_240 = arith.constant dense<0.000000e+00> : vector<1x32xf32>
    %319 = tpu.matmul %316, %318, %cst_240 {dimension_numbers = #tpu.dot_dimension_numbers<[1], [0], [0], [1], [0, 0, 1, 1], [], []>} : vector<1x100xf32>, vector<100x32xf32>, vector<1x32xf32> -> vector<1x32xf32>
    %320 = arith.addf %1, %319 : vector<1x32xf32>
    %321 = vector.extract_strided_slice %315 {offsets = [1, 0], sizes = [1, 100], strides = [1, 1]} : vector<16x100xf32> to vector<1x100xf32>
    %c1_241 = arith.constant 1 : index
    %c0_242 = arith.constant 0 : index
    %c0_243 = arith.constant 0 : index
    %322 = vector.load %arg6[%c1_241, %c0_242, %c0_243] : memref<16x100x32xf32, #tpu.memory_space<vmem>>, vector<1x100x32xf32>
    %323 = vector.shape_cast %322 : vector<1x100x32xf32> to vector<100x32xf32>
    %cst_244 = arith.constant dense<0.000000e+00> : vector<1x32xf32>
    %324 = tpu.matmul %321, %323, %cst_244 {dimension_numbers = #tpu.dot_dimension_numbers<[1], [0], [0], [1], [0, 0, 1, 1], [], []>} : vector<1x100xf32>, vector<100x32xf32>, vector<1x32xf32> -> vector<1x32xf32>
    %325 = arith.addf %320, %324 : vector<1x32xf32>
    %326 = vector.extract_strided_slice %315 {offsets = [2, 0], sizes = [1, 100], strides = [1, 1]} : vector<16x100xf32> to vector<1x100xf32>
    %c2_245 = arith.constant 2 : index
    %c0_246 = arith.constant 0 : index
    %c0_247 = arith.constant 0 : index
    %327 = vector.load %arg6[%c2_245, %c0_246, %c0_247] : memref<16x100x32xf32, #tpu.memory_space<vmem>>, vector<1x100x32xf32>
    %328 = vector.shape_cast %327 : vector<1x100x32xf32> to vector<100x32xf32>
    %cst_248 = arith.constant dense<0.000000e+00> : vector<1x32xf32>
    %329 = tpu.matmul %326, %328, %cst_248 {dimension_numbers = #tpu.dot_dimension_numbers<[1], [0], [0], [1], [0, 0, 1, 1], [], []>} : vector<1x100xf32>, vector<100x32xf32>, vector<1x32xf32> -> vector<1x32xf32>
    %330 = arith.addf %325, %329 : vector<1x32xf32>
    %331 = vector.extract_strided_slice %315 {offsets = [3, 0], sizes = [1, 100], strides = [1, 1]} : vector<16x100xf32> to vector<1x100xf32>
    %c3_249 = arith.constant 3 : index
    %c0_250 = arith.constant 0 : index
    %c0_251 = arith.constant 0 : index
    %332 = vector.load %arg6[%c3_249, %c0_250, %c0_251] : memref<16x100x32xf32, #tpu.memory_space<vmem>>, vector<1x100x32xf32>
    %333 = vector.shape_cast %332 : vector<1x100x32xf32> to vector<100x32xf32>
    %cst_252 = arith.constant dense<0.000000e+00> : vector<1x32xf32>
    %334 = tpu.matmul %331, %333, %cst_252 {dimension_numbers = #tpu.dot_dimension_numbers<[1], [0], [0], [1], [0, 0, 1, 1], [], []>} : vector<1x100xf32>, vector<100x32xf32>, vector<1x32xf32> -> vector<1x32xf32>
    %335 = arith.addf %330, %334 : vector<1x32xf32>
    %336 = vector.extract_strided_slice %315 {offsets = [4, 0], sizes = [1, 100], strides = [1, 1]} : vector<16x100xf32> to vector<1x100xf32>
    %c4_253 = arith.constant 4 : index
    %c0_254 = arith.constant 0 : index
    %c0_255 = arith.constant 0 : index
    %337 = vector.load %arg6[%c4_253, %c0_254, %c0_255] : memref<16x100x32xf32, #tpu.memory_space<vmem>>, vector<1x100x32xf32>
    %338 = vector.shape_cast %337 : vector<1x100x32xf32> to vector<100x32xf32>
    %cst_256 = arith.constant dense<0.000000e+00> : vector<1x32xf32>
    %339 = tpu.matmul %336, %338, %cst_256 {dimension_numbers = #tpu.dot_dimension_numbers<[1], [0], [0], [1], [0, 0, 1, 1], [], []>} : vector<1x100xf32>, vector<100x32xf32>, vector<1x32xf32> -> vector<1x32xf32>
    %340 = arith.addf %335, %339 : vector<1x32xf32>
    %341 = vector.extract_strided_slice %315 {offsets = [5, 0], sizes = [1, 100], strides = [1, 1]} : vector<16x100xf32> to vector<1x100xf32>
    %c5_257 = arith.constant 5 : index
    %c0_258 = arith.constant 0 : index
    %c0_259 = arith.constant 0 : index
    %342 = vector.load %arg6[%c5_257, %c0_258, %c0_259] : memref<16x100x32xf32, #tpu.memory_space<vmem>>, vector<1x100x32xf32>
    %343 = vector.shape_cast %342 : vector<1x100x32xf32> to vector<100x32xf32>
    %cst_260 = arith.constant dense<0.000000e+00> : vector<1x32xf32>
    %344 = tpu.matmul %341, %343, %cst_260 {dimension_numbers = #tpu.dot_dimension_numbers<[1], [0], [0], [1], [0, 0, 1, 1], [], []>} : vector<1x100xf32>, vector<100x32xf32>, vector<1x32xf32> -> vector<1x32xf32>
    %345 = arith.addf %340, %344 : vector<1x32xf32>
    %346 = vector.extract_strided_slice %315 {offsets = [6, 0], sizes = [1, 100], strides = [1, 1]} : vector<16x100xf32> to vector<1x100xf32>
    %c6_261 = arith.constant 6 : index
    %c0_262 = arith.constant 0 : index
    %c0_263 = arith.constant 0 : index
    %347 = vector.load %arg6[%c6_261, %c0_262, %c0_263] : memref<16x100x32xf32, #tpu.memory_space<vmem>>, vector<1x100x32xf32>
    %348 = vector.shape_cast %347 : vector<1x100x32xf32> to vector<100x32xf32>
    %cst_264 = arith.constant dense<0.000000e+00> : vector<1x32xf32>
    %349 = tpu.matmul %346, %348, %cst_264 {dimension_numbers = #tpu.dot_dimension_numbers<[1], [0], [0], [1], [0, 0, 1, 1], [], []>} : vector<1x100xf32>, vector<100x32xf32>, vector<1x32xf32> -> vector<1x32xf32>
    %350 = arith.addf %345, %349 : vector<1x32xf32>
    %351 = vector.extract_strided_slice %315 {offsets = [7, 0], sizes = [1, 100], strides = [1, 1]} : vector<16x100xf32> to vector<1x100xf32>
    %c7_265 = arith.constant 7 : index
    %c0_266 = arith.constant 0 : index
    %c0_267 = arith.constant 0 : index
    %352 = vector.load %arg6[%c7_265, %c0_266, %c0_267] : memref<16x100x32xf32, #tpu.memory_space<vmem>>, vector<1x100x32xf32>
    %353 = vector.shape_cast %352 : vector<1x100x32xf32> to vector<100x32xf32>
    %cst_268 = arith.constant dense<0.000000e+00> : vector<1x32xf32>
    %354 = tpu.matmul %351, %353, %cst_268 {dimension_numbers = #tpu.dot_dimension_numbers<[1], [0], [0], [1], [0, 0, 1, 1], [], []>} : vector<1x100xf32>, vector<100x32xf32>, vector<1x32xf32> -> vector<1x32xf32>
    %355 = arith.addf %350, %354 : vector<1x32xf32>
    %356 = vector.extract_strided_slice %315 {offsets = [8, 0], sizes = [1, 100], strides = [1, 1]} : vector<16x100xf32> to vector<1x100xf32>
    %c8_269 = arith.constant 8 : index
    %c0_270 = arith.constant 0 : index
    %c0_271 = arith.constant 0 : index
    %357 = vector.load %arg6[%c8_269, %c0_270, %c0_271] : memref<16x100x32xf32, #tpu.memory_space<vmem>>, vector<1x100x32xf32>
    %358 = vector.shape_cast %357 : vector<1x100x32xf32> to vector<100x32xf32>
    %cst_272 = arith.constant dense<0.000000e+00> : vector<1x32xf32>
    %359 = tpu.matmul %356, %358, %cst_272 {dimension_numbers = #tpu.dot_dimension_numbers<[1], [0], [0], [1], [0, 0, 1, 1], [], []>} : vector<1x100xf32>, vector<100x32xf32>, vector<1x32xf32> -> vector<1x32xf32>
    %360 = arith.addf %355, %359 : vector<1x32xf32>
    %361 = vector.extract_strided_slice %315 {offsets = [9, 0], sizes = [1, 100], strides = [1, 1]} : vector<16x100xf32> to vector<1x100xf32>
    %c9_273 = arith.constant 9 : index
    %c0_274 = arith.constant 0 : index
    %c0_275 = arith.constant 0 : index
    %362 = vector.load %arg6[%c9_273, %c0_274, %c0_275] : memref<16x100x32xf32, #tpu.memory_space<vmem>>, vector<1x100x32xf32>
    %363 = vector.shape_cast %362 : vector<1x100x32xf32> to vector<100x32xf32>
    %cst_276 = arith.constant dense<0.000000e+00> : vector<1x32xf32>
    %364 = tpu.matmul %361, %363, %cst_276 {dimension_numbers = #tpu.dot_dimension_numbers<[1], [0], [0], [1], [0, 0, 1, 1], [], []>} : vector<1x100xf32>, vector<100x32xf32>, vector<1x32xf32> -> vector<1x32xf32>
    %365 = arith.addf %360, %364 : vector<1x32xf32>
    %366 = vector.extract_strided_slice %315 {offsets = [10, 0], sizes = [1, 100], strides = [1, 1]} : vector<16x100xf32> to vector<1x100xf32>
    %c10_277 = arith.constant 10 : index
    %c0_278 = arith.constant 0 : index
    %c0_279 = arith.constant 0 : index
    %367 = vector.load %arg6[%c10_277, %c0_278, %c0_279] : memref<16x100x32xf32, #tpu.memory_space<vmem>>, vector<1x100x32xf32>
    %368 = vector.shape_cast %367 : vector<1x100x32xf32> to vector<100x32xf32>
    %cst_280 = arith.constant dense<0.000000e+00> : vector<1x32xf32>
    %369 = tpu.matmul %366, %368, %cst_280 {dimension_numbers = #tpu.dot_dimension_numbers<[1], [0], [0], [1], [0, 0, 1, 1], [], []>} : vector<1x100xf32>, vector<100x32xf32>, vector<1x32xf32> -> vector<1x32xf32>
    %370 = arith.addf %365, %369 : vector<1x32xf32>
    %371 = vector.extract_strided_slice %315 {offsets = [11, 0], sizes = [1, 100], strides = [1, 1]} : vector<16x100xf32> to vector<1x100xf32>
    %c11_281 = arith.constant 11 : index
    %c0_282 = arith.constant 0 : index
    %c0_283 = arith.constant 0 : index
    %372 = vector.load %arg6[%c11_281, %c0_282, %c0_283] : memref<16x100x32xf32, #tpu.memory_space<vmem>>, vector<1x100x32xf32>
    %373 = vector.shape_cast %372 : vector<1x100x32xf32> to vector<100x32xf32>
    %cst_284 = arith.constant dense<0.000000e+00> : vector<1x32xf32>
    %374 = tpu.matmul %371, %373, %cst_284 {dimension_numbers = #tpu.dot_dimension_numbers<[1], [0], [0], [1], [0, 0, 1, 1], [], []>} : vector<1x100xf32>, vector<100x32xf32>, vector<1x32xf32> -> vector<1x32xf32>
    %375 = arith.addf %370, %374 : vector<1x32xf32>
    %376 = vector.extract_strided_slice %315 {offsets = [12, 0], sizes = [1, 100], strides = [1, 1]} : vector<16x100xf32> to vector<1x100xf32>
    %c12_285 = arith.constant 12 : index
    %c0_286 = arith.constant 0 : index
    %c0_287 = arith.constant 0 : index
    %377 = vector.load %arg6[%c12_285, %c0_286, %c0_287] : memref<16x100x32xf32, #tpu.memory_space<vmem>>, vector<1x100x32xf32>
    %378 = vector.shape_cast %377 : vector<1x100x32xf32> to vector<100x32xf32>
    %cst_288 = arith.constant dense<0.000000e+00> : vector<1x32xf32>
    %379 = tpu.matmul %376, %378, %cst_288 {dimension_numbers = #tpu.dot_dimension_numbers<[1], [0], [0], [1], [0, 0, 1, 1], [], []>} : vector<1x100xf32>, vector<100x32xf32>, vector<1x32xf32> -> vector<1x32xf32>
    %380 = arith.addf %375, %379 : vector<1x32xf32>
    %381 = vector.extract_strided_slice %315 {offsets = [13, 0], sizes = [1, 100], strides = [1, 1]} : vector<16x100xf32> to vector<1x100xf32>
    %c13_289 = arith.constant 13 : index
    %c0_290 = arith.constant 0 : index
    %c0_291 = arith.constant 0 : index
    %382 = vector.load %arg6[%c13_289, %c0_290, %c0_291] : memref<16x100x32xf32, #tpu.memory_space<vmem>>, vector<1x100x32xf32>
    %383 = vector.shape_cast %382 : vector<1x100x32xf32> to vector<100x32xf32>
    %cst_292 = arith.constant dense<0.000000e+00> : vector<1x32xf32>
    %384 = tpu.matmul %381, %383, %cst_292 {dimension_numbers = #tpu.dot_dimension_numbers<[1], [0], [0], [1], [0, 0, 1, 1], [], []>} : vector<1x100xf32>, vector<100x32xf32>, vector<1x32xf32> -> vector<1x32xf32>
    %385 = arith.addf %380, %384 : vector<1x32xf32>
    %386 = vector.extract_strided_slice %315 {offsets = [14, 0], sizes = [1, 100], strides = [1, 1]} : vector<16x100xf32> to vector<1x100xf32>
    %c14_293 = arith.constant 14 : index
    %c0_294 = arith.constant 0 : index
    %c0_295 = arith.constant 0 : index
    %387 = vector.load %arg6[%c14_293, %c0_294, %c0_295] : memref<16x100x32xf32, #tpu.memory_space<vmem>>, vector<1x100x32xf32>
    %388 = vector.shape_cast %387 : vector<1x100x32xf32> to vector<100x32xf32>
    %cst_296 = arith.constant dense<0.000000e+00> : vector<1x32xf32>
    %389 = tpu.matmul %386, %388, %cst_296 {dimension_numbers = #tpu.dot_dimension_numbers<[1], [0], [0], [1], [0, 0, 1, 1], [], []>} : vector<1x100xf32>, vector<100x32xf32>, vector<1x32xf32> -> vector<1x32xf32>
    %390 = arith.addf %385, %389 : vector<1x32xf32>
    %391 = vector.extract_strided_slice %315 {offsets = [15, 0], sizes = [1, 100], strides = [1, 1]} : vector<16x100xf32> to vector<1x100xf32>
    %c15_297 = arith.constant 15 : index
    %c0_298 = arith.constant 0 : index
    %c0_299 = arith.constant 0 : index
    %392 = vector.load %arg6[%c15_297, %c0_298, %c0_299] : memref<16x100x32xf32, #tpu.memory_space<vmem>>, vector<1x100x32xf32>
    %393 = vector.shape_cast %392 : vector<1x100x32xf32> to vector<100x32xf32>
    %cst_300 = arith.constant dense<0.000000e+00> : vector<1x32xf32>
    %394 = tpu.matmul %391, %393, %cst_300 {dimension_numbers = #tpu.dot_dimension_numbers<[1], [0], [0], [1], [0, 0, 1, 1], [], []>} : vector<1x100xf32>, vector<100x32xf32>, vector<1x32xf32> -> vector<1x32xf32>
    %395 = arith.addf %390, %394 : vector<1x32xf32>
    %cst_301 = arith.constant 0.000000e+00 : f32
    %396 = vector.broadcast %cst_301 : f32 to vector<1x32xf32>
    %397 = arith.cmpf ogt, %395, %396 : vector<1x32xf32>
    %cst_302 = arith.constant 2.000000e-01 : f32
    %398 = vector.broadcast %cst_302 : f32 to vector<1x32xf32>
    %399 = arith.mulf %398, %395 : vector<1x32xf32>
    %400 = arith.select %397, %395, %399 : vector<1x32xi1>, vector<1x32xf32>
    %c1_303 = arith.constant 1 : index
    %c0_304 = arith.constant 0 : index
    %401 = vector.load %arg14[%c1_303, %c0_304] : memref<2x32xf32, #tpu.memory_space<vmem>>, vector<1x32xf32>
    tpu.vector_store %arg14[%c1_303, %c0_304], %400 {strides = array<i32>} : memref<2x32xf32, #tpu.memory_space<vmem>>, vector<1x32xf32>,
    %c0_305 = arith.constant 0 : index
    %c0_306 = arith.constant 0 : index
    %402 = vector.load %arg14[%c0_305, %c0_306] : memref<2x32xf32, #tpu.memory_space<vmem>>, vector<2x32xf32>
    %c0_307 = arith.constant 0 : index
    %c0_308 = arith.constant 0 : index
    %403 = vector.load %arg8[%c0_307, %c0_308] : memref<32x32xf32, #tpu.memory_space<vmem>>, vector<32x32xf32>
    %cst_309 = arith.constant dense<0.000000e+00> : vector<2x32xf32>
    %404 = tpu.matmul %402, %403, %cst_309 {dimension_numbers = #tpu.dot_dimension_numbers<[1], [0], [0], [1], [0, 0, 1, 1], [], []>} : vector<2x32xf32>, vector<32x32xf32>, vector<2x32xf32> -> vector<2x32xf32>
    %c0_310 = arith.constant 0 : index
    %c0_311 = arith.constant 0 : index
    %405 = vector.load %arg9[%c0_310, %c0_311] : memref<1x32xf32, #tpu.memory_space<vmem>>, vector<1x32xf32>
    %406 = vector.broadcast %405 : vector<1x32xf32> to vector<2x32xf32>
    %407 = arith.addf %404, %406 : vector<2x32xf32>
    %cst_312 = arith.constant 0.000000e+00 : f32
    %408 = vector.broadcast %cst_312 : f32 to vector<2x32xf32>
    %409 = arith.cmpf ogt, %407, %408 : vector<2x32xf32>
    %cst_313 = arith.constant 2.000000e-01 : f32
    %410 = vector.broadcast %cst_313 : f32 to vector<2x32xf32>
    %411 = arith.mulf %410, %407 : vector<2x32xf32>
    %412 = arith.select %409, %407, %411 : vector<2x32xi1>, vector<2x32xf32>
    %c0_314 = arith.constant 0 : index
    %c0_315 = arith.constant 0 : index
    %413 = vector.load %arg10[%c0_314, %c0_315] : memref<32x10xf32, #tpu.memory_space<vmem>>, vector<32x10xf32>
    %cst_316 = arith.constant dense<0.000000e+00> : vector<2x10xf32>
    %414 = tpu.matmul %412, %413, %cst_316 {dimension_numbers = #tpu.dot_dimension_numbers<[1], [0], [0], [1], [0, 0, 1, 1], [], []>} : vector<2x32xf32>, vector<32x10xf32>, vector<2x10xf32> -> vector<2x10xf32>
    %c0_317 = arith.constant 0 : index
    %c0_318 = arith.constant 0 : index
    %415 = vector.load %arg11[%c0_317, %c0_318] : memref<1x10xf32, #tpu.memory_space<vmem>>, vector<1x10xf32>
    %416 = vector.broadcast %415 : vector<1x10xf32> to vector<2x10xf32>
    %417 = arith.addf %414, %416 : vector<2x10xf32>
    %c0_319 = arith.constant 0 : index
    %c0_320 = arith.constant 0 : index
    %418 = vector.load %arg12[%c0_319, %c0_320] : memref<2x10xf32, #tpu.memory_space<vmem>>, vector<2x10xf32>
    tpu.vector_store %arg12[%c0_319, %c0_320], %417 {strides = array<i32>} : memref<2x10xf32, #tpu.memory_space<vmem>>, vector<2x10xf32>,
    return
  }
}

</mosaic_0001>

<llo_original>
// kernel: dqn_forward.1
$region0: #{dqn_forward.1}
  #allocation0 [shape = 'u32[]', space=smem, size = 0x4, offset = 0x4, fixed_abs, tag = 'smem constant byte address 0x4 - core index']
  #allocation1 [shape = 'u32[72,128]{1,0:T(1,128)}', space=vmem, size = 0x9000, scoped, tag = 'internal scratch']
  #allocation2 [shape = 'f32[2,8,122]{2,1,0:T(8,128)}', space=vmem, size = 0x2000, scoped, tag = 'scratch operand']
  #allocation3 [shape = 'f32[2,32]{1,0:T(2,128)}', space=vmem, size = 0x400, scoped, tag = 'scratch operand']
  %s0 = inlined_call_operand.vmem [shape: f32[2,2,122], index: 0, kind: input, shape index: {}]
  %s1 = inlined_call_operand.vmem [shape: f32[9,8,2], index: 1, kind: input, shape index: {}]
  %s2 = inlined_call_operand.vmem [shape: f32[8,1], index: 2, kind: input, shape index: {}]
  %s3 = inlined_call_operand.vmem [shape: f32[9,16,8], index: 3, kind: input, shape index: {}]
  %s4 = inlined_call_operand.vmem [shape: f32[16,1], index: 4, kind: input, shape index: {}]
  %s5 = inlined_call_operand.vmem [shape: f32[1,100], index: 5, kind: input, shape index: {}]
  %s6 = inlined_call_operand.vmem [shape: f32[16,100,32], index: 6, kind: input, shape index: {}]
  %s7 = inlined_call_operand.vmem [shape: f32[1,32], index: 7, kind: input, shape index: {}]
  %s8 = inlined_call_operand.vmem [shape: f32[32,32], index: 8, kind: input, shape index: {}]
  %s9 = inlined_call_operand.vmem [shape: f32[1,32], index: 9, kind: input, shape index: {}]
  %s10 = inlined_call_operand.vmem [shape: f32[32,10], index: 10, kind: input, shape index: {}]
  %s11 = inlined_call_operand.vmem [shape: f32[1,10], index: 11, kind: input, shape index: {}]
  %s12 = inlined_call_operand.hbm [shape: f32[2,10], index: 12, kind: output, shape index: {}]
  %s13 = sld [smem:[#allocation0]]
  $region58: #{dqn_forward.1} parent=0
    _
  %s15 = ssub.s32 1, %s13
  %s16 = scalar_select 0, %s15, %s13
  $region1: #{dqn_forward.1} parent=0
    #allocation4 [shape = 'u8[1024]{0}', space=vmem, size = 0x400, scoped, tag = 'output window, operand 0, single buffered']
    #allocation5 [shape = 's32[1]{0}', space=sflag, size = 0x4, scoped, tag = 'scoped memory for dqn_forward.1']
    %17 = vsyncpa [#allocation5], 0
    // Predicated region
    $region2: #{dqn_forward.1} parent=1 // pred_check
      _
    $region3: #{dqn_forward.1} parent=1 // pred_check_branch
      %19 = sbr.rel (0) target = $region5
    $region4: #{dqn_forward.1} parent=1 // pred_region
      _
    $region5: #{dqn_forward.1} parent=1 // pred_fallthru
      _
    // Predicated region
    $region6: #{dqn_forward.1} parent=1 // pred_check
      _
    $region7: #{dqn_forward.1} parent=1 // pred_check_branch
      %21 = sbr.rel (0) target = $region9
    $region8: #{dqn_forward.1} parent=1 // pred_region
      _
    $region9: #{dqn_forward.1} parent=1 // pred_fallthru
      _
    // Predicated region
    $region10: #{dqn_forward.1} parent=1 // pred_check
      _
    $region11: #{dqn_forward.1} parent=1 // pred_check_branch
      %23 = sbr.rel (0) target = $region13
    $region12: #{dqn_forward.1} parent=1 // pred_region
      _
    $region13: #{dqn_forward.1} parent=1 // pred_fallthru
      _
    // Predicated region
    $region14: #{dqn_forward.1} parent=1 // pred_check
      _
    $region15: #{dqn_forward.1} parent=1 // pred_check_branch
      %25 = sbr.rel (0) target = $region17
    $region16: #{dqn_forward.1} parent=1 // pred_region
      _
    $region17: #{dqn_forward.1} parent=1 // pred_fallthru
      _
    // Predicated region
    $region18: #{dqn_forward.1} parent=1 // pred_check
      _
    $region19: #{dqn_forward.1} parent=1 // pred_check_branch
      %27 = sbr.rel (0) target = $region21
    $region20: #{dqn_forward.1} parent=1 // pred_region
      _
    $region21: #{dqn_forward.1} parent=1 // pred_fallthru
      _
    // Predicated region
    $region22: #{dqn_forward.1} parent=1 // pred_check
      _
    $region23: #{dqn_forward.1} parent=1 // pred_check_branch
      %29 = sbr.rel (0) target = $region25
    $region24: #{dqn_forward.1} parent=1 // pred_region
      _
    $region25: #{dqn_forward.1} parent=1 // pred_fallthru
      _
    // Predicated region
    $region26: #{dqn_forward.1} parent=1 // pred_check
      _
    $region27: #{dqn_forward.1} parent=1 // pred_check_branch
      %31 = sbr.rel (0) target = $region29
    $region28: #{dqn_forward.1} parent=1 // pred_region
      _
    $region29: #{dqn_forward.1} parent=1 // pred_fallthru
      _
    // Predicated region
    $region30: #{dqn_forward.1} parent=1 // pred_check
      _
    $region31: #{dqn_forward.1} parent=1 // pred_check_branch
      %33 = sbr.rel (0) target = $region33
    $region32: #{dqn_forward.1} parent=1 // pred_region
      _
    $region33: #{dqn_forward.1} parent=1 // pred_fallthru
      _
    // Predicated region
    $region34: #{dqn_forward.1} parent=1 // pred_check
      _
    $region35: #{dqn_forward.1} parent=1 // pred_check_branch
      %35 = sbr.rel (0) target = $region37
    $region36: #{dqn_forward.1} parent=1 // pred_region
      _
    $region37: #{dqn_forward.1} parent=1 // pred_fallthru
      _
    // Predicated region
    $region38: #{dqn_forward.1} parent=1 // pred_check
      _
    $region39: #{dqn_forward.1} parent=1 // pred_check_branch
      %37 = sbr.rel (0) target = $region41
    $region40: #{dqn_forward.1} parent=1 // pred_region
      _
    $region41: #{dqn_forward.1} parent=1 // pred_fallthru
      _
    // Predicated region
    $region42: #{dqn_forward.1} parent=1 // pred_check
      _
    $region43: #{dqn_forward.1} parent=1 // pred_check_branch
      %39 = sbr.rel (0) target = $region45
    $region44: #{dqn_forward.1} parent=1 // pred_region
      _
    $region45: #{dqn_forward.1} parent=1 // pred_fallthru
      _
    // Predicated region
    $region46: #{dqn_forward.1} parent=1 // pred_check
      _
    $region47: #{dqn_forward.1} parent=1 // pred_check_branch
      %41 = sbr.rel (0) target = $region49
    $region48: #{dqn_forward.1} parent=1 // pred_region
      _
    $region49: #{dqn_forward.1} parent=1 // pred_fallthru
      _
    %v42 = vld [vmem:[%s5] sm:$0x1]
    %v43 = vld [vmem:[%s7] sm:$0x1]
    %vm44 = vcmask 998400
    %45 = vst.msk [vmem:[#allocation2] sm:$0xff] %vm44, 0.0
    %46 = vst.msk [vmem:[#allocation2 + $0x8] sm:$0xff] %vm44, 0.0
    %v47 = vld [vmem:[%s0] sm:$0x3]
    %v48 = vld [vmem:[%s1] sm:$0xff]
    %s49 = scalar_lea.vmem %s1, 8
    %v50 = vld [vmem:[%s49] sm:$0xff]
    %52 = vrot.lane.b32.xlu0 %v47, 127
    %v53 = vpop.permute.xlu0 %52
    %vm54 = vcmask 15360
    %v56 = vsel %vm54, %v50, 0
    %vm58 = vcmask 1041408
    %v59 = vsel %vm58, %v53, 0
    %61 = vmatpush.msra.mxu0 0.0
    %62 = vmatpush.msra.mxu0 0.0
    %63 = vmatpush.msra.mxu0 0.0
    %64 = vmatpush.msra.mxu0 0.0
    %65 = vmatpush.msra.mxu0 0.0
    %66 = vmatpush.msra.mxu0 0.0
    %67 = vmatpush.msra.mxu0 0.0
    %68 = vmatpush.msra.mxu0 0.0
    %69 = vmatpush.msra.mxu0 0.0
    %70 = vmatpush.msra.mxu0 0.0
    %71 = vmatpush.msra.mxu0 0.0
    %72 = vmatpush.msra.mxu0 0.0
    %73 = vmatpush.msra.mxu0 0.0
    %74 = vmatpush.msra.mxu0 0.0
    %75 = vmatpush.msra.mxu0 0.0
    %76 = vmatpush.msra.mxu0 %v59
    %77 = vmatmul.f32.gmra.mxu0 %v56
    %v78 = vpop.f32.mrf.mxu0
    %v79 = vadd.f32 0.0, %v78
    %80 = vdwg.mxu0
    %v82 = vsel %vm54, %v48, 0
    %v84 = vsel %vm58, %v47, 0
    %86 = vmatpush.msra.mxu0 0.0
    %87 = vmatpush.msra.mxu0 0.0
    %88 = vmatpush.msra.mxu0 0.0
    %89 = vmatpush.msra.mxu0 0.0
    %90 = vmatpush.msra.mxu0 0.0
    %91 = vmatpush.msra.mxu0 0.0
    %92 = vmatpush.msra.mxu0 0.0
    %93 = vmatpush.msra.mxu0 0.0
    %94 = vmatpush.msra.mxu0 0.0
    %95 = vmatpush.msra.mxu0 0.0
    %96 = vmatpush.msra.mxu0 0.0
    %97 = vmatpush.msra.mxu0 0.0
    %98 = vmatpush.msra.mxu0 0.0
    %99 = vmatpush.msra.mxu0 0.0
    %100 = vmatpush.msra.mxu0 0.0
    %101 = vmatpush.msra.mxu0 %v84
    %102 = vmatmul.f32.gmra.mxu0 %v82
    %v103 = vpop.f32.mrf.mxu0
    %v104 = vadd.f32 %v79, %v103
    %105 = vdwg.mxu0
    %s106 = scalar_lea.vmem %s1, 16
    %v107 = vld [vmem:[%s106] sm:$0xff]
    %108 = vrot.lane.b32.xlu0 %v47, 126
    %v109 = vpop.permute.xlu0 %108
    %v111 = vsel %vm54, %v107, 0
    %v113 = vsel %vm58, %v109, 0
    %115 = vmatpush.msra.mxu0 0.0
    %116 = vmatpush.msra.mxu0 0.0
    %117 = vmatpush.msra.mxu0 0.0
    %118 = vmatpush.msra.mxu0 0.0
    %119 = vmatpush.msra.mxu0 0.0
    %120 = vmatpush.msra.mxu0 0.0
    %121 = vmatpush.msra.mxu0 0.0
    %122 = vmatpush.msra.mxu0 0.0
    %123 = vmatpush.msra.mxu0 0.0
    %124 = vmatpush.msra.mxu0 0.0
    %125 = vmatpush.msra.mxu0 0.0
    %126 = vmatpush.msra.mxu0 0.0
    %127 = vmatpush.msra.mxu0 0.0
    %128 = vmatpush.msra.mxu0 0.0
    %129 = vmatpush.msra.mxu0 0.0
    %130 = vmatpush.msra.mxu0 %v113
    %131 = vmatmul.f32.gmra.mxu0 %v111
    %v132 = vpop.f32.mrf.mxu0
    %v133 = vadd.f32 0.0, %v132
    %134 = vdwg.mxu0
    %v135 = vadd.f32 %v104, %v133
    %s136 = scalar_lea.vmem %s1, 24
    %v137 = vld [vmem:[%s136] sm:$0xff]
    %138 = vrot.lane.b32.xlu0 %v47, 118
    %v139 = vpop.permute.xlu0 %138
    %v141 = vsel %vm54, %v137, 0
    %v143 = vsel %vm58, %v139, 0
    %145 = vmatpush.msra.mxu0 0.0
    %146 = vmatpush.msra.mxu0 0.0
    %147 = vmatpush.msra.mxu0 0.0
    %148 = vmatpush.msra.mxu0 0.0
    %149 = vmatpush.msra.mxu0 0.0
    %150 = vmatpush.msra.mxu0 0.0
    %151 = vmatpush.msra.mxu0 0.0
    %152 = vmatpush.msra.mxu0 0.0
    %153 = vmatpush.msra.mxu0 0.0
    %154 = vmatpush.msra.mxu0 0.0
    %155 = vmatpush.msra.mxu0 0.0
    %156 = vmatpush.msra.mxu0 0.0
    %157 = vmatpush.msra.mxu0 0.0
    %158 = vmatpush.msra.mxu0 0.0
    %159 = vmatpush.msra.mxu0 0.0
    %160 = vmatpush.msra.mxu0 %v143
    %161 = vmatmul.f32.gmra.mxu0 %v141
    %v162 = vpop.f32.mrf.mxu0
    %v163 = vadd.f32 0.0, %v162
    %164 = vdwg.mxu0
    %v165 = vadd.f32 %v135, %v163
    %s166 = scalar_lea.vmem %s1, 32
    %v167 = vld [vmem:[%s166] sm:$0xff]
    %168 = vrot.lane.b32.xlu0 %v47, 117
    %v169 = vpop.permute.xlu0 %168
    %v171 = vsel %vm54, %v167, 0
    %v173 = vsel %vm58, %v169, 0
    %175 = vmatpush.msra.mxu0 0.0
    %176 = vmatpush.msra.mxu0 0.0
    %177 = vmatpush.msra.mxu0 0.0
    %178 = vmatpush.msra.mxu0 0.0
    %179 = vmatpush.msra.mxu0 0.0
    %180 = vmatpush.msra.mxu0 0.0
    %181 = vmatpush.msra.mxu0 0.0
    %182 = vmatpush.msra.mxu0 0.0
    %183 = vmatpush.msra.mxu0 0.0
    %184 = vmatpush.msra.mxu0 0.0
    %185 = vmatpush.msra.mxu0 0.0
    %186 = vmatpush.msra.mxu0 0.0
    %187 = vmatpush.msra.mxu0 0.0
    %188 = vmatpush.msra.mxu0 0.0
    %189 = vmatpush.msra.mxu0 0.0
    %190 = vmatpush.msra.mxu0 %v173
    %191 = vmatmul.f32.gmra.mxu0 %v171
    %v192 = vpop.f32.mrf.mxu0
    %v193 = vadd.f32 0.0, %v192
    %194 = vdwg.mxu0
    %v195 = vadd.f32 %v165, %v193
    %s196 = scalar_lea.vmem %s1, 40
    %v197 = vld [vmem:[%s196] sm:$0xff]
    %198 = vrot.lane.b32.xlu0 %v47, 116
    %v199 = vpop.permute.xlu0 %198
    %v201 = vsel %vm54, %v197, 0
    %v203 = vsel %vm58, %v199, 0
    %205 = vmatpush.msra.mxu0 0.0
    %206 = vmatpush.msra.mxu0 0.0
    %207 = vmatpush.msra.mxu0 0.0
    %208 = vmatpush.msra.mxu0 0.0
    %209 = vmatpush.msra.mxu0 0.0
    %210 = vmatpush.msra.mxu0 0.0
    %211 = vmatpush.msra.mxu0 0.0
    %212 = vmatpush.msra.mxu0 0.0
    %213 = vmatpush.msra.mxu0 0.0
    %214 = vmatpush.msra.mxu0 0.0
    %215 = vmatpush.msra.mxu0 0.0
    %216 = vmatpush.msra.mxu0 0.0
    %217 = vmatpush.msra.mxu0 0.0
    %218 = vmatpush.msra.mxu0 0.0
    %219 = vmatpush.msra.mxu0 0.0
    %220 = vmatpush.msra.mxu0 %v203
    %221 = vmatmul.f32.gmra.mxu0 %v201
    %v222 = vpop.f32.mrf.mxu0
    %v223 = vadd.f32 0.0, %v222
    %224 = vdwg.mxu0
    %v225 = vadd.f32 %v195, %v223
    %s226 = scalar_lea.vmem %s1, 48
    %v227 = vld [vmem:[%s226] sm:$0xff]
    %228 = vrot.lane.b32.xlu0 %v47, 108
    %v229 = vpop.permute.xlu0 %228
    %v231 = vsel %vm54, %v227, 0
    %v233 = vsel %vm58, %v229, 0
    %235 = vmatpush.msra.mxu0 0.0
    %236 = vmatpush.msra.mxu0 0.0
    %237 = vmatpush.msra.mxu0 0.0
    %238 = vmatpush.msra.mxu0 0.0
    %239 = vmatpush.msra.mxu0 0.0
    %240 = vmatpush.msra.mxu0 0.0
    %241 = vmatpush.msra.mxu0 0.0
    %242 = vmatpush.msra.mxu0 0.0
    %243 = vmatpush.msra.mxu0 0.0
    %244 = vmatpush.msra.mxu0 0.0
    %245 = vmatpush.msra.mxu0 0.0
    %246 = vmatpush.msra.mxu0 0.0
    %247 = vmatpush.msra.mxu0 0.0
    %248 = vmatpush.msra.mxu0 0.0
    %249 = vmatpush.msra.mxu0 0.0
    %250 = vmatpush.msra.mxu0 %v233
    %251 = vmatmul.f32.gmra.mxu0 %v231
    %v252 = vpop.f32.mrf.mxu0
    %v253 = vadd.f32 0.0, %v252
    %254 = vdwg.mxu0
    %v255 = vadd.f32 %v225, %v253
    %s256 = scalar_lea.vmem %s1, 56
    %v257 = vld [vmem:[%s256] sm:$0xff]
    %258 = vrot.lane.b32.xlu0 %v47, 107
    %v259 = vpop.permute.xlu0 %258
    %v261 = vsel %vm54, %v257, 0
    %v263 = vsel %vm58, %v259, 0
    %265 = vmatpush.msra.mxu0 0.0
    %266 = vmatpush.msra.mxu0 0.0
    %267 = vmatpush.msra.mxu0 0.0
    %268 = vmatpush.msra.mxu0 0.0
    %269 = vmatpush.msra.mxu0 0.0
    %270 = vmatpush.msra.mxu0 0.0
    %271 = vmatpush.msra.mxu0 0.0
    %272 = vmatpush.msra.mxu0 0.0
    %273 = vmatpush.msra.mxu0 0.0
    %274 = vmatpush.msra.mxu0 0.0
    %275 = vmatpush.msra.mxu0 0.0
    %276 = vmatpush.msra.mxu0 0.0
    %277 = vmatpush.msra.mxu0 0.0
    %278 = vmatpush.msra.mxu0 0.0
    %279 = vmatpush.msra.mxu0 0.0
    %280 = vmatpush.msra.mxu0 %v263
    %281 = vmatmul.f32.gmra.mxu0 %v261
    %v282 = vpop.f32.mrf.mxu0
    %v283 = vadd.f32 0.0, %v282
    %284 = vdwg.mxu0
    %v285 = vadd.f32 %v255, %v283
    %s286 = scalar_lea.vmem %s1, 64
    %v287 = vld [vmem:[%s286] sm:$0xff]
    %288 = vrot.lane.b32.xlu0 %v47, 106
    %v289 = vpop.permute.xlu0 %288
    %v291 = vsel %vm54, %v287, 0
    %v293 = vsel %vm58, %v289, 0
    %295 = vmatpush.msra.mxu0 0.0
    %296 = vmatpush.msra.mxu0 0.0
    %297 = vmatpush.msra.mxu0 0.0
    %298 = vmatpush.msra.mxu0 0.0
    %299 = vmatpush.msra.mxu0 0.0
    %300 = vmatpush.msra.mxu0 0.0
    %301 = vmatpush.msra.mxu0 0.0
    %302 = vmatpush.msra.mxu0 0.0
    %303 = vmatpush.msra.mxu0 0.0
    %304 = vmatpush.msra.mxu0 0.0
    %305 = vmatpush.msra.mxu0 0.0
    %306 = vmatpush.msra.mxu0 0.0
    %307 = vmatpush.msra.mxu0 0.0
    %308 = vmatpush.msra.mxu0 0.0
    %309 = vmatpush.msra.mxu0 0.0
    %310 = vmatpush.msra.mxu0 %v293
    %311 = vmatmul.f32.gmra.mxu0 %v291
    %v312 = vpop.f32.mrf.mxu0
    %v313 = vadd.f32 0.0, %v312
    %314 = vdwg.mxu0
    %v315 = vadd.f32 %v285, %v313
    %v316 = vld [vmem:[%s2] sm:$0xff]
    %318 = vset.pattern.permute.xlu0 0
    %319 = vperm.xlu0 %318, %v316
    %v320 = vpop.permute.xlu0 %319
    %v322 = vadd.f32 %v315, %v320
    %vm323 = vcmp.gt.f32.partialorder %v322, 0.0
    %v324 = vmul.f32 %v322, 0.2
    %v325 = vsel %vm323, %v322, %v324
    %v327 = vperm.slane %v42, 0
    %v329 = vmul.f32 %v325, %v327
    %331 = vrot.lane.b32.xlu0 %v329, 11
    %v332 = vpop.permute.xlu0 %331
    %vm334 = vcmask 908376
    %335 = vst.msk [vmem:[#allocation2] sm:$0xff] %vm334, %v332
    %v336 = vld [vmem:[#allocation2] sm:$0xff]
    %v337 = vld [vmem:[%s3] sm:$0xff]
    %v338 = vld [vmem:[%s3 + $0x8] sm:$0xff]
    %s339 = scalar_lea.vmem %s3, 16
    %v340 = vld [vmem:[%s339] sm:$0xff]
    %v341 = vld [vmem:[%s339 + $0x8] sm:$0xff]
    %343 = vrot.lane.b32.xlu0 %v336, 127
    %v344 = vpop.permute.xlu0 %343
    %vm346 = vcmask 64512
    %v348 = vsel %vm346, %v340, 0
    %v351 = vsel %vm346, %v341, 0
    %353 = vmatpush.msra.mxu0 0.0
    %354 = vmatpush.msra.mxu0 0.0
    %355 = vmatpush.msra.mxu0 0.0
    %356 = vmatpush.msra.mxu0 0.0
    %357 = vmatpush.msra.mxu0 0.0
    %358 = vmatpush.msra.mxu0 0.0
    %359 = vmatpush.msra.mxu0 0.0
    %360 = vmatpush.msra.mxu0 0.0
    %361 = vmatpush.msra.mxu0 0.0
    %362 = vmatpush.msra.mxu0 0.0
    %363 = vmatpush.msra.mxu0 0.0
    %364 = vmatpush.msra.mxu0 0.0
    %365 = vmatpush.msra.mxu0 0.0
    %366 = vmatpush.msra.mxu0 0.0
    %367 = vmatpush.msra.mxu0 0.0
    %368 = vmatpush.msra.mxu0 %v344
    %369 = vmatmul.f32.gmra.mxu0 %v348
    %v370 = vpop.f32.mrf.mxu0
    %v371 = vadd.f32 0.0, %v370
    %372 = vmatmul.f32.gmra.mxu0 %v351
    %v373 = vpop.f32.mrf.mxu0
    %v374 = vadd.f32 0.0, %v373
    %375 = vdwg.mxu0
    %v377 = vsel %vm346, %v337, 0
    %v380 = vsel %vm346, %v338, 0
    %382 = vmatpush.msra.mxu0 0.0
    %383 = vmatpush.msra.mxu0 0.0
    %384 = vmatpush.msra.mxu0 0.0
    %385 = vmatpush.msra.mxu0 0.0
    %386 = vmatpush.msra.mxu0 0.0
    %387 = vmatpush.msra.mxu0 0.0
    %388 = vmatpush.msra.mxu0 0.0
    %389 = vmatpush.msra.mxu0 0.0
    %390 = vmatpush.msra.mxu0 0.0
    %391 = vmatpush.msra.mxu0 0.0
    %392 = vmatpush.msra.mxu0 0.0
    %393 = vmatpush.msra.mxu0 0.0
    %394 = vmatpush.msra.mxu0 0.0
    %395 = vmatpush.msra.mxu0 0.0
    %396 = vmatpush.msra.mxu0 0.0
    %397 = vmatpush.msra.mxu0 %v336
    %398 = vmatmul.f32.gmra.mxu0 %v377
    %v399 = vpop.f32.mrf.mxu0
    %v400 = vadd.f32 %v371, %v399
    %401 = vmatmul.f32.gmra.mxu0 %v380
    %v402 = vpop.f32.mrf.mxu0
    %v403 = vadd.f32 %v374, %v402
    %404 = vdwg.mxu0
    %s405 = scalar_lea.vmem %s3, 32
    %v406 = vld [vmem:[%s405] sm:$0xff]
    %v407 = vld [vmem:[%s405 + $0x8] sm:$0xff]
    %408 = vrot.lane.b32.xlu0 %v336, 126
    %v409 = vpop.permute.xlu0 %408
    %v412 = vsel %vm346, %v406, 0
    %v415 = vsel %vm346, %v407, 0
    %417 = vmatpush.msra.mxu0 0.0
    %418 = vmatpush.msra.mxu0 0.0
    %419 = vmatpush.msra.mxu0 0.0
    %420 = vmatpush.msra.mxu0 0.0
    %421 = vmatpush.msra.mxu0 0.0
    %422 = vmatpush.msra.mxu0 0.0
    %423 = vmatpush.msra.mxu0 0.0
    %424 = vmatpush.msra.mxu0 0.0
    %425 = vmatpush.msra.mxu0 0.0
    %426 = vmatpush.msra.mxu0 0.0
    %427 = vmatpush.msra.mxu0 0.0
    %428 = vmatpush.msra.mxu0 0.0
    %429 = vmatpush.msra.mxu0 0.0
    %430 = vmatpush.msra.mxu0 0.0
    %431 = vmatpush.msra.mxu0 0.0
    %432 = vmatpush.msra.mxu0 %v409
    %433 = vmatmul.f32.gmra.mxu0 %v412
    %v434 = vpop.f32.mrf.mxu0
    %v435 = vadd.f32 0.0, %v434
    %436 = vmatmul.f32.gmra.mxu0 %v415
    %v437 = vpop.f32.mrf.mxu0
    %v438 = vadd.f32 0.0, %v437
    %439 = vdwg.mxu0
    %v440 = vadd.f32 %v400, %v435
    %v441 = vadd.f32 %v403, %v438
    %s442 = scalar_lea.vmem %s3, 48
    %v443 = vld [vmem:[%s442] sm:$0xff]
    %v444 = vld [vmem:[%s442 + $0x8] sm:$0xff]
    %445 = vrot.lane.b32.xlu0 %v336, 118
    %v446 = vpop.permute.xlu0 %445
    %v449 = vsel %vm346, %v443, 0
    %v452 = vsel %vm346, %v444, 0
    %454 = vmatpush.msra.mxu0 0.0
    %455 = vmatpush.msra.mxu0 0.0
    %456 = vmatpush.msra.mxu0 0.0
    %457 = vmatpush.msra.mxu0 0.0
    %458 = vmatpush.msra.mxu0 0.0
    %459 = vmatpush.msra.mxu0 0.0
    %460 = vmatpush.msra.mxu0 0.0
    %461 = vmatpush.msra.mxu0 0.0
    %462 = vmatpush.msra.mxu0 0.0
    %463 = vmatpush.msra.mxu0 0.0
    %464 = vmatpush.msra.mxu0 0.0
    %465 = vmatpush.msra.mxu0 0.0
    %466 = vmatpush.msra.mxu0 0.0
    %467 = vmatpush.msra.mxu0 0.0
    %468 = vmatpush.msra.mxu0 0.0
    %469 = vmatpush.msra.mxu0 %v446
    %470 = vmatmul.f32.gmra.mxu0 %v449
    %v471 = vpop.f32.mrf.mxu0
    %v472 = vadd.f32 0.0, %v471
    %473 = vmatmul.f32.gmra.mxu0 %v452
    %v474 = vpop.f32.mrf.mxu0
    %v475 = vadd.f32 0.0, %v474
    %476 = vdwg.mxu0
    %v477 = vadd.f32 %v440, %v472
    %v478 = vadd.f32 %v441, %v475
    %s479 = scalar_lea.vmem %s3, 64
    %v480 = vld [vmem:[%s479] sm:$0xff]
    %v481 = vld [vmem:[%s479 + $0x8] sm:$0xff]
    %482 = vrot.lane.b32.xlu0 %v336, 117
    %v483 = vpop.permute.xlu0 %482
    %v486 = vsel %vm346, %v480, 0
    %v489 = vsel %vm346, %v481, 0
    %491 = vmatpush.msra.mxu0 0.0
    %492 = vmatpush.msra.mxu0 0.0
    %493 = vmatpush.msra.mxu0 0.0
    %494 = vmatpush.msra.mxu0 0.0
    %495 = vmatpush.msra.mxu0 0.0
    %496 = vmatpush.msra.mxu0 0.0
    %497 = vmatpush.msra.mxu0 0.0
    %498 = vmatpush.msra.mxu0 0.0
    %499 = vmatpush.msra.mxu0 0.0
    %500 = vmatpush.msra.mxu0 0.0
    %501 = vmatpush.msra.mxu0 0.0
    %502 = vmatpush.msra.mxu0 0.0
    %503 = vmatpush.msra.mxu0 0.0
    %504 = vmatpush.msra.mxu0 0.0
    %505 = vmatpush.msra.mxu0 0.0
    %506 = vmatpush.msra.mxu0 %v483
    %507 = vmatmul.f32.gmra.mxu0 %v486
    %v508 = vpop.f32.mrf.mxu0
    %v509 = vadd.f32 0.0, %v508
    %510 = vmatmul.f32.gmra.mxu0 %v489
    %v511 = vpop.f32.mrf.mxu0
    %v512 = vadd.f32 0.0, %v511
    %513 = vdwg.mxu0
    %v514 = vadd.f32 %v477, %v509
    %v515 = vadd.f32 %v478, %v512
    %s516 = scalar_lea.vmem %s3, 80
    %v517 = vld [vmem:[%s516] sm:$0xff]
    %v518 = vld [vmem:[%s516 + $0x8] sm:$0xff]
    %519 = vrot.lane.b32.xlu0 %v336, 116
    %v520 = vpop.permute.xlu0 %519
    %v523 = vsel %vm346, %v517, 0
    %v526 = vsel %vm346, %v518, 0
    %528 = vmatpush.msra.mxu0 0.0
    %529 = vmatpush.msra.mxu0 0.0
    %530 = vmatpush.msra.mxu0 0.0
    %531 = vmatpush.msra.mxu0 0.0
    %532 = vmatpush.msra.mxu0 0.0
    %533 = vmatpush.msra.mxu0 0.0
    %534 = vmatpush.msra.mxu0 0.0
    %535 = vmatpush.msra.mxu0 0.0
    %536 = vmatpush.msra.mxu0 0.0
    %537 = vmatpush.msra.mxu0 0.0
    %538 = vmatpush.msra.mxu0 0.0
    %539 = vmatpush.msra.mxu0 0.0
    %540 = vmatpush.msra.mxu0 0.0
    %541 = vmatpush.msra.mxu0 0.0
    %542 = vmatpush.msra.mxu0 0.0
    %543 = vmatpush.msra.mxu0 %v520
    %544 = vmatmul.f32.gmra.mxu0 %v523
    %v545 = vpop.f32.mrf.mxu0
    %v546 = vadd.f32 0.0, %v545
    %547 = vmatmul.f32.gmra.mxu0 %v526
    %v548 = vpop.f32.mrf.mxu0
    %v549 = vadd.f32 0.0, %v548
    %550 = vdwg.mxu0
    %v551 = vadd.f32 %v514, %v546
    %v552 = vadd.f32 %v515, %v549
    %s553 = scalar_lea.vmem %s3, 96
    %v554 = vld [vmem:[%s553] sm:$0xff]
    %v555 = vld [vmem:[%s553 + $0x8] sm:$0xff]
    %556 = vrot.lane.b32.xlu0 %v336, 108
    %v557 = vpop.permute.xlu0 %556
    %v560 = vsel %vm346, %v554, 0
    %v563 = vsel %vm346, %v555, 0
    %565 = vmatpush.msra.mxu0 0.0
    %566 = vmatpush.msra.mxu0 0.0
    %567 = vmatpush.msra.mxu0 0.0
    %568 = vmatpush.msra.mxu0 0.0
    %569 = vmatpush.msra.mxu0 0.0
    %570 = vmatpush.msra.mxu0 0.0
    %571 = vmatpush.msra.mxu0 0.0
    %572 = vmatpush.msra.mxu0 0.0
    %573 = vmatpush.msra.mxu0 0.0
    %574 = vmatpush.msra.mxu0 0.0
    %575 = vmatpush.msra.mxu0 0.0
    %576 = vmatpush.msra.mxu0 0.0
    %577 = vmatpush.msra.mxu0 0.0
    %578 = vmatpush.msra.mxu0 0.0
    %579 = vmatpush.msra.mxu0 0.0
    %580 = vmatpush.msra.mxu0 %v557
    %581 = vmatmul.f32.gmra.mxu0 %v560
    %v582 = vpop.f32.mrf.mxu0
    %v583 = vadd.f32 0.0, %v582
    %584 = vmatmul.f32.gmra.mxu0 %v563
    %v585 = vpop.f32.mrf.mxu0
    %v586 = vadd.f32 0.0, %v585
    %587 = vdwg.mxu0
    %v588 = vadd.f32 %v551, %v583
    %v589 = vadd.f32 %v552, %v586
    %s590 = scalar_lea.vmem %s3, 112
    %v591 = vld [vmem:[%s590] sm:$0xff]
    %v592 = vld [vmem:[%s590 + $0x8] sm:$0xff]
    %593 = vrot.lane.b32.xlu0 %v336, 107
    %v594 = vpop.permute.xlu0 %593
    %v597 = vsel %vm346, %v591, 0
    %v600 = vsel %vm346, %v592, 0
    %602 = vmatpush.msra.mxu0 0.0
    %603 = vmatpush.msra.mxu0 0.0
    %604 = vmatpush.msra.mxu0 0.0
    %605 = vmatpush.msra.mxu0 0.0
    %606 = vmatpush.msra.mxu0 0.0
    %607 = vmatpush.msra.mxu0 0.0
    %608 = vmatpush.msra.mxu0 0.0
    %609 = vmatpush.msra.mxu0 0.0
    %610 = vmatpush.msra.mxu0 0.0
    %611 = vmatpush.msra.mxu0 0.0
    %612 = vmatpush.msra.mxu0 0.0
    %613 = vmatpush.msra.mxu0 0.0
    %614 = vmatpush.msra.mxu0 0.0
    %615 = vmatpush.msra.mxu0 0.0
    %616 = vmatpush.msra.mxu0 0.0
    %617 = vmatpush.msra.mxu0 %v594
    %618 = vmatmul.f32.gmra.mxu0 %v597
    %v619 = vpop.f32.mrf.mxu0
    %v620 = vadd.f32 0.0, %v619
    %621 = vmatmul.f32.gmra.mxu0 %v600
    %v622 = vpop.f32.mrf.mxu0
    %v623 = vadd.f32 0.0, %v622
    %624 = vdwg.mxu0
    %v625 = vadd.f32 %v588, %v620
    %v626 = vadd.f32 %v589, %v623
    %s627 = scalar_lea.vmem %s3, 128
    %v628 = vld [vmem:[%s627] sm:$0xff]
    %v629 = vld [vmem:[%s627 + $0x8] sm:$0xff]
    %630 = vrot.lane.b32.xlu0 %v336, 106
    %v631 = vpop.permute.xlu0 %630
    %v634 = vsel %vm346, %v628, 0
    %v637 = vsel %vm346, %v629, 0
    %639 = vmatpush.msra.mxu0 0.0
    %640 = vmatpush.msra.mxu0 0.0
    %641 = vmatpush.msra.mxu0 0.0
    %642 = vmatpush.msra.mxu0 0.0
    %643 = vmatpush.msra.mxu0 0.0
    %644 = vmatpush.msra.mxu0 0.0
    %645 = vmatpush.msra.mxu0 0.0
    %646 = vmatpush.msra.mxu0 0.0
    %647 = vmatpush.msra.mxu0 0.0
    %648 = vmatpush.msra.mxu0 0.0
    %649 = vmatpush.msra.mxu0 0.0
    %650 = vmatpush.msra.mxu0 0.0
    %651 = vmatpush.msra.mxu0 0.0
    %652 = vmatpush.msra.mxu0 0.0
    %653 = vmatpush.msra.mxu0 0.0
    %654 = vmatpush.msra.mxu0 %v631
    %655 = vmatmul.f32.gmra.mxu0 %v634
    %v656 = vpop.f32.mrf.mxu0
    %v657 = vadd.f32 0.0, %v656
    %658 = vmatmul.f32.gmra.mxu0 %v637
    %v659 = vpop.f32.mrf.mxu0
    %v660 = vadd.f32 0.0, %v659
    %661 = vdwg.mxu0
    %v662 = vadd.f32 %v625, %v657
    %v663 = vadd.f32 %v626, %v660
    %v664 = vld [vmem:[%s4] sm:$0xff]
    %v665 = vld [vmem:[%s4 + $0x8] sm:$0xff]
    %667 = vset.pattern.permute.xlu0 0
    %668 = vperm.xlu0 %667, %v664
    %v669 = vpop.permute.xlu0 %668
    %672 = vset.pattern.permute.xlu0 0
    %673 = vperm.xlu0 %672, %v665
    %v674 = vpop.permute.xlu0 %673
    %v676 = vadd.f32 %v662, %v669
    %v677 = vadd.f32 %v663, %v674
    %vm678 = vcmp.gt.f32.partialorder %v676, 0.0
    %vm679 = vcmp.gt.f32.partialorder %v677, 0.0
    %v680 = vmul.f32 %v676, 0.2
    %v681 = vmul.f32 %v677, 0.2
    %v682 = vsel %vm678, %v676, %v680
    %v683 = vsel %vm679, %v677, %v681
    %v684 = vld [vmem:[%s6] sm:$0xff]
    %v685 = vld [vmem:[%s6 + $0x8] sm:$0xff]
    %v686 = vld [vmem:[%s6 + $0x10] sm:$0xff]
    %v687 = vld [vmem:[%s6 + $0x18] sm:$0xff]
    %v688 = vld [vmem:[%s6 + $0x20] sm:$0xff]
    %v689 = vld [vmem:[%s6 + $0x28] sm:$0xff]
    %v690 = vld [vmem:[%s6 + $0x30] sm:$0xff]
    %v691 = vld [vmem:[%s6 + $0x38] sm:$0xff]
    %v692 = vld [vmem:[%s6 + $0x40] sm:$0xff]
    %v693 = vld [vmem:[%s6 + $0x48] sm:$0xff]
    %v694 = vld [vmem:[%s6 + $0x50] sm:$0xff]
    %v695 = vld [vmem:[%s6 + $0x58] sm:$0xff]
    %v696 = vld [vmem:[%s6 + $0x60] sm:$0xf]
    %vm697 = vcmask 818176
    %v699 = vsel %vm697, %v682, 0
    %vm701 = vcmask 1043456
    %v703 = vsel %vm701, %v696, 0
    %705 = vmatpush.msra.mxu0 0.0
    %706 = vmatpush.msra.mxu0 0.0
    %707 = vmatpush.msra.mxu0 0.0
    %708 = vmatpush.msra.mxu0 %v703
    %709 = vmatpush.msra.mxu0 %v695
    %710 = vmatpush.msra.mxu0 %v694
    %711 = vmatpush.msra.mxu0 %v693
    %712 = vmatpush.msra.mxu0 %v692
    %713 = vmatpush.msra.mxu0 %v691
    %714 = vmatpush.msra.mxu0 %v690
    %715 = vmatpush.msra.mxu0 %v689
    %716 = vmatpush.msra.mxu0 %v688
    %717 = vmatpush.msra.mxu0 %v687
    %718 = vmatpush.msra.mxu0 %v686
    %719 = vmatpush.msra.mxu0 %v685
    %720 = vmatpush.msra.mxu0 %v684
    %721 = vmatmul.f32.gmra.mxu0 %v699
    %v722 = vpop.f32.mrf.mxu0
    %v723 = vadd.f32 0.0, %v722
    %724 = vdwg.mxu0
    %v725 = vadd.f32 %v43, %v723
    %s726 = scalar_lea.vmem %s6, 104
    %v727 = vld [vmem:[%s726] sm:$0xff]
    %v728 = vld [vmem:[%s726 + $0x8] sm:$0xff]
    %v729 = vld [vmem:[%s726 + $0x10] sm:$0xff]
    %v730 = vld [vmem:[%s726 + $0x18] sm:$0xff]
    %v731 = vld [vmem:[%s726 + $0x20] sm:$0xff]
    %v732 = vld [vmem:[%s726 + $0x28] sm:$0xff]
    %v733 = vld [vmem:[%s726 + $0x30] sm:$0xff]
    %v734 = vld [vmem:[%s726 + $0x38] sm:$0xff]
    %v735 = vld [vmem:[%s726 + $0x40] sm:$0xff]
    %v736 = vld [vmem:[%s726 + $0x48] sm:$0xff]
    %v737 = vld [vmem:[%s726 + $0x50] sm:$0xff]
    %v738 = vld [vmem:[%s726 + $0x58] sm:$0xff]
    %v739 = vld [vmem:[%s726 + $0x60] sm:$0xf]
    %v740 = vrot.slane %v682, 1
    %v741 = vsel %vm697, %v740, 0
    %v744 = vsel %vm701, %v739, 0
    %746 = vmatpush.msra.mxu0 0.0
    %747 = vmatpush.msra.mxu0 0.0
    %748 = vmatpush.msra.mxu0 0.0
    %749 = vmatpush.msra.mxu0 %v744
    %750 = vmatpush.msra.mxu0 %v738
    %751 = vmatpush.msra.mxu0 %v737
    %752 = vmatpush.msra.mxu0 %v736
    %753 = vmatpush.msra.mxu0 %v735
    %754 = vmatpush.msra.mxu0 %v734
    %755 = vmatpush.msra.mxu0 %v733
    %756 = vmatpush.msra.mxu0 %v732
    %757 = vmatpush.msra.mxu0 %v731
    %758 = vmatpush.msra.mxu0 %v730
    %759 = vmatpush.msra.mxu0 %v729
    %760 = vmatpush.msra.mxu0 %v728
    %761 = vmatpush.msra.mxu0 %v727
    %762 = vmatmul.f32.gmra.mxu0 %v741
    %v763 = vpop.f32.mrf.mxu0
    %v764 = vadd.f32 0.0, %v763
    %765 = vdwg.mxu0
    %v766 = vadd.f32 %v725, %v764
    %s767 = scalar_lea.vmem %s6, 208
    %v768 = vld [vmem:[%s767] sm:$0xff]
    %v769 = vld [vmem:[%s767 + $0x8] sm:$0xff]
    %v770 = vld [vmem:[%s767 + $0x10] sm:$0xff]
    %v771 = vld [vmem:[%s767 + $0x18] sm:$0xff]
    %v772 = vld [vmem:[%s767 + $0x20] sm:$0xff]
    %v773 = vld [vmem:[%s767 + $0x28] sm:$0xff]
    %v774 = vld [vmem:[%s767 + $0x30] sm:$0xff]
    %v775 = vld [vmem:[%s767 + $0x38] sm:$0xff]
    %v776 = vld [vmem:[%s767 + $0x40] sm:$0xff]
    %v777 = vld [vmem:[%s767 + $0x48] sm:$0xff]
    %v778 = vld [vmem:[%s767 + $0x50] sm:$0xff]
    %v779 = vld [vmem:[%s767 + $0x58] sm:$0xff]
    %v780 = vld [vmem:[%s767 + $0x60] sm:$0xf]
    %v781 = vrot.slane %v682, 2
    %v782 = vsel %vm697, %v781, 0
    %v785 = vsel %vm701, %v780, 0
    %787 = vmatpush.msra.mxu0 0.0
    %788 = vmatpush.msra.mxu0 0.0
    %789 = vmatpush.msra.mxu0 0.0
    %790 = vmatpush.msra.mxu0 %v785
    %791 = vmatpush.msra.mxu0 %v779
    %792 = vmatpush.msra.mxu0 %v778
    %793 = vmatpush.msra.mxu0 %v777
    %794 = vmatpush.msra.mxu0 %v776
    %795 = vmatpush.msra.mxu0 %v775
    %796 = vmatpush.msra.mxu0 %v774
    %797 = vmatpush.msra.mxu0 %v773
    %798 = vmatpush.msra.mxu0 %v772
    %799 = vmatpush.msra.mxu0 %v771
    %800 = vmatpush.msra.mxu0 %v770
    %801 = vmatpush.msra.mxu0 %v769
    %802 = vmatpush.msra.mxu0 %v768
    %803 = vmatmul.f32.gmra.mxu0 %v782
    %v804 = vpop.f32.mrf.mxu0
    %v805 = vadd.f32 0.0, %v804
    %806 = vdwg.mxu0
    %v807 = vadd.f32 %v766, %v805
    %s808 = scalar_lea.vmem %s6, 312
    %v809 = vld [vmem:[%s808] sm:$0xff]
    %v810 = vld [vmem:[%s808 + $0x8] sm:$0xff]
    %v811 = vld [vmem:[%s808 + $0x10] sm:$0xff]
    %v812 = vld [vmem:[%s808 + $0x18] sm:$0xff]
    %v813 = vld [vmem:[%s808 + $0x20] sm:$0xff]
    %v814 = vld [vmem:[%s808 + $0x28] sm:$0xff]
    %v815 = vld [vmem:[%s808 + $0x30] sm:$0xff]
    %v816 = vld [vmem:[%s808 + $0x38] sm:$0xff]
    %v817 = vld [vmem:[%s808 + $0x40] sm:$0xff]
    %v818 = vld [vmem:[%s808 + $0x48] sm:$0xff]
    %v819 = vld [vmem:[%s808 + $0x50] sm:$0xff]
    %v820 = vld [vmem:[%s808 + $0x58] sm:$0xff]
    %v821 = vld [vmem:[%s808 + $0x60] sm:$0xf]
    %v822 = vrot.slane %v682, 3
    %v823 = vsel %vm697, %v822, 0
    %v826 = vsel %vm701, %v821, 0
    %828 = vmatpush.msra.mxu0 0.0
    %829 = vmatpush.msra.mxu0 0.0
    %830 = vmatpush.msra.mxu0 0.0
    %831 = vmatpush.msra.mxu0 %v826
    %832 = vmatpush.msra.mxu0 %v820
    %833 = vmatpush.msra.mxu0 %v819
    %834 = vmatpush.msra.mxu0 %v818
    %835 = vmatpush.msra.mxu0 %v817
    %836 = vmatpush.msra.mxu0 %v816
    %837 = vmatpush.msra.mxu0 %v815
    %838 = vmatpush.msra.mxu0 %v814
    %839 = vmatpush.msra.mxu0 %v813
    %840 = vmatpush.msra.mxu0 %v812
    %841 = vmatpush.msra.mxu0 %v811
    %842 = vmatpush.msra.mxu0 %v810
    %843 = vmatpush.msra.mxu0 %v809
    %844 = vmatmul.f32.gmra.mxu0 %v823
    %v845 = vpop.f32.mrf.mxu0
    %v846 = vadd.f32 0.0, %v845
    %847 = vdwg.mxu0
    %v848 = vadd.f32 %v807, %v846
    %s849 = scalar_lea.vmem %s6, 416
    %v850 = vld [vmem:[%s849] sm:$0xff]
    %v851 = vld [vmem:[%s849 + $0x8] sm:$0xff]
    %v852 = vld [vmem:[%s849 + $0x10] sm:$0xff]
    %v853 = vld [vmem:[%s849 + $0x18] sm:$0xff]
    %v854 = vld [vmem:[%s849 + $0x20] sm:$0xff]
    %v855 = vld [vmem:[%s849 + $0x28] sm:$0xff]
    %v856 = vld [vmem:[%s849 + $0x30] sm:$0xff]
    %v857 = vld [vmem:[%s849 + $0x38] sm:$0xff]
    %v858 = vld [vmem:[%s849 + $0x40] sm:$0xff]
    %v859 = vld [vmem:[%s849 + $0x48] sm:$0xff]
    %v860 = vld [vmem:[%s849 + $0x50] sm:$0xff]
    %v861 = vld [vmem:[%s849 + $0x58] sm:$0xff]
    %v862 = vld [vmem:[%s849 + $0x60] sm:$0xf]
    %v863 = vrot.slane %v682, 4
    %v864 = vsel %vm697, %v863, 0
    %v867 = vsel %vm701, %v862, 0
    %869 = vmatpush.msra.mxu0 0.0
    %870 = vmatpush.msra.mxu0 0.0
    %871 = vmatpush.msra.mxu0 0.0
    %872 = vmatpush.msra.mxu0 %v867
    %873 = vmatpush.msra.mxu0 %v861
    %874 = vmatpush.msra.mxu0 %v860
    %875 = vmatpush.msra.mxu0 %v859
    %876 = vmatpush.msra.mxu0 %v858
    %877 = vmatpush.msra.mxu0 %v857
    %878 = vmatpush.msra.mxu0 %v856
    %879 = vmatpush.msra.mxu0 %v855
    %880 = vmatpush.msra.mxu0 %v854
    %881 = vmatpush.msra.mxu0 %v853
    %882 = vmatpush.msra.mxu0 %v852
    %883 = vmatpush.msra.mxu0 %v851
    %884 = vmatpush.msra.mxu0 %v850
    %885 = vmatmul.f32.gmra.mxu0 %v864
    %v886 = vpop.f32.mrf.mxu0
    %v887 = vadd.f32 0.0, %v886
    %888 = vdwg.mxu0
    %v889 = vadd.f32 %v848, %v887
    %s890 = scalar_lea.vmem %s6, 520
    %v891 = vld [vmem:[%s890] sm:$0xff]
    %v892 = vld [vmem:[%s890 + $0x8] sm:$0xff]
    %v893 = vld [vmem:[%s890 + $0x10] sm:$0xff]
    %v894 = vld [vmem:[%s890 + $0x18] sm:$0xff]
    %v895 = vld [vmem:[%s890 + $0x20] sm:$0xff]
    %v896 = vld [vmem:[%s890 + $0x28] sm:$0xff]
    %v897 = vld [vmem:[%s890 + $0x30] sm:$0xff]
    %v898 = vld [vmem:[%s890 + $0x38] sm:$0xff]
    %v899 = vld [vmem:[%s890 + $0x40] sm:$0xff]
    %v900 = vld [vmem:[%s890 + $0x48] sm:$0xff]
    %v901 = vld [vmem:[%s890 + $0x50] sm:$0xff]
    %v902 = vld [vmem:[%s890 + $0x58] sm:$0xff]
    %v903 = vld [vmem:[%s890 + $0x60] sm:$0xf]
    %v904 = vrot.slane %v682, 5
    %v905 = vsel %vm697, %v904, 0
    %v908 = vsel %vm701, %v903, 0
    %910 = vmatpush.msra.mxu0 0.0
    %911 = vmatpush.msra.mxu0 0.0
    %912 = vmatpush.msra.mxu0 0.0
    %913 = vmatpush.msra.mxu0 %v908
    %914 = vmatpush.msra.mxu0 %v902
    %915 = vmatpush.msra.mxu0 %v901
    %916 = vmatpush.msra.mxu0 %v900
    %917 = vmatpush.msra.mxu0 %v899
    %918 = vmatpush.msra.mxu0 %v898
    %919 = vmatpush.msra.mxu0 %v897
    %920 = vmatpush.msra.mxu0 %v896
    %921 = vmatpush.msra.mxu0 %v895
    %922 = vmatpush.msra.mxu0 %v894
    %923 = vmatpush.msra.mxu0 %v893
    %924 = vmatpush.msra.mxu0 %v892
    %925 = vmatpush.msra.mxu0 %v891
    %926 = vmatmul.f32.gmra.mxu0 %v905
    %v927 = vpop.f32.mrf.mxu0
    %v928 = vadd.f32 0.0, %v927
    %929 = vdwg.mxu0
    %v930 = vadd.f32 %v889, %v928
    %s931 = scalar_lea.vmem %s6, 624
    %v932 = vld [vmem:[%s931] sm:$0xff]
    %v933 = vld [vmem:[%s931 + $0x8] sm:$0xff]
    %v934 = vld [vmem:[%s931 + $0x10] sm:$0xff]
    %v935 = vld [vmem:[%s931 + $0x18] sm:$0xff]
    %v936 = vld [vmem:[%s931 + $0x20] sm:$0xff]
    %v937 = vld [vmem:[%s931 + $0x28] sm:$0xff]
    %v938 = vld [vmem:[%s931 + $0x30] sm:$0xff]
    %v939 = vld [vmem:[%s931 + $0x38] sm:$0xff]
    %v940 = vld [vmem:[%s931 + $0x40] sm:$0xff]
    %v941 = vld [vmem:[%s931 + $0x48] sm:$0xff]
    %v942 = vld [vmem:[%s931 + $0x50] sm:$0xff]
    %v943 = vld [vmem:[%s931 + $0x58] sm:$0xff]
    %v944 = vld [vmem:[%s931 + $0x60] sm:$0xf]
    %v945 = vrot.slane %v682, 6
    %v946 = vsel %vm697, %v945, 0
    %v949 = vsel %vm701, %v944, 0
    %951 = vmatpush.msra.mxu0 0.0
    %952 = vmatpush.msra.mxu0 0.0
    %953 = vmatpush.msra.mxu0 0.0
    %954 = vmatpush.msra.mxu0 %v949
    %955 = vmatpush.msra.mxu0 %v943
    %956 = vmatpush.msra.mxu0 %v942
    %957 = vmatpush.msra.mxu0 %v941
    %958 = vmatpush.msra.mxu0 %v940
    %959 = vmatpush.msra.mxu0 %v939
    %960 = vmatpush.msra.mxu0 %v938
    %961 = vmatpush.msra.mxu0 %v937
    %962 = vmatpush.msra.mxu0 %v936
    %963 = vmatpush.msra.mxu0 %v935
    %964 = vmatpush.msra.mxu0 %v934
    %965 = vmatpush.msra.mxu0 %v933
    %966 = vmatpush.msra.mxu0 %v932
    %967 = vmatmul.f32.gmra.mxu0 %v946
    %v968 = vpop.f32.mrf.mxu0
    %v969 = vadd.f32 0.0, %v968
    %970 = vdwg.mxu0
    %v971 = vadd.f32 %v930, %v969
    %s972 = scalar_lea.vmem %s6, 728
    %v973 = vld [vmem:[%s972] sm:$0xff]
    %v974 = vld [vmem:[%s972 + $0x8] sm:$0xff]
    %v975 = vld [vmem:[%s972 + $0x10] sm:$0xff]
    %v976 = vld [vmem:[%s972 + $0x18] sm:$0xff]
    %v977 = vld [vmem:[%s972 + $0x20] sm:$0xff]
    %v978 = vld [vmem:[%s972 + $0x28] sm:$0xff]
    %v979 = vld [vmem:[%s972 + $0x30] sm:$0xff]
    %v980 = vld [vmem:[%s972 + $0x38] sm:$0xff]
    %v981 = vld [vmem:[%s972 + $0x40] sm:$0xff]
    %v982 = vld [vmem:[%s972 + $0x48] sm:$0xff]
    %v983 = vld [vmem:[%s972 + $0x50] sm:$0xff]
    %v984 = vld [vmem:[%s972 + $0x58] sm:$0xff]
    %v985 = vld [vmem:[%s972 + $0x60] sm:$0xf]
    %v986 = vrot.slane %v682, 7
    %v987 = vsel %vm697, %v986, 0
    %v990 = vsel %vm701, %v985, 0
    %992 = vmatpush.msra.mxu0 0.0
    %993 = vmatpush.msra.mxu0 0.0
    %994 = vmatpush.msra.mxu0 0.0
    %995 = vmatpush.msra.mxu0 %v990
    %996 = vmatpush.msra.mxu0 %v984
    %997 = vmatpush.msra.mxu0 %v983
    %998 = vmatpush.msra.mxu0 %v982
    %999 = vmatpush.msra.mxu0 %v981
    %1000 = vmatpush.msra.mxu0 %v980
    %1001 = vmatpush.msra.mxu0 %v979
    %1002 = vmatpush.msra.mxu0 %v978
    %1003 = vmatpush.msra.mxu0 %v977
    %1004 = vmatpush.msra.mxu0 %v976
    %1005 = vmatpush.msra.mxu0 %v975
    %1006 = vmatpush.msra.mxu0 %v974
    %1007 = vmatpush.msra.mxu0 %v973
    %1008 = vmatmul.f32.gmra.mxu0 %v987
    %v1009 = vpop.f32.mrf.mxu0
    %v1010 = vadd.f32 0.0, %v1009
    %1011 = vdwg.mxu0
    %v1012 = vadd.f32 %v971, %v1010
    %s1013 = scalar_lea.vmem %s6, 832
    %v1014 = vld [vmem:[%s1013] sm:$0xff]
    %v1015 = vld [vmem:[%s1013 + $0x8] sm:$0xff]
    %v1016 = vld [vmem:[%s1013 + $0x10] sm:$0xff]
    %v1017 = vld [vmem:[%s1013 + $0x18] sm:$0xff]
    %v1018 = vld [vmem:[%s1013 + $0x20] sm:$0xff]
    %v1019 = vld [vmem:[%s1013 + $0x28] sm:$0xff]
    %v1020 = vld [vmem:[%s1013 + $0x30] sm:$0xff]
    %v1021 = vld [vmem:[%s1013 + $0x38] sm:$0xff]
    %v1022 = vld [vmem:[%s1013 + $0x40] sm:$0xff]
    %v1023 = vld [vmem:[%s1013 + $0x48] sm:$0xff]
    %v1024 = vld [vmem:[%s1013 + $0x50] sm:$0xff]
    %v1025 = vld [vmem:[%s1013 + $0x58] sm:$0xff]
    %v1026 = vld [vmem:[%s1013 + $0x60] sm:$0xf]
    %v1028 = vsel %vm697, %v683, 0
    %v1031 = vsel %vm701, %v1026, 0
    %1033 = vmatpush.msra.mxu0 0.0
    %1034 = vmatpush.msra.mxu0 0.0
    %1035 = vmatpush.msra.mxu0 0.0
    %1036 = vmatpush.msra.mxu0 %v1031
    %1037 = vmatpush.msra.mxu0 %v1025
    %1038 = vmatpush.msra.mxu0 %v1024
    %1039 = vmatpush.msra.mxu0 %v1023
    %1040 = vmatpush.msra.mxu0 %v1022
    %1041 = vmatpush.msra.mxu0 %v1021
    %1042 = vmatpush.msra.mxu0 %v1020
    %1043 = vmatpush.msra.mxu0 %v1019
    %1044 = vmatpush.msra.mxu0 %v1018
    %1045 = vmatpush.msra.mxu0 %v1017
    %1046 = vmatpush.msra.mxu0 %v1016
    %1047 = vmatpush.msra.mxu0 %v1015
    %1048 = vmatpush.msra.mxu0 %v1014
    %1049 = vmatmul.f32.gmra.mxu0 %v1028
    %v1050 = vpop.f32.mrf.mxu0
    %v1051 = vadd.f32 0.0, %v1050
    %1052 = vdwg.mxu0
    %v1053 = vadd.f32 %v1012, %v1051
    %s1054 = scalar_lea.vmem %s6, 936
    %v1055 = vld [vmem:[%s1054] sm:$0xff]
    %v1056 = vld [vmem:[%s1054 + $0x8] sm:$0xff]
    %v1057 = vld [vmem:[%s1054 + $0x10] sm:$0xff]
    %v1058 = vld [vmem:[%s1054 + $0x18] sm:$0xff]
    %v1059 = vld [vmem:[%s1054 + $0x20] sm:$0xff]
    %v1060 = vld [vmem:[%s1054 + $0x28] sm:$0xff]
    %v1061 = vld [vmem:[%s1054 + $0x30] sm:$0xff]
    %v1062 = vld [vmem:[%s1054 + $0x38] sm:$0xff]
    %v1063 = vld [vmem:[%s1054 + $0x40] sm:$0xff]
    %v1064 = vld [vmem:[%s1054 + $0x48] sm:$0xff]
    %v1065 = vld [vmem:[%s1054 + $0x50] sm:$0xff]
    %v1066 = vld [vmem:[%s1054 + $0x58] sm:$0xff]
    %v1067 = vld [vmem:[%s1054 + $0x60] sm:$0xf]
    %v1068 = vrot.slane %v683, 1
    %v1069 = vsel %vm697, %v1068, 0
    %v1072 = vsel %vm701, %v1067, 0
    %1074 = vmatpush.msra.mxu0 0.0
    %1075 = vmatpush.msra.mxu0 0.0
    %1076 = vmatpush.msra.mxu0 0.0
    %1077 = vmatpush.msra.mxu0 %v1072
    %1078 = vmatpush.msra.mxu0 %v1066
    %1079 = vmatpush.msra.mxu0 %v1065
    %1080 = vmatpush.msra.mxu0 %v1064
    %1081 = vmatpush.msra.mxu0 %v1063
    %1082 = vmatpush.msra.mxu0 %v1062
    %1083 = vmatpush.msra.mxu0 %v1061
    %1084 = vmatpush.msra.mxu0 %v1060
    %1085 = vmatpush.msra.mxu0 %v1059
    %1086 = vmatpush.msra.mxu0 %v1058
    %1087 = vmatpush.msra.mxu0 %v1057
    %1088 = vmatpush.msra.mxu0 %v1056
    %1089 = vmatpush.msra.mxu0 %v1055
    %1090 = vmatmul.f32.gmra.mxu0 %v1069
    %v1091 = vpop.f32.mrf.mxu0
    %v1092 = vadd.f32 0.0, %v1091
    %1093 = vdwg.mxu0
    %v1094 = vadd.f32 %v1053, %v1092
    %s1095 = scalar_lea.vmem %s6, 1040
    %v1096 = vld [vmem:[%s1095] sm:$0xff]
    %v1097 = vld [vmem:[%s1095 + $0x8] sm:$0xff]
    %v1098 = vld [vmem:[%s1095 + $0x10] sm:$0xff]
    %v1099 = vld [vmem:[%s1095 + $0x18] sm:$0xff]
    %v1100 = vld [vmem:[%s1095 + $0x20] sm:$0xff]
    %v1101 = vld [vmem:[%s1095 + $0x28] sm:$0xff]
    %v1102 = vld [vmem:[%s1095 + $0x30] sm:$0xff]
    %v1103 = vld [vmem:[%s1095 + $0x38] sm:$0xff]
    %v1104 = vld [vmem:[%s1095 + $0x40] sm:$0xff]
    %v1105 = vld [vmem:[%s1095 + $0x48] sm:$0xff]
    %v1106 = vld [vmem:[%s1095 + $0x50] sm:$0xff]
    %v1107 = vld [vmem:[%s1095 + $0x58] sm:$0xff]
    %v1108 = vld [vmem:[%s1095 + $0x60] sm:$0xf]
    %v1109 = vrot.slane %v683, 2
    %v1110 = vsel %vm697, %v1109, 0
    %v1113 = vsel %vm701, %v1108, 0
    %1115 = vmatpush.msra.mxu0 0.0
    %1116 = vmatpush.msra.mxu0 0.0
    %1117 = vmatpush.msra.mxu0 0.0
    %1118 = vmatpush.msra.mxu0 %v1113
    %1119 = vmatpush.msra.mxu0 %v1107
    %1120 = vmatpush.msra.mxu0 %v1106
    %1121 = vmatpush.msra.mxu0 %v1105
    %1122 = vmatpush.msra.mxu0 %v1104
    %1123 = vmatpush.msra.mxu0 %v1103
    %1124 = vmatpush.msra.mxu0 %v1102
    %1125 = vmatpush.msra.mxu0 %v1101
    %1126 = vmatpush.msra.mxu0 %v1100
    %1127 = vmatpush.msra.mxu0 %v1099
    %1128 = vmatpush.msra.mxu0 %v1098
    %1129 = vmatpush.msra.mxu0 %v1097
    %1130 = vmatpush.msra.mxu0 %v1096
    %1131 = vmatmul.f32.gmra.mxu0 %v1110
    %v1132 = vpop.f32.mrf.mxu0
    %v1133 = vadd.f32 0.0, %v1132
    %1134 = vdwg.mxu0
    %v1135 = vadd.f32 %v1094, %v1133
    %s1136 = scalar_lea.vmem %s6, 1144
    %v1137 = vld [vmem:[%s1136] sm:$0xff]
    %v1138 = vld [vmem:[%s1136 + $0x8] sm:$0xff]
    %v1139 = vld [vmem:[%s1136 + $0x10] sm:$0xff]
    %v1140 = vld [vmem:[%s1136 + $0x18] sm:$0xff]
    %v1141 = vld [vmem:[%s1136 + $0x20] sm:$0xff]
    %v1142 = vld [vmem:[%s1136 + $0x28] sm:$0xff]
    %v1143 = vld [vmem:[%s1136 + $0x30] sm:$0xff]
    %v1144 = vld [vmem:[%s1136 + $0x38] sm:$0xff]
    %v1145 = vld [vmem:[%s1136 + $0x40] sm:$0xff]
    %v1146 = vld [vmem:[%s1136 + $0x48] sm:$0xff]
    %v1147 = vld [vmem:[%s1136 + $0x50] sm:$0xff]
    %v1148 = vld [vmem:[%s1136 + $0x58] sm:$0xff]
    %v1149 = vld [vmem:[%s1136 + $0x60] sm:$0xf]
    %v1150 = vrot.slane %v683, 3
    %v1151 = vsel %vm697, %v1150, 0
    %v1154 = vsel %vm701, %v1149, 0
    %1156 = vmatpush.msra.mxu0 0.0
    %1157 = vmatpush.msra.mxu0 0.0
    %1158 = vmatpush.msra.mxu0 0.0
    %1159 = vmatpush.msra.mxu0 %v1154
    %1160 = vmatpush.msra.mxu0 %v1148
    %1161 = vmatpush.msra.mxu0 %v1147
    %1162 = vmatpush.msra.mxu0 %v1146
    %1163 = vmatpush.msra.mxu0 %v1145
    %1164 = vmatpush.msra.mxu0 %v1144
    %1165 = vmatpush.msra.mxu0 %v1143
    %1166 = vmatpush.msra.mxu0 %v1142
    %1167 = vmatpush.msra.mxu0 %v1141
    %1168 = vmatpush.msra.mxu0 %v1140
    %1169 = vmatpush.msra.mxu0 %v1139
    %1170 = vmatpush.msra.mxu0 %v1138
    %1171 = vmatpush.msra.mxu0 %v1137
    %1172 = vmatmul.f32.gmra.mxu0 %v1151
    %v1173 = vpop.f32.mrf.mxu0
    %v1174 = vadd.f32 0.0, %v1173
    %1175 = vdwg.mxu0
    %v1176 = vadd.f32 %v1135, %v1174
    %s1177 = scalar_lea.vmem %s6, 1248
    %v1178 = vld [vmem:[%s1177] sm:$0xff]
    %v1179 = vld [vmem:[%s1177 + $0x8] sm:$0xff]
    %v1180 = vld [vmem:[%s1177 + $0x10] sm:$0xff]
    %v1181 = vld [vmem:[%s1177 + $0x18] sm:$0xff]
    %v1182 = vld [vmem:[%s1177 + $0x20] sm:$0xff]
    %v1183 = vld [vmem:[%s1177 + $0x28] sm:$0xff]
    %v1184 = vld [vmem:[%s1177 + $0x30] sm:$0xff]
    %v1185 = vld [vmem:[%s1177 + $0x38] sm:$0xff]
    %v1186 = vld [vmem:[%s1177 + $0x40] sm:$0xff]
    %v1187 = vld [vmem:[%s1177 + $0x48] sm:$0xff]
    %v1188 = vld [vmem:[%s1177 + $0x50] sm:$0xff]
    %v1189 = vld [vmem:[%s1177 + $0x58] sm:$0xff]
    %v1190 = vld [vmem:[%s1177 + $0x60] sm:$0xf]
    %v1191 = vrot.slane %v683, 4
    %v1192 = vsel %vm697, %v1191, 0
    %v1195 = vsel %vm701, %v1190, 0
    %1197 = vmatpush.msra.mxu0 0.0
    %1198 = vmatpush.msra.mxu0 0.0
    %1199 = vmatpush.msra.mxu0 0.0
    %1200 = vmatpush.msra.mxu0 %v1195
    %1201 = vmatpush.msra.mxu0 %v1189
    %1202 = vmatpush.msra.mxu0 %v1188
    %1203 = vmatpush.msra.mxu0 %v1187
    %1204 = vmatpush.msra.mxu0 %v1186
    %1205 = vmatpush.msra.mxu0 %v1185
    %1206 = vmatpush.msra.mxu0 %v1184
    %1207 = vmatpush.msra.mxu0 %v1183
    %1208 = vmatpush.msra.mxu0 %v1182
    %1209 = vmatpush.msra.mxu0 %v1181
    %1210 = vmatpush.msra.mxu0 %v1180
    %1211 = vmatpush.msra.mxu0 %v1179
    %1212 = vmatpush.msra.mxu0 %v1178
    %1213 = vmatmul.f32.gmra.mxu0 %v1192
    %v1214 = vpop.f32.mrf.mxu0
    %v1215 = vadd.f32 0.0, %v1214
    %1216 = vdwg.mxu0
    %v1217 = vadd.f32 %v1176, %v1215
    %s1218 = scalar_lea.vmem %s6, 1352
    %v1219 = vld [vmem:[%s1218] sm:$0xff]
    %v1220 = vld [vmem:[%s1218 + $0x8] sm:$0xff]
    %v1221 = vld [vmem:[%s1218 + $0x10] sm:$0xff]
    %v1222 = vld [vmem:[%s1218 + $0x18] sm:$0xff]
    %v1223 = vld [vmem:[%s1218 + $0x20] sm:$0xff]
    %v1224 = vld [vmem:[%s1218 + $0x28] sm:$0xff]
    %v1225 = vld [vmem:[%s1218 + $0x30] sm:$0xff]
    %v1226 = vld [vmem:[%s1218 + $0x38] sm:$0xff]
    %v1227 = vld [vmem:[%s1218 + $0x40] sm:$0xff]
    %v1228 = vld [vmem:[%s1218 + $0x48] sm:$0xff]
    %v1229 = vld [vmem:[%s1218 + $0x50] sm:$0xff]
    %v1230 = vld [vmem:[%s1218 + $0x58] sm:$0xff]
    %v1231 = vld [vmem:[%s1218 + $0x60] sm:$0xf]
    %v1232 = vrot.slane %v683, 5
    %v1233 = vsel %vm697, %v1232, 0
    %v1236 = vsel %vm701, %v1231, 0
    %1238 = vmatpush.msra.mxu0 0.0
    %1239 = vmatpush.msra.mxu0 0.0
    %1240 = vmatpush.msra.mxu0 0.0
    %1241 = vmatpush.msra.mxu0 %v1236
    %1242 = vmatpush.msra.mxu0 %v1230
    %1243 = vmatpush.msra.mxu0 %v1229
    %1244 = vmatpush.msra.mxu0 %v1228
    %1245 = vmatpush.msra.mxu0 %v1227
    %1246 = vmatpush.msra.mxu0 %v1226
    %1247 = vmatpush.msra.mxu0 %v1225
    %1248 = vmatpush.msra.mxu0 %v1224
    %1249 = vmatpush.msra.mxu0 %v1223
    %1250 = vmatpush.msra.mxu0 %v1222
    %1251 = vmatpush.msra.mxu0 %v1221
    %1252 = vmatpush.msra.mxu0 %v1220
    %1253 = vmatpush.msra.mxu0 %v1219
    %1254 = vmatmul.f32.gmra.mxu0 %v1233
    %v1255 = vpop.f32.mrf.mxu0
    %v1256 = vadd.f32 0.0, %v1255
    %1257 = vdwg.mxu0
    %v1258 = vadd.f32 %v1217, %v1256
    %s1259 = scalar_lea.vmem %s6, 1456
    %v1260 = vld [vmem:[%s1259] sm:$0xff]
    %v1261 = vld [vmem:[%s1259 + $0x8] sm:$0xff]
    %v1262 = vld [vmem:[%s1259 + $0x10] sm:$0xff]
    %v1263 = vld [vmem:[%s1259 + $0x18] sm:$0xff]
    %v1264 = vld [vmem:[%s1259 + $0x20] sm:$0xff]
    %v1265 = vld [vmem:[%s1259 + $0x28] sm:$0xff]
    %v1266 = vld [vmem:[%s1259 + $0x30] sm:$0xff]
    %v1267 = vld [vmem:[%s1259 + $0x38] sm:$0xff]
    %v1268 = vld [vmem:[%s1259 + $0x40] sm:$0xff]
    %v1269 = vld [vmem:[%s1259 + $0x48] sm:$0xff]
    %v1270 = vld [vmem:[%s1259 + $0x50] sm:$0xff]
    %v1271 = vld [vmem:[%s1259 + $0x58] sm:$0xff]
    %v1272 = vld [vmem:[%s1259 + $0x60] sm:$0xf]
    %v1273 = vrot.slane %v683, 6
    %v1274 = vsel %vm697, %v1273, 0
    %v1277 = vsel %vm701, %v1272, 0
    %1279 = vmatpush.msra.mxu0 0.0
    %1280 = vmatpush.msra.mxu0 0.0
    %1281 = vmatpush.msra.mxu0 0.0
    %1282 = vmatpush.msra.mxu0 %v1277
    %1283 = vmatpush.msra.mxu0 %v1271
    %1284 = vmatpush.msra.mxu0 %v1270
    %1285 = vmatpush.msra.mxu0 %v1269
    %1286 = vmatpush.msra.mxu0 %v1268
    %1287 = vmatpush.msra.mxu0 %v1267
    %1288 = vmatpush.msra.mxu0 %v1266
    %1289 = vmatpush.msra.mxu0 %v1265
    %1290 = vmatpush.msra.mxu0 %v1264
    %1291 = vmatpush.msra.mxu0 %v1263
    %1292 = vmatpush.msra.mxu0 %v1262
    %1293 = vmatpush.msra.mxu0 %v1261
    %1294 = vmatpush.msra.mxu0 %v1260
    %1295 = vmatmul.f32.gmra.mxu0 %v1274
    %v1296 = vpop.f32.mrf.mxu0
    %v1297 = vadd.f32 0.0, %v1296
    %1298 = vdwg.mxu0
    %v1299 = vadd.f32 %v1258, %v1297
    %s1300 = scalar_lea.vmem %s6, 1560
    %v1301 = vld [vmem:[%s1300] sm:$0xff]
    %v1302 = vld [vmem:[%s1300 + $0x8] sm:$0xff]
    %v1303 = vld [vmem:[%s1300 + $0x10] sm:$0xff]
    %v1304 = vld [vmem:[%s1300 + $0x18] sm:$0xff]
    %v1305 = vld [vmem:[%s1300 + $0x20] sm:$0xff]
    %v1306 = vld [vmem:[%s1300 + $0x28] sm:$0xff]
    %v1307 = vld [vmem:[%s1300 + $0x30] sm:$0xff]
    %v1308 = vld [vmem:[%s1300 + $0x38] sm:$0xff]
    %v1309 = vld [vmem:[%s1300 + $0x40] sm:$0xff]
    %v1310 = vld [vmem:[%s1300 + $0x48] sm:$0xff]
    %v1311 = vld [vmem:[%s1300 + $0x50] sm:$0xff]
    %v1312 = vld [vmem:[%s1300 + $0x58] sm:$0xff]
    %v1313 = vld [vmem:[%s1300 + $0x60] sm:$0xf]
    %v1314 = vrot.slane %v683, 7
    %v1315 = vsel %vm697, %v1314, 0
    %v1318 = vsel %vm701, %v1313, 0
    %1320 = vmatpush.msra.mxu0 0.0
    %1321 = vmatpush.msra.mxu0 0.0
    %1322 = vmatpush.msra.mxu0 0.0
    %1323 = vmatpush.msra.mxu0 %v1318
    %1324 = vmatpush.msra.mxu0 %v1312
    %1325 = vmatpush.msra.mxu0 %v1311
    %1326 = vmatpush.msra.mxu0 %v1310
    %1327 = vmatpush.msra.mxu0 %v1309
    %1328 = vmatpush.msra.mxu0 %v1308
    %1329 = vmatpush.msra.mxu0 %v1307
    %1330 = vmatpush.msra.mxu0 %v1306
    %1331 = vmatpush.msra.mxu0 %v1305
    %1332 = vmatpush.msra.mxu0 %v1304
    %1333 = vmatpush.msra.mxu0 %v1303
    %1334 = vmatpush.msra.mxu0 %v1302
    %1335 = vmatpush.msra.mxu0 %v1301
    %1336 = vmatmul.f32.gmra.mxu0 %v1315
    %v1337 = vpop.f32.mrf.mxu0
    %v1338 = vadd.f32 0.0, %v1337
    %1339 = vdwg.mxu0
    %v1340 = vadd.f32 %v1299, %v1338
    %vm1341 = vcmp.gt.f32.partialorder %v1340, 0.0
    %v1342 = vmul.f32 %v1340, 0.2
    %v1343 = vsel %vm1341, %v1340, %v1342
    %vm1344 = vcmask 253952
    %1345 = vst.msk [vmem:[#allocation3] sm:$0x1] %vm1344, %v1343
    %s1346 = scalar_lea.vmem %s0, 2
    %v1347 = vld [vmem:[%s1346] sm:$0x3]
    %v1348 = vld [vmem:[%s1] sm:$0xff]
    %v1349 = vld [vmem:[%s49] sm:$0xff]
    %1351 = vrot.lane.b32.xlu0 %v1347, 127
    %v1352 = vpop.permute.xlu0 %1351
    %v1354 = vsel %vm54, %v1349, 0
    %v1356 = vsel %vm58, %v1352, 0
    %1358 = vmatpush.msra.mxu0 0.0
    %1359 = vmatpush.msra.mxu0 0.0
    %1360 = vmatpush.msra.mxu0 0.0
    %1361 = vmatpush.msra.mxu0 0.0
    %1362 = vmatpush.msra.mxu0 0.0
    %1363 = vmatpush.msra.mxu0 0.0
    %1364 = vmatpush.msra.mxu0 0.0
    %1365 = vmatpush.msra.mxu0 0.0
    %1366 = vmatpush.msra.mxu0 0.0
    %1367 = vmatpush.msra.mxu0 0.0
    %1368 = vmatpush.msra.mxu0 0.0
    %1369 = vmatpush.msra.mxu0 0.0
    %1370 = vmatpush.msra.mxu0 0.0
    %1371 = vmatpush.msra.mxu0 0.0
    %1372 = vmatpush.msra.mxu0 0.0
    %1373 = vmatpush.msra.mxu0 %v1356
    %1374 = vmatmul.f32.gmra.mxu0 %v1354
    %v1375 = vpop.f32.mrf.mxu0
    %v1376 = vadd.f32 0.0, %v1375
    %1377 = vdwg.mxu0
    %v1379 = vsel %vm54, %v1348, 0
    %v1381 = vsel %vm58, %v1347, 0
    %1383 = vmatpush.msra.mxu0 0.0
    %1384 = vmatpush.msra.mxu0 0.0
    %1385 = vmatpush.msra.mxu0 0.0
    %1386 = vmatpush.msra.mxu0 0.0
    %1387 = vmatpush.msra.mxu0 0.0
    %1388 = vmatpush.msra.mxu0 0.0
    %1389 = vmatpush.msra.mxu0 0.0
    %1390 = vmatpush.msra.mxu0 0.0
    %1391 = vmatpush.msra.mxu0 0.0
    %1392 = vmatpush.msra.mxu0 0.0
    %1393 = vmatpush.msra.mxu0 0.0
    %1394 = vmatpush.msra.mxu0 0.0
    %1395 = vmatpush.msra.mxu0 0.0
    %1396 = vmatpush.msra.mxu0 0.0
    %1397 = vmatpush.msra.mxu0 0.0
    %1398 = vmatpush.msra.mxu0 %v1381
    %1399 = vmatmul.f32.gmra.mxu0 %v1379
    %v1400 = vpop.f32.mrf.mxu0
    %v1401 = vadd.f32 %v1376, %v1400
    %1402 = vdwg.mxu0
    %v1403 = vld [vmem:[%s106] sm:$0xff]
    %1404 = vrot.lane.b32.xlu0 %v1347, 126
    %v1405 = vpop.permute.xlu0 %1404
    %v1407 = vsel %vm54, %v1403, 0
    %v1409 = vsel %vm58, %v1405, 0
    %1411 = vmatpush.msra.mxu0 0.0
    %1412 = vmatpush.msra.mxu0 0.0
    %1413 = vmatpush.msra.mxu0 0.0
    %1414 = vmatpush.msra.mxu0 0.0
    %1415 = vmatpush.msra.mxu0 0.0
    %1416 = vmatpush.msra.mxu0 0.0
    %1417 = vmatpush.msra.mxu0 0.0
    %1418 = vmatpush.msra.mxu0 0.0
    %1419 = vmatpush.msra.mxu0 0.0
    %1420 = vmatpush.msra.mxu0 0.0
    %1421 = vmatpush.msra.mxu0 0.0
    %1422 = vmatpush.msra.mxu0 0.0
    %1423 = vmatpush.msra.mxu0 0.0
    %1424 = vmatpush.msra.mxu0 0.0
    %1425 = vmatpush.msra.mxu0 0.0
    %1426 = vmatpush.msra.mxu0 %v1409
    %1427 = vmatmul.f32.gmra.mxu0 %v1407
    %v1428 = vpop.f32.mrf.mxu0
    %v1429 = vadd.f32 0.0, %v1428
    %1430 = vdwg.mxu0
    %v1431 = vadd.f32 %v1401, %v1429
    %v1432 = vld [vmem:[%s136] sm:$0xff]
    %1433 = vrot.lane.b32.xlu0 %v1347, 118
    %v1434 = vpop.permute.xlu0 %1433
    %v1436 = vsel %vm54, %v1432, 0
    %v1438 = vsel %vm58, %v1434, 0
    %1440 = vmatpush.msra.mxu0 0.0
    %1441 = vmatpush.msra.mxu0 0.0
    %1442 = vmatpush.msra.mxu0 0.0
    %1443 = vmatpush.msra.mxu0 0.0
    %1444 = vmatpush.msra.mxu0 0.0
    %1445 = vmatpush.msra.mxu0 0.0
    %1446 = vmatpush.msra.mxu0 0.0
    %1447 = vmatpush.msra.mxu0 0.0
    %1448 = vmatpush.msra.mxu0 0.0
    %1449 = vmatpush.msra.mxu0 0.0
    %1450 = vmatpush.msra.mxu0 0.0
    %1451 = vmatpush.msra.mxu0 0.0
    %1452 = vmatpush.msra.mxu0 0.0
    %1453 = vmatpush.msra.mxu0 0.0
    %1454 = vmatpush.msra.mxu0 0.0
    %1455 = vmatpush.msra.mxu0 %v1438
    %1456 = vmatmul.f32.gmra.mxu0 %v1436
    %v1457 = vpop.f32.mrf.mxu0
    %v1458 = vadd.f32 0.0, %v1457
    %1459 = vdwg.mxu0
    %v1460 = vadd.f32 %v1431, %v1458
    %v1461 = vld [vmem:[%s166] sm:$0xff]
    %1462 = vrot.lane.b32.xlu0 %v1347, 117
    %v1463 = vpop.permute.xlu0 %1462
    %v1465 = vsel %vm54, %v1461, 0
    %v1467 = vsel %vm58, %v1463, 0
    %1469 = vmatpush.msra.mxu0 0.0
    %1470 = vmatpush.msra.mxu0 0.0
    %1471 = vmatpush.msra.mxu0 0.0
    %1472 = vmatpush.msra.mxu0 0.0
    %1473 = vmatpush.msra.mxu0 0.0
    %1474 = vmatpush.msra.mxu0 0.0
    %1475 = vmatpush.msra.mxu0 0.0
    %1476 = vmatpush.msra.mxu0 0.0
    %1477 = vmatpush.msra.mxu0 0.0
    %1478 = vmatpush.msra.mxu0 0.0
    %1479 = vmatpush.msra.mxu0 0.0
    %1480 = vmatpush.msra.mxu0 0.0
    %1481 = vmatpush.msra.mxu0 0.0
    %1482 = vmatpush.msra.mxu0 0.0
    %1483 = vmatpush.msra.mxu0 0.0
    %1484 = vmatpush.msra.mxu0 %v1467
    %1485 = vmatmul.f32.gmra.mxu0 %v1465
    %v1486 = vpop.f32.mrf.mxu0
    %v1487 = vadd.f32 0.0, %v1486
    %1488 = vdwg.mxu0
    %v1489 = vadd.f32 %v1460, %v1487
    %v1490 = vld [vmem:[%s196] sm:$0xff]
    %1491 = vrot.lane.b32.xlu0 %v1347, 116
    %v1492 = vpop.permute.xlu0 %1491
    %v1494 = vsel %vm54, %v1490, 0
    %v1496 = vsel %vm58, %v1492, 0
    %1498 = vmatpush.msra.mxu0 0.0
    %1499 = vmatpush.msra.mxu0 0.0
    %1500 = vmatpush.msra.mxu0 0.0
    %1501 = vmatpush.msra.mxu0 0.0
    %1502 = vmatpush.msra.mxu0 0.0
    %1503 = vmatpush.msra.mxu0 0.0
    %1504 = vmatpush.msra.mxu0 0.0
    %1505 = vmatpush.msra.mxu0 0.0
    %1506 = vmatpush.msra.mxu0 0.0
    %1507 = vmatpush.msra.mxu0 0.0
    %1508 = vmatpush.msra.mxu0 0.0
    %1509 = vmatpush.msra.mxu0 0.0
    %1510 = vmatpush.msra.mxu0 0.0
    %1511 = vmatpush.msra.mxu0 0.0
    %1512 = vmatpush.msra.mxu0 0.0
    %1513 = vmatpush.msra.mxu0 %v1496
    %1514 = vmatmul.f32.gmra.mxu0 %v1494
    %v1515 = vpop.f32.mrf.mxu0
    %v1516 = vadd.f32 0.0, %v1515
    %1517 = vdwg.mxu0
    %v1518 = vadd.f32 %v1489, %v1516
    %v1519 = vld [vmem:[%s226] sm:$0xff]
    %1520 = vrot.lane.b32.xlu0 %v1347, 108
    %v1521 = vpop.permute.xlu0 %1520
    %v1523 = vsel %vm54, %v1519, 0
    %v1525 = vsel %vm58, %v1521, 0
    %1527 = vmatpush.msra.mxu0 0.0
    %1528 = vmatpush.msra.mxu0 0.0
    %1529 = vmatpush.msra.mxu0 0.0
    %1530 = vmatpush.msra.mxu0 0.0
    %1531 = vmatpush.msra.mxu0 0.0
    %1532 = vmatpush.msra.mxu0 0.0
    %1533 = vmatpush.msra.mxu0 0.0
    %1534 = vmatpush.msra.mxu0 0.0
    %1535 = vmatpush.msra.mxu0 0.0
    %1536 = vmatpush.msra.mxu0 0.0
    %1537 = vmatpush.msra.mxu0 0.0
    %1538 = vmatpush.msra.mxu0 0.0
    %1539 = vmatpush.msra.mxu0 0.0
    %1540 = vmatpush.msra.mxu0 0.0
    %1541 = vmatpush.msra.mxu0 0.0
    %1542 = vmatpush.msra.mxu0 %v1525
    %1543 = vmatmul.f32.gmra.mxu0 %v1523
    %v1544 = vpop.f32.mrf.mxu0
    %v1545 = vadd.f32 0.0, %v1544
    %1546 = vdwg.mxu0
    %v1547 = vadd.f32 %v1518, %v1545
    %v1548 = vld [vmem:[%s256] sm:$0xff]
    %1549 = vrot.lane.b32.xlu0 %v1347, 107
    %v1550 = vpop.permute.xlu0 %1549
    %v1552 = vsel %vm54, %v1548, 0
    %v1554 = vsel %vm58, %v1550, 0
    %1556 = vmatpush.msra.mxu0 0.0
    %1557 = vmatpush.msra.mxu0 0.0
    %1558 = vmatpush.msra.mxu0 0.0
    %1559 = vmatpush.msra.mxu0 0.0
    %1560 = vmatpush.msra.mxu0 0.0
    %1561 = vmatpush.msra.mxu0 0.0
    %1562 = vmatpush.msra.mxu0 0.0
    %1563 = vmatpush.msra.mxu0 0.0
    %1564 = vmatpush.msra.mxu0 0.0
    %1565 = vmatpush.msra.mxu0 0.0
    %1566 = vmatpush.msra.mxu0 0.0
    %1567 = vmatpush.msra.mxu0 0.0
    %1568 = vmatpush.msra.mxu0 0.0
    %1569 = vmatpush.msra.mxu0 0.0
    %1570 = vmatpush.msra.mxu0 0.0
    %1571 = vmatpush.msra.mxu0 %v1554
    %1572 = vmatmul.f32.gmra.mxu0 %v1552
    %v1573 = vpop.f32.mrf.mxu0
    %v1574 = vadd.f32 0.0, %v1573
    %1575 = vdwg.mxu0
    %v1576 = vadd.f32 %v1547, %v1574
    %v1577 = vld [vmem:[%s286] sm:$0xff]
    %1578 = vrot.lane.b32.xlu0 %v1347, 106
    %v1579 = vpop.permute.xlu0 %1578
    %v1581 = vsel %vm54, %v1577, 0
    %v1583 = vsel %vm58, %v1579, 0
    %1585 = vmatpush.msra.mxu0 0.0
    %1586 = vmatpush.msra.mxu0 0.0
    %1587 = vmatpush.msra.mxu0 0.0
    %1588 = vmatpush.msra.mxu0 0.0
    %1589 = vmatpush.msra.mxu0 0.0
    %1590 = vmatpush.msra.mxu0 0.0
    %1591 = vmatpush.msra.mxu0 0.0
    %1592 = vmatpush.msra.mxu0 0.0
    %1593 = vmatpush.msra.mxu0 0.0
    %1594 = vmatpush.msra.mxu0 0.0
    %1595 = vmatpush.msra.mxu0 0.0
    %1596 = vmatpush.msra.mxu0 0.0
    %1597 = vmatpush.msra.mxu0 0.0
    %1598 = vmatpush.msra.mxu0 0.0
    %1599 = vmatpush.msra.mxu0 0.0
    %1600 = vmatpush.msra.mxu0 %v1583
    %1601 = vmatmul.f32.gmra.mxu0 %v1581
    %v1602 = vpop.f32.mrf.mxu0
    %v1603 = vadd.f32 0.0, %v1602
    %1604 = vdwg.mxu0
    %v1605 = vadd.f32 %v1576, %v1603
    %v1606 = vld [vmem:[%s2] sm:$0xff]
    %1608 = vset.pattern.permute.xlu0 0
    %1609 = vperm.xlu0 %1608, %v1606
    %v1610 = vpop.permute.xlu0 %1609
    %v1612 = vadd.f32 %v1605, %v1610
    %vm1613 = vcmp.gt.f32.partialorder %v1612, 0.0
    %v1614 = vmul.f32 %v1612, 0.2
    %v1615 = vsel %vm1613, %v1612, %v1614
    %v1616 = vmul.f32 %v1615, %v327
    %1618 = vrot.lane.b32.xlu0 %v1616, 11
    %v1619 = vpop.permute.xlu0 %1618
    %s1621 = scalar_lea.vmem [#allocation2], 8
    %1622 = vst.msk [vmem:[%s1621] sm:$0xff] %vm334, %v1619
    %v1623 = vld [vmem:[%s1621] sm:$0xff]
    %v1624 = vld [vmem:[%s3] sm:$0xff]
    %v1625 = vld [vmem:[%s3 + $0x8] sm:$0xff]
    %v1626 = vld [vmem:[%s339] sm:$0xff]
    %v1627 = vld [vmem:[%s339 + $0x8] sm:$0xff]
    %1629 = vrot.lane.b32.xlu0 %v1623, 127
    %v1630 = vpop.permute.xlu0 %1629
    %v1633 = vsel %vm346, %v1626, 0
    %v1636 = vsel %vm346, %v1627, 0
    %1638 = vmatpush.msra.mxu0 0.0
    %1639 = vmatpush.msra.mxu0 0.0
    %1640 = vmatpush.msra.mxu0 0.0
    %1641 = vmatpush.msra.mxu0 0.0
    %1642 = vmatpush.msra.mxu0 0.0
    %1643 = vmatpush.msra.mxu0 0.0
    %1644 = vmatpush.msra.mxu0 0.0
    %1645 = vmatpush.msra.mxu0 0.0
    %1646 = vmatpush.msra.mxu0 0.0
    %1647 = vmatpush.msra.mxu0 0.0
    %1648 = vmatpush.msra.mxu0 0.0
    %1649 = vmatpush.msra.mxu0 0.0
    %1650 = vmatpush.msra.mxu0 0.0
    %1651 = vmatpush.msra.mxu0 0.0
    %1652 = vmatpush.msra.mxu0 0.0
    %1653 = vmatpush.msra.mxu0 %v1630
    %1654 = vmatmul.f32.gmra.mxu0 %v1633
    %v1655 = vpop.f32.mrf.mxu0
    %v1656 = vadd.f32 0.0, %v1655
    %1657 = vmatmul.f32.gmra.mxu0 %v1636
    %v1658 = vpop.f32.mrf.mxu0
    %v1659 = vadd.f32 0.0, %v1658
    %1660 = vdwg.mxu0
    %v1662 = vsel %vm346, %v1624, 0
    %v1665 = vsel %vm346, %v1625, 0
    %1667 = vmatpush.msra.mxu0 0.0
    %1668 = vmatpush.msra.mxu0 0.0
    %1669 = vmatpush.msra.mxu0 0.0
    %1670 = vmatpush.msra.mxu0 0.0
    %1671 = vmatpush.msra.mxu0 0.0
    %1672 = vmatpush.msra.mxu0 0.0
    %1673 = vmatpush.msra.mxu0 0.0
    %1674 = vmatpush.msra.mxu0 0.0
    %1675 = vmatpush.msra.mxu0 0.0
    %1676 = vmatpush.msra.mxu0 0.0
    %1677 = vmatpush.msra.mxu0 0.0
    %1678 = vmatpush.msra.mxu0 0.0
    %1679 = vmatpush.msra.mxu0 0.0
    %1680 = vmatpush.msra.mxu0 0.0
    %1681 = vmatpush.msra.mxu0 0.0
    %1682 = vmatpush.msra.mxu0 %v1623
    %1683 = vmatmul.f32.gmra.mxu0 %v1662
    %v1684 = vpop.f32.mrf.mxu0
    %v1685 = vadd.f32 %v1656, %v1684
    %1686 = vmatmul.f32.gmra.mxu0 %v1665
    %v1687 = vpop.f32.mrf.mxu0
    %v1688 = vadd.f32 %v1659, %v1687
    %1689 = vdwg.mxu0
    %v1690 = vld [vmem:[%s405] sm:$0xff]
    %v1691 = vld [vmem:[%s405 + $0x8] sm:$0xff]
    %1692 = vrot.lane.b32.xlu0 %v1623, 126
    %v1693 = vpop.permute.xlu0 %1692
    %v1696 = vsel %vm346, %v1690, 0
    %v1699 = vsel %vm346, %v1691, 0
    %1701 = vmatpush.msra.mxu0 0.0
    %1702 = vmatpush.msra.mxu0 0.0
    %1703 = vmatpush.msra.mxu0 0.0
    %1704 = vmatpush.msra.mxu0 0.0
    %1705 = vmatpush.msra.mxu0 0.0
    %1706 = vmatpush.msra.mxu0 0.0
    %1707 = vmatpush.msra.mxu0 0.0
    %1708 = vmatpush.msra.mxu0 0.0
    %1709 = vmatpush.msra.mxu0 0.0
    %1710 = vmatpush.msra.mxu0 0.0
    %1711 = vmatpush.msra.mxu0 0.0
    %1712 = vmatpush.msra.mxu0 0.0
    %1713 = vmatpush.msra.mxu0 0.0
    %1714 = vmatpush.msra.mxu0 0.0
    %1715 = vmatpush.msra.mxu0 0.0
    %1716 = vmatpush.msra.mxu0 %v1693
    %1717 = vmatmul.f32.gmra.mxu0 %v1696
    %v1718 = vpop.f32.mrf.mxu0
    %v1719 = vadd.f32 0.0, %v1718
    %1720 = vmatmul.f32.gmra.mxu0 %v1699
    %v1721 = vpop.f32.mrf.mxu0
    %v1722 = vadd.f32 0.0, %v1721
    %1723 = vdwg.mxu0
    %v1724 = vadd.f32 %v1685, %v1719
    %v1725 = vadd.f32 %v1688, %v1722
    %v1726 = vld [vmem:[%s442] sm:$0xff]
    %v1727 = vld [vmem:[%s442 + $0x8] sm:$0xff]
    %1728 = vrot.lane.b32.xlu0 %v1623, 118
    %v1729 = vpop.permute.xlu0 %1728
    %v1732 = vsel %vm346, %v1726, 0
    %v1735 = vsel %vm346, %v1727, 0
    %1737 = vmatpush.msra.mxu0 0.0
    %1738 = vmatpush.msra.mxu0 0.0
    %1739 = vmatpush.msra.mxu0 0.0
    %1740 = vmatpush.msra.mxu0 0.0
    %1741 = vmatpush.msra.mxu0 0.0
    %1742 = vmatpush.msra.mxu0 0.0
    %1743 = vmatpush.msra.mxu0 0.0
    %1744 = vmatpush.msra.mxu0 0.0
    %1745 = vmatpush.msra.mxu0 0.0
    %1746 = vmatpush.msra.mxu0 0.0
    %1747 = vmatpush.msra.mxu0 0.0
    %1748 = vmatpush.msra.mxu0 0.0
    %1749 = vmatpush.msra.mxu0 0.0
    %1750 = vmatpush.msra.mxu0 0.0
    %1751 = vmatpush.msra.mxu0 0.0
    %1752 = vmatpush.msra.mxu0 %v1729
    %1753 = vmatmul.f32.gmra.mxu0 %v1732
    %v1754 = vpop.f32.mrf.mxu0
    %v1755 = vadd.f32 0.0, %v1754
    %1756 = vmatmul.f32.gmra.mxu0 %v1735
    %v1757 = vpop.f32.mrf.mxu0
    %v1758 = vadd.f32 0.0, %v1757
    %1759 = vdwg.mxu0
    %v1760 = vadd.f32 %v1724, %v1755
    %v1761 = vadd.f32 %v1725, %v1758
    %v1762 = vld [vmem:[%s479] sm:$0xff]
    %v1763 = vld [vmem:[%s479 + $0x8] sm:$0xff]
    %1764 = vrot.lane.b32.xlu0 %v1623, 117
    %v1765 = vpop.permute.xlu0 %1764
    %v1768 = vsel %vm346, %v1762, 0
    %v1771 = vsel %vm346, %v1763, 0
    %1773 = vmatpush.msra.mxu0 0.0
    %1774 = vmatpush.msra.mxu0 0.0
    %1775 = vmatpush.msra.mxu0 0.0
    %1776 = vmatpush.msra.mxu0 0.0
    %1777 = vmatpush.msra.mxu0 0.0
    %1778 = vmatpush.msra.mxu0 0.0
    %1779 = vmatpush.msra.mxu0 0.0
    %1780 = vmatpush.msra.mxu0 0.0
    %1781 = vmatpush.msra.mxu0 0.0
    %1782 = vmatpush.msra.mxu0 0.0
    %1783 = vmatpush.msra.mxu0 0.0
    %1784 = vmatpush.msra.mxu0 0.0
    %1785 = vmatpush.msra.mxu0 0.0
    %1786 = vmatpush.msra.mxu0 0.0
    %1787 = vmatpush.msra.mxu0 0.0
    %1788 = vmatpush.msra.mxu0 %v1765
    %1789 = vmatmul.f32.gmra.mxu0 %v1768
    %v1790 = vpop.f32.mrf.mxu0
    %v1791 = vadd.f32 0.0, %v1790
    %1792 = vmatmul.f32.gmra.mxu0 %v1771
    %v1793 = vpop.f32.mrf.mxu0
    %v1794 = vadd.f32 0.0, %v1793
    %1795 = vdwg.mxu0
    %v1796 = vadd.f32 %v1760, %v1791
    %v1797 = vadd.f32 %v1761, %v1794
    %v1798 = vld [vmem:[%s516] sm:$0xff]
    %v1799 = vld [vmem:[%s516 + $0x8] sm:$0xff]
    %1800 = vrot.lane.b32.xlu0 %v1623, 116
    %v1801 = vpop.permute.xlu0 %1800
    %v1804 = vsel %vm346, %v1798, 0
    %v1807 = vsel %vm346, %v1799, 0
    %1809 = vmatpush.msra.mxu0 0.0
    %1810 = vmatpush.msra.mxu0 0.0
    %1811 = vmatpush.msra.mxu0 0.0
    %1812 = vmatpush.msra.mxu0 0.0
    %1813 = vmatpush.msra.mxu0 0.0
    %1814 = vmatpush.msra.mxu0 0.0
    %1815 = vmatpush.msra.mxu0 0.0
    %1816 = vmatpush.msra.mxu0 0.0
    %1817 = vmatpush.msra.mxu0 0.0
    %1818 = vmatpush.msra.mxu0 0.0
    %1819 = vmatpush.msra.mxu0 0.0
    %1820 = vmatpush.msra.mxu0 0.0
    %1821 = vmatpush.msra.mxu0 0.0
    %1822 = vmatpush.msra.mxu0 0.0
    %1823 = vmatpush.msra.mxu0 0.0
    %1824 = vmatpush.msra.mxu0 %v1801
    %1825 = vmatmul.f32.gmra.mxu0 %v1804
    %v1826 = vpop.f32.mrf.mxu0
    %v1827 = vadd.f32 0.0, %v1826
    %1828 = vmatmul.f32.gmra.mxu0 %v1807
    %v1829 = vpop.f32.mrf.mxu0
    %v1830 = vadd.f32 0.0, %v1829
    %1831 = vdwg.mxu0
    %v1832 = vadd.f32 %v1796, %v1827
    %v1833 = vadd.f32 %v1797, %v1830
    %v1834 = vld [vmem:[%s553] sm:$0xff]
    %v1835 = vld [vmem:[%s553 + $0x8] sm:$0xff]
    %1836 = vrot.lane.b32.xlu0 %v1623, 108
    %v1837 = vpop.permute.xlu0 %1836
    %v1840 = vsel %vm346, %v1834, 0
    %v1843 = vsel %vm346, %v1835, 0
    %1845 = vmatpush.msra.mxu0 0.0
    %1846 = vmatpush.msra.mxu0 0.0
    %1847 = vmatpush.msra.mxu0 0.0
    %1848 = vmatpush.msra.mxu0 0.0
    %1849 = vmatpush.msra.mxu0 0.0
    %1850 = vmatpush.msra.mxu0 0.0
    %1851 = vmatpush.msra.mxu0 0.0
    %1852 = vmatpush.msra.mxu0 0.0
    %1853 = vmatpush.msra.mxu0 0.0
    %1854 = vmatpush.msra.mxu0 0.0
    %1855 = vmatpush.msra.mxu0 0.0
    %1856 = vmatpush.msra.mxu0 0.0
    %1857 = vmatpush.msra.mxu0 0.0
    %1858 = vmatpush.msra.mxu0 0.0
    %1859 = vmatpush.msra.mxu0 0.0
    %1860 = vmatpush.msra.mxu0 %v1837
    %1861 = vmatmul.f32.gmra.mxu0 %v1840
    %v1862 = vpop.f32.mrf.mxu0
    %v1863 = vadd.f32 0.0, %v1862
    %1864 = vmatmul.f32.gmra.mxu0 %v1843
    %v1865 = vpop.f32.mrf.mxu0
    %v1866 = vadd.f32 0.0, %v1865
    %1867 = vdwg.mxu0
    %v1868 = vadd.f32 %v1832, %v1863
    %v1869 = vadd.f32 %v1833, %v1866
    %v1870 = vld [vmem:[%s590] sm:$0xff]
    %v1871 = vld [vmem:[%s590 + $0x8] sm:$0xff]
    %1872 = vrot.lane.b32.xlu0 %v1623, 107
    %v1873 = vpop.permute.xlu0 %1872
    %v1876 = vsel %vm346, %v1870, 0
    %v1879 = vsel %vm346, %v1871, 0
    %1881 = vmatpush.msra.mxu0 0.0
    %1882 = vmatpush.msra.mxu0 0.0
    %1883 = vmatpush.msra.mxu0 0.0
    %1884 = vmatpush.msra.mxu0 0.0
    %1885 = vmatpush.msra.mxu0 0.0
    %1886 = vmatpush.msra.mxu0 0.0
    %1887 = vmatpush.msra.mxu0 0.0
    %1888 = vmatpush.msra.mxu0 0.0
    %1889 = vmatpush.msra.mxu0 0.0
    %1890 = vmatpush.msra.mxu0 0.0
    %1891 = vmatpush.msra.mxu0 0.0
    %1892 = vmatpush.msra.mxu0 0.0
    %1893 = vmatpush.msra.mxu0 0.0
    %1894 = vmatpush.msra.mxu0 0.0
    %1895 = vmatpush.msra.mxu0 0.0
    %1896 = vmatpush.msra.mxu0 %v1873
    %1897 = vmatmul.f32.gmra.mxu0 %v1876
    %v1898 = vpop.f32.mrf.mxu0
    %v1899 = vadd.f32 0.0, %v1898
    %1900 = vmatmul.f32.gmra.mxu0 %v1879
    %v1901 = vpop.f32.mrf.mxu0
    %v1902 = vadd.f32 0.0, %v1901
    %1903 = vdwg.mxu0
    %v1904 = vadd.f32 %v1868, %v1899
    %v1905 = vadd.f32 %v1869, %v1902
    %v1906 = vld [vmem:[%s627] sm:$0xff]
    %v1907 = vld [vmem:[%s627 + $0x8] sm:$0xff]
    %1908 = vrot.lane.b32.xlu0 %v1623, 106
    %v1909 = vpop.permute.xlu0 %1908
    %v1912 = vsel %vm346, %v1906, 0
    %v1915 = vsel %vm346, %v1907, 0
    %1917 = vmatpush.msra.mxu0 0.0
    %1918 = vmatpush.msra.mxu0 0.0
    %1919 = vmatpush.msra.mxu0 0.0
    %1920 = vmatpush.msra.mxu0 0.0
    %1921 = vmatpush.msra.mxu0 0.0
    %1922 = vmatpush.msra.mxu0 0.0
    %1923 = vmatpush.msra.mxu0 0.0
    %1924 = vmatpush.msra.mxu0 0.0
    %1925 = vmatpush.msra.mxu0 0.0
    %1926 = vmatpush.msra.mxu0 0.0
    %1927 = vmatpush.msra.mxu0 0.0
    %1928 = vmatpush.msra.mxu0 0.0
    %1929 = vmatpush.msra.mxu0 0.0
    %1930 = vmatpush.msra.mxu0 0.0
    %1931 = vmatpush.msra.mxu0 0.0
    %1932 = vmatpush.msra.mxu0 %v1909
    %1933 = vmatmul.f32.gmra.mxu0 %v1912
    %v1934 = vpop.f32.mrf.mxu0
    %v1935 = vadd.f32 0.0, %v1934
    %1936 = vmatmul.f32.gmra.mxu0 %v1915
    %v1937 = vpop.f32.mrf.mxu0
    %v1938 = vadd.f32 0.0, %v1937
    %1939 = vdwg.mxu0
    %v1940 = vadd.f32 %v1904, %v1935
    %v1941 = vadd.f32 %v1905, %v1938
    %v1942 = vld [vmem:[%s4] sm:$0xff]
    %v1943 = vld [vmem:[%s4 + $0x8] sm:$0xff]
    %1945 = vset.pattern.permute.xlu0 0
    %1946 = vperm.xlu0 %1945, %v1942
    %v1947 = vpop.permute.xlu0 %1946
    %1950 = vset.pattern.permute.xlu0 0
    %1951 = vperm.xlu0 %1950, %v1943
    %v1952 = vpop.permute.xlu0 %1951
    %v1954 = vadd.f32 %v1940, %v1947
    %v1955 = vadd.f32 %v1941, %v1952
    %vm1956 = vcmp.gt.f32.partialorder %v1954, 0.0
    %vm1957 = vcmp.gt.f32.partialorder %v1955, 0.0
    %v1958 = vmul.f32 %v1954, 0.2
    %v1959 = vmul.f32 %v1955, 0.2
    %v1960 = vsel %vm1956, %v1954, %v1958
    %v1961 = vsel %vm1957, %v1955, %v1959
    %v1962 = vld [vmem:[%s6] sm:$0xff]
    %v1963 = vld [vmem:[%s6 + $0x8] sm:$0xff]
    %v1964 = vld [vmem:[%s6 + $0x10] sm:$0xff]
    %v1965 = vld [vmem:[%s6 + $0x18] sm:$0xff]
    %v1966 = vld [vmem:[%s6 + $0x20] sm:$0xff]
    %v1967 = vld [vmem:[%s6 + $0x28] sm:$0xff]
    %v1968 = vld [vmem:[%s6 + $0x30] sm:$0xff]
    %v1969 = vld [vmem:[%s6 + $0x38] sm:$0xff]
    %v1970 = vld [vmem:[%s6 + $0x40] sm:$0xff]
    %v1971 = vld [vmem:[%s6 + $0x48] sm:$0xff]
    %v1972 = vld [vmem:[%s6 + $0x50] sm:$0xff]
    %v1973 = vld [vmem:[%s6 + $0x58] sm:$0xff]
    %v1974 = vld [vmem:[%s6 + $0x60] sm:$0xf]
    %v1976 = vsel %vm697, %v1960, 0
    %v1979 = vsel %vm701, %v1974, 0
    %1981 = vmatpush.msra.mxu0 0.0
    %1982 = vmatpush.msra.mxu0 0.0
    %1983 = vmatpush.msra.mxu0 0.0
    %1984 = vmatpush.msra.mxu0 %v1979
    %1985 = vmatpush.msra.mxu0 %v1973
    %1986 = vmatpush.msra.mxu0 %v1972
    %1987 = vmatpush.msra.mxu0 %v1971
    %1988 = vmatpush.msra.mxu0 %v1970
    %1989 = vmatpush.msra.mxu0 %v1969
    %1990 = vmatpush.msra.mxu0 %v1968
    %1991 = vmatpush.msra.mxu0 %v1967
    %1992 = vmatpush.msra.mxu0 %v1966
    %1993 = vmatpush.msra.mxu0 %v1965
    %1994 = vmatpush.msra.mxu0 %v1964
    %1995 = vmatpush.msra.mxu0 %v1963
    %1996 = vmatpush.msra.mxu0 %v1962
    %1997 = vmatmul.f32.gmra.mxu0 %v1976
    %v1998 = vpop.f32.mrf.mxu0
    %v1999 = vadd.f32 0.0, %v1998
    %2000 = vdwg.mxu0
    %v2001 = vadd.f32 %v43, %v1999
    %v2002 = vld [vmem:[%s726] sm:$0xff]
    %v2003 = vld [vmem:[%s726 + $0x8] sm:$0xff]
    %v2004 = vld [vmem:[%s726 + $0x10] sm:$0xff]
    %v2005 = vld [vmem:[%s726 + $0x18] sm:$0xff]
    %v2006 = vld [vmem:[%s726 + $0x20] sm:$0xff]
    %v2007 = vld [vmem:[%s726 + $0x28] sm:$0xff]
    %v2008 = vld [vmem:[%s726 + $0x30] sm:$0xff]
    %v2009 = vld [vmem:[%s726 + $0x38] sm:$0xff]
    %v2010 = vld [vmem:[%s726 + $0x40] sm:$0xff]
    %v2011 = vld [vmem:[%s726 + $0x48] sm:$0xff]
    %v2012 = vld [vmem:[%s726 + $0x50] sm:$0xff]
    %v2013 = vld [vmem:[%s726 + $0x58] sm:$0xff]
    %v2014 = vld [vmem:[%s726 + $0x60] sm:$0xf]
    %v2015 = vrot.slane %v1960, 1
    %v2016 = vsel %vm697, %v2015, 0
    %v2019 = vsel %vm701, %v2014, 0
    %2021 = vmatpush.msra.mxu0 0.0
    %2022 = vmatpush.msra.mxu0 0.0
    %2023 = vmatpush.msra.mxu0 0.0
    %2024 = vmatpush.msra.mxu0 %v2019
    %2025 = vmatpush.msra.mxu0 %v2013
    %2026 = vmatpush.msra.mxu0 %v2012
    %2027 = vmatpush.msra.mxu0 %v2011
    %2028 = vmatpush.msra.mxu0 %v2010
    %2029 = vmatpush.msra.mxu0 %v2009
    %2030 = vmatpush.msra.mxu0 %v2008
    %2031 = vmatpush.msra.mxu0 %v2007
    %2032 = vmatpush.msra.mxu0 %v2006
    %2033 = vmatpush.msra.mxu0 %v2005
    %2034 = vmatpush.msra.mxu0 %v2004
    %2035 = vmatpush.msra.mxu0 %v2003
    %2036 = vmatpush.msra.mxu0 %v2002
    %2037 = vmatmul.f32.gmra.mxu0 %v2016
    %v2038 = vpop.f32.mrf.mxu0
    %v2039 = vadd.f32 0.0, %v2038
    %2040 = vdwg.mxu0
    %v2041 = vadd.f32 %v2001, %v2039
    %v2042 = vld [vmem:[%s767] sm:$0xff]
    %v2043 = vld [vmem:[%s767 + $0x8] sm:$0xff]
    %v2044 = vld [vmem:[%s767 + $0x10] sm:$0xff]
    %v2045 = vld [vmem:[%s767 + $0x18] sm:$0xff]
    %v2046 = vld [vmem:[%s767 + $0x20] sm:$0xff]
    %v2047 = vld [vmem:[%s767 + $0x28] sm:$0xff]
    %v2048 = vld [vmem:[%s767 + $0x30] sm:$0xff]
    %v2049 = vld [vmem:[%s767 + $0x38] sm:$0xff]
    %v2050 = vld [vmem:[%s767 + $0x40] sm:$0xff]
    %v2051 = vld [vmem:[%s767 + $0x48] sm:$0xff]
    %v2052 = vld [vmem:[%s767 + $0x50] sm:$0xff]
    %v2053 = vld [vmem:[%s767 + $0x58] sm:$0xff]
    %v2054 = vld [vmem:[%s767 + $0x60] sm:$0xf]
    %v2055 = vrot.slane %v1960, 2
    %v2056 = vsel %vm697, %v2055, 0
    %v2059 = vsel %vm701, %v2054, 0
    %2061 = vmatpush.msra.mxu0 0.0
    %2062 = vmatpush.msra.mxu0 0.0
    %2063 = vmatpush.msra.mxu0 0.0
    %2064 = vmatpush.msra.mxu0 %v2059
    %2065 = vmatpush.msra.mxu0 %v2053
    %2066 = vmatpush.msra.mxu0 %v2052
    %2067 = vmatpush.msra.mxu0 %v2051
    %2068 = vmatpush.msra.mxu0 %v2050
    %2069 = vmatpush.msra.mxu0 %v2049
    %2070 = vmatpush.msra.mxu0 %v2048
    %2071 = vmatpush.msra.mxu0 %v2047
    %2072 = vmatpush.msra.mxu0 %v2046
    %2073 = vmatpush.msra.mxu0 %v2045
    %2074 = vmatpush.msra.mxu0 %v2044
    %2075 = vmatpush.msra.mxu0 %v2043
    %2076 = vmatpush.msra.mxu0 %v2042
    %2077 = vmatmul.f32.gmra.mxu0 %v2056
    %v2078 = vpop.f32.mrf.mxu0
    %v2079 = vadd.f32 0.0, %v2078
    %2080 = vdwg.mxu0
    %v2081 = vadd.f32 %v2041, %v2079
    %v2082 = vld [vmem:[%s808] sm:$0xff]
    %v2083 = vld [vmem:[%s808 + $0x8] sm:$0xff]
    %v2084 = vld [vmem:[%s808 + $0x10] sm:$0xff]
    %v2085 = vld [vmem:[%s808 + $0x18] sm:$0xff]
    %v2086 = vld [vmem:[%s808 + $0x20] sm:$0xff]
    %v2087 = vld [vmem:[%s808 + $0x28] sm:$0xff]
    %v2088 = vld [vmem:[%s808 + $0x30] sm:$0xff]
    %v2089 = vld [vmem:[%s808 + $0x38] sm:$0xff]
    %v2090 = vld [vmem:[%s808 + $0x40] sm:$0xff]
    %v2091 = vld [vmem:[%s808 + $0x48] sm:$0xff]
    %v2092 = vld [vmem:[%s808 + $0x50] sm:$0xff]
    %v2093 = vld [vmem:[%s808 + $0x58] sm:$0xff]
    %v2094 = vld [vmem:[%s808 + $0x60] sm:$0xf]
    %v2095 = vrot.slane %v1960, 3
    %v2096 = vsel %vm697, %v2095, 0
    %v2099 = vsel %vm701, %v2094, 0
    %2101 = vmatpush.msra.mxu0 0.0
    %2102 = vmatpush.msra.mxu0 0.0
    %2103 = vmatpush.msra.mxu0 0.0
    %2104 = vmatpush.msra.mxu0 %v2099
    %2105 = vmatpush.msra.mxu0 %v2093
    %2106 = vmatpush.msra.mxu0 %v2092
    %2107 = vmatpush.msra.mxu0 %v2091
    %2108 = vmatpush.msra.mxu0 %v2090
    %2109 = vmatpush.msra.mxu0 %v2089
    %2110 = vmatpush.msra.mxu0 %v2088
    %2111 = vmatpush.msra.mxu0 %v2087
    %2112 = vmatpush.msra.mxu0 %v2086
    %2113 = vmatpush.msra.mxu0 %v2085
    %2114 = vmatpush.msra.mxu0 %v2084
    %2115 = vmatpush.msra.mxu0 %v2083
    %2116 = vmatpush.msra.mxu0 %v2082
    %2117 = vmatmul.f32.gmra.mxu0 %v2096
    %v2118 = vpop.f32.mrf.mxu0
    %v2119 = vadd.f32 0.0, %v2118
    %2120 = vdwg.mxu0
    %v2121 = vadd.f32 %v2081, %v2119
    %v2122 = vld [vmem:[%s849] sm:$0xff]
    %v2123 = vld [vmem:[%s849 + $0x8] sm:$0xff]
    %v2124 = vld [vmem:[%s849 + $0x10] sm:$0xff]
    %v2125 = vld [vmem:[%s849 + $0x18] sm:$0xff]
    %v2126 = vld [vmem:[%s849 + $0x20] sm:$0xff]
    %v2127 = vld [vmem:[%s849 + $0x28] sm:$0xff]
    %v2128 = vld [vmem:[%s849 + $0x30] sm:$0xff]
    %v2129 = vld [vmem:[%s849 + $0x38] sm:$0xff]
    %v2130 = vld [vmem:[%s849 + $0x40] sm:$0xff]
    %v2131 = vld [vmem:[%s849 + $0x48] sm:$0xff]
    %v2132 = vld [vmem:[%s849 + $0x50] sm:$0xff]
    %v2133 = vld [vmem:[%s849 + $0x58] sm:$0xff]
    %v2134 = vld [vmem:[%s849 + $0x60] sm:$0xf]
    %v2135 = vrot.slane %v1960, 4
    %v2136 = vsel %vm697, %v2135, 0
    %v2139 = vsel %vm701, %v2134, 0
    %2141 = vmatpush.msra.mxu0 0.0
    %2142 = vmatpush.msra.mxu0 0.0
    %2143 = vmatpush.msra.mxu0 0.0
    %2144 = vmatpush.msra.mxu0 %v2139
    %2145 = vmatpush.msra.mxu0 %v2133
    %2146 = vmatpush.msra.mxu0 %v2132
    %2147 = vmatpush.msra.mxu0 %v2131
    %2148 = vmatpush.msra.mxu0 %v2130
    %2149 = vmatpush.msra.mxu0 %v2129
    %2150 = vmatpush.msra.mxu0 %v2128
    %2151 = vmatpush.msra.mxu0 %v2127
    %2152 = vmatpush.msra.mxu0 %v2126
    %2153 = vmatpush.msra.mxu0 %v2125
    %2154 = vmatpush.msra.mxu0 %v2124
    %2155 = vmatpush.msra.mxu0 %v2123
    %2156 = vmatpush.msra.mxu0 %v2122
    %2157 = vmatmul.f32.gmra.mxu0 %v2136
    %v2158 = vpop.f32.mrf.mxu0
    %v2159 = vadd.f32 0.0, %v2158
    %2160 = vdwg.mxu0
    %v2161 = vadd.f32 %v2121, %v2159
    %v2162 = vld [vmem:[%s890] sm:$0xff]
    %v2163 = vld [vmem:[%s890 + $0x8] sm:$0xff]
    %v2164 = vld [vmem:[%s890 + $0x10] sm:$0xff]
    %v2165 = vld [vmem:[%s890 + $0x18] sm:$0xff]
    %v2166 = vld [vmem:[%s890 + $0x20] sm:$0xff]
    %v2167 = vld [vmem:[%s890 + $0x28] sm:$0xff]
    %v2168 = vld [vmem:[%s890 + $0x30] sm:$0xff]
    %v2169 = vld [vmem:[%s890 + $0x38] sm:$0xff]
    %v2170 = vld [vmem:[%s890 + $0x40] sm:$0xff]
    %v2171 = vld [vmem:[%s890 + $0x48] sm:$0xff]
    %v2172 = vld [vmem:[%s890 + $0x50] sm:$0xff]
    %v2173 = vld [vmem:[%s890 + $0x58] sm:$0xff]
    %v2174 = vld [vmem:[%s890 + $0x60] sm:$0xf]
    %v2175 = vrot.slane %v1960, 5
    %v2176 = vsel %vm697, %v2175, 0
    %v2179 = vsel %vm701, %v2174, 0
    %2181 = vmatpush.msra.mxu0 0.0
    %2182 = vmatpush.msra.mxu0 0.0
    %2183 = vmatpush.msra.mxu0 0.0
    %2184 = vmatpush.msra.mxu0 %v2179
    %2185 = vmatpush.msra.mxu0 %v2173
    %2186 = vmatpush.msra.mxu0 %v2172
    %2187 = vmatpush.msra.mxu0 %v2171
    %2188 = vmatpush.msra.mxu0 %v2170
    %2189 = vmatpush.msra.mxu0 %v2169
    %2190 = vmatpush.msra.mxu0 %v2168
    %2191 = vmatpush.msra.mxu0 %v2167
    %2192 = vmatpush.msra.mxu0 %v2166
    %2193 = vmatpush.msra.mxu0 %v2165
    %2194 = vmatpush.msra.mxu0 %v2164
    %2195 = vmatpush.msra.mxu0 %v2163
    %2196 = vmatpush.msra.mxu0 %v2162
    %2197 = vmatmul.f32.gmra.mxu0 %v2176
    %v2198 = vpop.f32.mrf.mxu0
    %v2199 = vadd.f32 0.0, %v2198
    %2200 = vdwg.mxu0
    %v2201 = vadd.f32 %v2161, %v2199
    %v2202 = vld [vmem:[%s931] sm:$0xff]
    %v2203 = vld [vmem:[%s931 + $0x8] sm:$0xff]
    %v2204 = vld [vmem:[%s931 + $0x10] sm:$0xff]
    %v2205 = vld [vmem:[%s931 + $0x18] sm:$0xff]
    %v2206 = vld [vmem:[%s931 + $0x20] sm:$0xff]
    %v2207 = vld [vmem:[%s931 + $0x28] sm:$0xff]
    %v2208 = vld [vmem:[%s931 + $0x30] sm:$0xff]
    %v2209 = vld [vmem:[%s931 + $0x38] sm:$0xff]
    %v2210 = vld [vmem:[%s931 + $0x40] sm:$0xff]
    %v2211 = vld [vmem:[%s931 + $0x48] sm:$0xff]
    %v2212 = vld [vmem:[%s931 + $0x50] sm:$0xff]
    %v2213 = vld [vmem:[%s931 + $0x58] sm:$0xff]
    %v2214 = vld [vmem:[%s931 + $0x60] sm:$0xf]
    %v2215 = vrot.slane %v1960, 6
    %v2216 = vsel %vm697, %v2215, 0
    %v2219 = vsel %vm701, %v2214, 0
    %2221 = vmatpush.msra.mxu0 0.0
    %2222 = vmatpush.msra.mxu0 0.0
    %2223 = vmatpush.msra.mxu0 0.0
    %2224 = vmatpush.msra.mxu0 %v2219
    %2225 = vmatpush.msra.mxu0 %v2213
    %2226 = vmatpush.msra.mxu0 %v2212
    %2227 = vmatpush.msra.mxu0 %v2211
    %2228 = vmatpush.msra.mxu0 %v2210
    %2229 = vmatpush.msra.mxu0 %v2209
    %2230 = vmatpush.msra.mxu0 %v2208
    %2231 = vmatpush.msra.mxu0 %v2207
    %2232 = vmatpush.msra.mxu0 %v2206
    %2233 = vmatpush.msra.mxu0 %v2205
    %2234 = vmatpush.msra.mxu0 %v2204
    %2235 = vmatpush.msra.mxu0 %v2203
    %2236 = vmatpush.msra.mxu0 %v2202
    %2237 = vmatmul.f32.gmra.mxu0 %v2216
    %v2238 = vpop.f32.mrf.mxu0
    %v2239 = vadd.f32 0.0, %v2238
    %2240 = vdwg.mxu0
    %v2241 = vadd.f32 %v2201, %v2239
    %v2242 = vld [vmem:[%s972] sm:$0xff]
    %v2243 = vld [vmem:[%s972 + $0x8] sm:$0xff]
    %v2244 = vld [vmem:[%s972 + $0x10] sm:$0xff]
    %v2245 = vld [vmem:[%s972 + $0x18] sm:$0xff]
    %v2246 = vld [vmem:[%s972 + $0x20] sm:$0xff]
    %v2247 = vld [vmem:[%s972 + $0x28] sm:$0xff]
    %v2248 = vld [vmem:[%s972 + $0x30] sm:$0xff]
    %v2249 = vld [vmem:[%s972 + $0x38] sm:$0xff]
    %v2250 = vld [vmem:[%s972 + $0x40] sm:$0xff]
    %v2251 = vld [vmem:[%s972 + $0x48] sm:$0xff]
    %v2252 = vld [vmem:[%s972 + $0x50] sm:$0xff]
    %v2253 = vld [vmem:[%s972 + $0x58] sm:$0xff]
    %v2254 = vld [vmem:[%s972 + $0x60] sm:$0xf]
    %v2255 = vrot.slane %v1960, 7
    %v2256 = vsel %vm697, %v2255, 0
    %v2259 = vsel %vm701, %v2254, 0
    %2261 = vmatpush.msra.mxu0 0.0
    %2262 = vmatpush.msra.mxu0 0.0
    %2263 = vmatpush.msra.mxu0 0.0
    %2264 = vmatpush.msra.mxu0 %v2259
    %2265 = vmatpush.msra.mxu0 %v2253
    %2266 = vmatpush.msra.mxu0 %v2252
    %2267 = vmatpush.msra.mxu0 %v2251
    %2268 = vmatpush.msra.mxu0 %v2250
    %2269 = vmatpush.msra.mxu0 %v2249
    %2270 = vmatpush.msra.mxu0 %v2248
    %2271 = vmatpush.msra.mxu0 %v2247
    %2272 = vmatpush.msra.mxu0 %v2246
    %2273 = vmatpush.msra.mxu0 %v2245
    %2274 = vmatpush.msra.mxu0 %v2244
    %2275 = vmatpush.msra.mxu0 %v2243
    %2276 = vmatpush.msra.mxu0 %v2242
    %2277 = vmatmul.f32.gmra.mxu0 %v2256
    %v2278 = vpop.f32.mrf.mxu0
    %v2279 = vadd.f32 0.0, %v2278
    %2280 = vdwg.mxu0
    %v2281 = vadd.f32 %v2241, %v2279
    %v2282 = vld [vmem:[%s1013] sm:$0xff]
    %v2283 = vld [vmem:[%s1013 + $0x8] sm:$0xff]
    %v2284 = vld [vmem:[%s1013 + $0x10] sm:$0xff]
    %v2285 = vld [vmem:[%s1013 + $0x18] sm:$0xff]
    %v2286 = vld [vmem:[%s1013 + $0x20] sm:$0xff]
    %v2287 = vld [vmem:[%s1013 + $0x28] sm:$0xff]
    %v2288 = vld [vmem:[%s1013 + $0x30] sm:$0xff]
    %v2289 = vld [vmem:[%s1013 + $0x38] sm:$0xff]
    %v2290 = vld [vmem:[%s1013 + $0x40] sm:$0xff]
    %v2291 = vld [vmem:[%s1013 + $0x48] sm:$0xff]
    %v2292 = vld [vmem:[%s1013 + $0x50] sm:$0xff]
    %v2293 = vld [vmem:[%s1013 + $0x58] sm:$0xff]
    %v2294 = vld [vmem:[%s1013 + $0x60] sm:$0xf]
    %v2296 = vsel %vm697, %v1961, 0
    %v2299 = vsel %vm701, %v2294, 0
    %2301 = vmatpush.msra.mxu0 0.0
    %2302 = vmatpush.msra.mxu0 0.0
    %2303 = vmatpush.msra.mxu0 0.0
    %2304 = vmatpush.msra.mxu0 %v2299
    %2305 = vmatpush.msra.mxu0 %v2293
    %2306 = vmatpush.msra.mxu0 %v2292
    %2307 = vmatpush.msra.mxu0 %v2291
    %2308 = vmatpush.msra.mxu0 %v2290
    %2309 = vmatpush.msra.mxu0 %v2289
    %2310 = vmatpush.msra.mxu0 %v2288
    %2311 = vmatpush.msra.mxu0 %v2287
    %2312 = vmatpush.msra.mxu0 %v2286
    %2313 = vmatpush.msra.mxu0 %v2285
    %2314 = vmatpush.msra.mxu0 %v2284
    %2315 = vmatpush.msra.mxu0 %v2283
    %2316 = vmatpush.msra.mxu0 %v2282
    %2317 = vmatmul.f32.gmra.mxu0 %v2296
    %v2318 = vpop.f32.mrf.mxu0
    %v2319 = vadd.f32 0.0, %v2318
    %2320 = vdwg.mxu0
    %v2321 = vadd.f32 %v2281, %v2319
    %v2322 = vld [vmem:[%s1054] sm:$0xff]
    %v2323 = vld [vmem:[%s1054 + $0x8] sm:$0xff]
    %v2324 = vld [vmem:[%s1054 + $0x10] sm:$0xff]
    %v2325 = vld [vmem:[%s1054 + $0x18] sm:$0xff]
    %v2326 = vld [vmem:[%s1054 + $0x20] sm:$0xff]
    %v2327 = vld [vmem:[%s1054 + $0x28] sm:$0xff]
    %v2328 = vld [vmem:[%s1054 + $0x30] sm:$0xff]
    %v2329 = vld [vmem:[%s1054 + $0x38] sm:$0xff]
    %v2330 = vld [vmem:[%s1054 + $0x40] sm:$0xff]
    %v2331 = vld [vmem:[%s1054 + $0x48] sm:$0xff]
    %v2332 = vld [vmem:[%s1054 + $0x50] sm:$0xff]
    %v2333 = vld [vmem:[%s1054 + $0x58] sm:$0xff]
    %v2334 = vld [vmem:[%s1054 + $0x60] sm:$0xf]
    %v2335 = vrot.slane %v1961, 1
    %v2336 = vsel %vm697, %v2335, 0
    %v2339 = vsel %vm701, %v2334, 0
    %2341 = vmatpush.msra.mxu0 0.0
    %2342 = vmatpush.msra.mxu0 0.0
    %2343 = vmatpush.msra.mxu0 0.0
    %2344 = vmatpush.msra.mxu0 %v2339
    %2345 = vmatpush.msra.mxu0 %v2333
    %2346 = vmatpush.msra.mxu0 %v2332
    %2347 = vmatpush.msra.mxu0 %v2331
    %2348 = vmatpush.msra.mxu0 %v2330
    %2349 = vmatpush.msra.mxu0 %v2329
    %2350 = vmatpush.msra.mxu0 %v2328
    %2351 = vmatpush.msra.mxu0 %v2327
    %2352 = vmatpush.msra.mxu0 %v2326
    %2353 = vmatpush.msra.mxu0 %v2325
    %2354 = vmatpush.msra.mxu0 %v2324
    %2355 = vmatpush.msra.mxu0 %v2323
    %2356 = vmatpush.msra.mxu0 %v2322
    %2357 = vmatmul.f32.gmra.mxu0 %v2336
    %v2358 = vpop.f32.mrf.mxu0
    %v2359 = vadd.f32 0.0, %v2358
    %2360 = vdwg.mxu0
    %v2361 = vadd.f32 %v2321, %v2359
    %v2362 = vld [vmem:[%s1095] sm:$0xff]
    %v2363 = vld [vmem:[%s1095 + $0x8] sm:$0xff]
    %v2364 = vld [vmem:[%s1095 + $0x10] sm:$0xff]
    %v2365 = vld [vmem:[%s1095 + $0x18] sm:$0xff]
    %v2366 = vld [vmem:[%s1095 + $0x20] sm:$0xff]
    %v2367 = vld [vmem:[%s1095 + $0x28] sm:$0xff]
    %v2368 = vld [vmem:[%s1095 + $0x30] sm:$0xff]
    %v2369 = vld [vmem:[%s1095 + $0x38] sm:$0xff]
    %v2370 = vld [vmem:[%s1095 + $0x40] sm:$0xff]
    %v2371 = vld [vmem:[%s1095 + $0x48] sm:$0xff]
    %v2372 = vld [vmem:[%s1095 + $0x50] sm:$0xff]
    %v2373 = vld [vmem:[%s1095 + $0x58] sm:$0xff]
    %v2374 = vld [vmem:[%s1095 + $0x60] sm:$0xf]
    %v2375 = vrot.slane %v1961, 2
    %v2376 = vsel %vm697, %v2375, 0
    %v2379 = vsel %vm701, %v2374, 0
    %2381 = vmatpush.msra.mxu0 0.0
    %2382 = vmatpush.msra.mxu0 0.0
    %2383 = vmatpush.msra.mxu0 0.0
    %2384 = vmatpush.msra.mxu0 %v2379
    %2385 = vmatpush.msra.mxu0 %v2373
    %2386 = vmatpush.msra.mxu0 %v2372
    %2387 = vmatpush.msra.mxu0 %v2371
    %2388 = vmatpush.msra.mxu0 %v2370
    %2389 = vmatpush.msra.mxu0 %v2369
    %2390 = vmatpush.msra.mxu0 %v2368
    %2391 = vmatpush.msra.mxu0 %v2367
    %2392 = vmatpush.msra.mxu0 %v2366
    %2393 = vmatpush.msra.mxu0 %v2365
    %2394 = vmatpush.msra.mxu0 %v2364
    %2395 = vmatpush.msra.mxu0 %v2363
    %2396 = vmatpush.msra.mxu0 %v2362
    %2397 = vmatmul.f32.gmra.mxu0 %v2376
    %v2398 = vpop.f32.mrf.mxu0
    %v2399 = vadd.f32 0.0, %v2398
    %2400 = vdwg.mxu0
    %v2401 = vadd.f32 %v2361, %v2399
    %v2402 = vld [vmem:[%s1136] sm:$0xff]
    %v2403 = vld [vmem:[%s1136 + $0x8] sm:$0xff]
    %v2404 = vld [vmem:[%s1136 + $0x10] sm:$0xff]
    %v2405 = vld [vmem:[%s1136 + $0x18] sm:$0xff]
    %v2406 = vld [vmem:[%s1136 + $0x20] sm:$0xff]
    %v2407 = vld [vmem:[%s1136 + $0x28] sm:$0xff]
    %v2408 = vld [vmem:[%s1136 + $0x30] sm:$0xff]
    %v2409 = vld [vmem:[%s1136 + $0x38] sm:$0xff]
    %v2410 = vld [vmem:[%s1136 + $0x40] sm:$0xff]
    %v2411 = vld [vmem:[%s1136 + $0x48] sm:$0xff]
    %v2412 = vld [vmem:[%s1136 + $0x50] sm:$0xff]
    %v2413 = vld [vmem:[%s1136 + $0x58] sm:$0xff]
    %v2414 = vld [vmem:[%s1136 + $0x60] sm:$0xf]
    %v2415 = vrot.slane %v1961, 3
    %v2416 = vsel %vm697, %v2415, 0
    %v2419 = vsel %vm701, %v2414, 0
    %2421 = vmatpush.msra.mxu0 0.0
    %2422 = vmatpush.msra.mxu0 0.0
    %2423 = vmatpush.msra.mxu0 0.0
    %2424 = vmatpush.msra.mxu0 %v2419
    %2425 = vmatpush.msra.mxu0 %v2413
    %2426 = vmatpush.msra.mxu0 %v2412
    %2427 = vmatpush.msra.mxu0 %v2411
    %2428 = vmatpush.msra.mxu0 %v2410
    %2429 = vmatpush.msra.mxu0 %v2409
    %2430 = vmatpush.msra.mxu0 %v2408
    %2431 = vmatpush.msra.mxu0 %v2407
    %2432 = vmatpush.msra.mxu0 %v2406
    %2433 = vmatpush.msra.mxu0 %v2405
    %2434 = vmatpush.msra.mxu0 %v2404
    %2435 = vmatpush.msra.mxu0 %v2403
    %2436 = vmatpush.msra.mxu0 %v2402
    %2437 = vmatmul.f32.gmra.mxu0 %v2416
    %v2438 = vpop.f32.mrf.mxu0
    %v2439 = vadd.f32 0.0, %v2438
    %2440 = vdwg.mxu0
    %v2441 = vadd.f32 %v2401, %v2439
    %v2442 = vld [vmem:[%s1177] sm:$0xff]
    %v2443 = vld [vmem:[%s1177 + $0x8] sm:$0xff]
    %v2444 = vld [vmem:[%s1177 + $0x10] sm:$0xff]
    %v2445 = vld [vmem:[%s1177 + $0x18] sm:$0xff]
    %v2446 = vld [vmem:[%s1177 + $0x20] sm:$0xff]
    %v2447 = vld [vmem:[%s1177 + $0x28] sm:$0xff]
    %v2448 = vld [vmem:[%s1177 + $0x30] sm:$0xff]
    %v2449 = vld [vmem:[%s1177 + $0x38] sm:$0xff]
    %v2450 = vld [vmem:[%s1177 + $0x40] sm:$0xff]
    %v2451 = vld [vmem:[%s1177 + $0x48] sm:$0xff]
    %v2452 = vld [vmem:[%s1177 + $0x50] sm:$0xff]
    %v2453 = vld [vmem:[%s1177 + $0x58] sm:$0xff]
    %v2454 = vld [vmem:[%s1177 + $0x60] sm:$0xf]
    %v2455 = vrot.slane %v1961, 4
    %v2456 = vsel %vm697, %v2455, 0
    %v2459 = vsel %vm701, %v2454, 0
    %2461 = vmatpush.msra.mxu0 0.0
    %2462 = vmatpush.msra.mxu0 0.0
    %2463 = vmatpush.msra.mxu0 0.0
    %2464 = vmatpush.msra.mxu0 %v2459
    %2465 = vmatpush.msra.mxu0 %v2453
    %2466 = vmatpush.msra.mxu0 %v2452
    %2467 = vmatpush.msra.mxu0 %v2451
    %2468 = vmatpush.msra.mxu0 %v2450
    %2469 = vmatpush.msra.mxu0 %v2449
    %2470 = vmatpush.msra.mxu0 %v2448
    %2471 = vmatpush.msra.mxu0 %v2447
    %2472 = vmatpush.msra.mxu0 %v2446
    %2473 = vmatpush.msra.mxu0 %v2445
    %2474 = vmatpush.msra.mxu0 %v2444
    %2475 = vmatpush.msra.mxu0 %v2443
    %2476 = vmatpush.msra.mxu0 %v2442
    %2477 = vmatmul.f32.gmra.mxu0 %v2456
    %v2478 = vpop.f32.mrf.mxu0
    %v2479 = vadd.f32 0.0, %v2478
    %2480 = vdwg.mxu0
    %v2481 = vadd.f32 %v2441, %v2479
    %v2482 = vld [vmem:[%s1218] sm:$0xff]
    %v2483 = vld [vmem:[%s1218 + $0x8] sm:$0xff]
    %v2484 = vld [vmem:[%s1218 + $0x10] sm:$0xff]
    %v2485 = vld [vmem:[%s1218 + $0x18] sm:$0xff]
    %v2486 = vld [vmem:[%s1218 + $0x20] sm:$0xff]
    %v2487 = vld [vmem:[%s1218 + $0x28] sm:$0xff]
    %v2488 = vld [vmem:[%s1218 + $0x30] sm:$0xff]
    %v2489 = vld [vmem:[%s1218 + $0x38] sm:$0xff]
    %v2490 = vld [vmem:[%s1218 + $0x40] sm:$0xff]
    %v2491 = vld [vmem:[%s1218 + $0x48] sm:$0xff]
    %v2492 = vld [vmem:[%s1218 + $0x50] sm:$0xff]
    %v2493 = vld [vmem:[%s1218 + $0x58] sm:$0xff]
    %v2494 = vld [vmem:[%s1218 + $0x60] sm:$0xf]
    %v2495 = vrot.slane %v1961, 5
    %v2496 = vsel %vm697, %v2495, 0
    %v2499 = vsel %vm701, %v2494, 0
    %2501 = vmatpush.msra.mxu0 0.0
    %2502 = vmatpush.msra.mxu0 0.0
    %2503 = vmatpush.msra.mxu0 0.0
    %2504 = vmatpush.msra.mxu0 %v2499
    %2505 = vmatpush.msra.mxu0 %v2493
    %2506 = vmatpush.msra.mxu0 %v2492
    %2507 = vmatpush.msra.mxu0 %v2491
    %2508 = vmatpush.msra.mxu0 %v2490
    %2509 = vmatpush.msra.mxu0 %v2489
    %2510 = vmatpush.msra.mxu0 %v2488
    %2511 = vmatpush.msra.mxu0 %v2487
    %2512 = vmatpush.msra.mxu0 %v2486
    %2513 = vmatpush.msra.mxu0 %v2485
    %2514 = vmatpush.msra.mxu0 %v2484
    %2515 = vmatpush.msra.mxu0 %v2483
    %2516 = vmatpush.msra.mxu0 %v2482
    %2517 = vmatmul.f32.gmra.mxu0 %v2496
    %v2518 = vpop.f32.mrf.mxu0
    %v2519 = vadd.f32 0.0, %v2518
    %2520 = vdwg.mxu0
    %v2521 = vadd.f32 %v2481, %v2519
    %v2522 = vld [vmem:[%s1259] sm:$0xff]
    %v2523 = vld [vmem:[%s1259 + $0x8] sm:$0xff]
    %v2524 = vld [vmem:[%s1259 + $0x10] sm:$0xff]
    %v2525 = vld [vmem:[%s1259 + $0x18] sm:$0xff]
    %v2526 = vld [vmem:[%s1259 + $0x20] sm:$0xff]
    %v2527 = vld [vmem:[%s1259 + $0x28] sm:$0xff]
    %v2528 = vld [vmem:[%s1259 + $0x30] sm:$0xff]
    %v2529 = vld [vmem:[%s1259 + $0x38] sm:$0xff]
    %v2530 = vld [vmem:[%s1259 + $0x40] sm:$0xff]
    %v2531 = vld [vmem:[%s1259 + $0x48] sm:$0xff]
    %v2532 = vld [vmem:[%s1259 + $0x50] sm:$0xff]
    %v2533 = vld [vmem:[%s1259 + $0x58] sm:$0xff]
    %v2534 = vld [vmem:[%s1259 + $0x60] sm:$0xf]
    %v2535 = vrot.slane %v1961, 6
    %v2536 = vsel %vm697, %v2535, 0
    %v2539 = vsel %vm701, %v2534, 0
    %2541 = vmatpush.msra.mxu0 0.0
    %2542 = vmatpush.msra.mxu0 0.0
    %2543 = vmatpush.msra.mxu0 0.0
    %2544 = vmatpush.msra.mxu0 %v2539
    %2545 = vmatpush.msra.mxu0 %v2533
    %2546 = vmatpush.msra.mxu0 %v2532
    %2547 = vmatpush.msra.mxu0 %v2531
    %2548 = vmatpush.msra.mxu0 %v2530
    %2549 = vmatpush.msra.mxu0 %v2529
    %2550 = vmatpush.msra.mxu0 %v2528
    %2551 = vmatpush.msra.mxu0 %v2527
    %2552 = vmatpush.msra.mxu0 %v2526
    %2553 = vmatpush.msra.mxu0 %v2525
    %2554 = vmatpush.msra.mxu0 %v2524
    %2555 = vmatpush.msra.mxu0 %v2523
    %2556 = vmatpush.msra.mxu0 %v2522
    %2557 = vmatmul.f32.gmra.mxu0 %v2536
    %v2558 = vpop.f32.mrf.mxu0
    %v2559 = vadd.f32 0.0, %v2558
    %2560 = vdwg.mxu0
    %v2561 = vadd.f32 %v2521, %v2559
    %v2562 = vld [vmem:[%s1300] sm:$0xff]
    %v2563 = vld [vmem:[%s1300 + $0x8] sm:$0xff]
    %v2564 = vld [vmem:[%s1300 + $0x10] sm:$0xff]
    %v2565 = vld [vmem:[%s1300 + $0x18] sm:$0xff]
    %v2566 = vld [vmem:[%s1300 + $0x20] sm:$0xff]
    %v2567 = vld [vmem:[%s1300 + $0x28] sm:$0xff]
    %v2568 = vld [vmem:[%s1300 + $0x30] sm:$0xff]
    %v2569 = vld [vmem:[%s1300 + $0x38] sm:$0xff]
    %v2570 = vld [vmem:[%s1300 + $0x40] sm:$0xff]
    %v2571 = vld [vmem:[%s1300 + $0x48] sm:$0xff]
    %v2572 = vld [vmem:[%s1300 + $0x50] sm:$0xff]
    %v2573 = vld [vmem:[%s1300 + $0x58] sm:$0xff]
    %v2574 = vld [vmem:[%s1300 + $0x60] sm:$0xf]
    %v2575 = vrot.slane %v1961, 7
    %v2576 = vsel %vm697, %v2575, 0
    %v2579 = vsel %vm701, %v2574, 0
    %2581 = vmatpush.msra.mxu0 0.0
    %2582 = vmatpush.msra.mxu0 0.0
    %2583 = vmatpush.msra.mxu0 0.0
    %2584 = vmatpush.msra.mxu0 %v2579
    %2585 = vmatpush.msra.mxu0 %v2573
    %2586 = vmatpush.msra.mxu0 %v2572
    %2587 = vmatpush.msra.mxu0 %v2571
    %2588 = vmatpush.msra.mxu0 %v2570
    %2589 = vmatpush.msra.mxu0 %v2569
    %2590 = vmatpush.msra.mxu0 %v2568
    %2591 = vmatpush.msra.mxu0 %v2567
    %2592 = vmatpush.msra.mxu0 %v2566
    %2593 = vmatpush.msra.mxu0 %v2565
    %2594 = vmatpush.msra.mxu0 %v2564
    %2595 = vmatpush.msra.mxu0 %v2563
    %2596 = vmatpush.msra.mxu0 %v2562
    %2597 = vmatmul.f32.gmra.mxu0 %v2576
    %v2598 = vpop.f32.mrf.mxu0
    %v2599 = vadd.f32 0.0, %v2598
    %2600 = vdwg.mxu0
    %v2601 = vadd.f32 %v2561, %v2599
    %vm2602 = vcmp.gt.f32.partialorder %v2601, 0.0
    %v2603 = vmul.f32 %v2601, 0.2
    %v2604 = vsel %vm2602, %v2601, %v2603
    %2605 = vst.msk [vmem:[#allocation3 + $0x1] sm:$0x1] %vm1344, %v2604
    %v2606 = vld [vmem:[#allocation3] sm:$0x3]
    %v2607 = vld [vmem:[%s8] sm:$0xff]
    %v2608 = vld [vmem:[%s8 + $0x8] sm:$0xff]
    %v2609 = vld [vmem:[%s8 + $0x10] sm:$0xff]
    %v2610 = vld [vmem:[%s8 + $0x18] sm:$0xff]
    %v2611 = vld [vmem:[%s9] sm:$0x1]
    %v2613 = vperm.slane %v2611, 0
    %vm2615 = vcmask 261120
    %v2617 = vsel %vm2615, %v2606, 0
    %2619 = vmatpush.msra.mxu0 0.0
    %2620 = vmatpush.msra.mxu0 0.0
    %2621 = vmatpush.msra.mxu0 0.0
    %2622 = vmatpush.msra.mxu0 0.0
    %2623 = vmatpush.msra.mxu0 0.0
    %2624 = vmatpush.msra.mxu0 0.0
    %2625 = vmatpush.msra.mxu0 0.0
    %2626 = vmatpush.msra.mxu0 0.0
    %2627 = vmatpush.msra.mxu0 0.0
    %2628 = vmatpush.msra.mxu0 0.0
    %2629 = vmatpush.msra.mxu0 0.0
    %2630 = vmatpush.msra.mxu0 0.0
    %2631 = vmatpush.msra.mxu0 %v2610
    %2632 = vmatpush.msra.mxu0 %v2609
    %2633 = vmatpush.msra.mxu0 %v2608
    %2634 = vmatpush.msra.mxu0 %v2607
    %2635 = vmatmul.f32.gmra.mxu0 %v2617
    %v2636 = vpop.f32.mrf.mxu0
    %v2637 = vadd.f32 %v2613, %v2636
    %2638 = vdwg.mxu0
    %vm2639 = vcmp.gt.f32.partialorder %v2637, 0.0
    %v2640 = vmul.f32 %v2637, 0.2
    %v2641 = vsel %vm2639, %v2637, %v2640
    %v2642 = vld [vmem:[%s10] sm:$0xff]
    %v2643 = vld [vmem:[%s10 + $0x8] sm:$0xff]
    %v2644 = vld [vmem:[%s10 + $0x10] sm:$0xff]
    %v2645 = vld [vmem:[%s10 + $0x18] sm:$0xff]
    %v2646 = vld [vmem:[%s11] sm:$0x1]
    %v2648 = vperm.slane %v2646, 0
    %v2651 = vsel %vm2615, %v2641, 0
    %2653 = vmatpush.msra.mxu0 0.0
    %2654 = vmatpush.msra.mxu0 0.0
    %2655 = vmatpush.msra.mxu0 0.0
    %2656 = vmatpush.msra.mxu0 0.0
    %2657 = vmatpush.msra.mxu0 0.0
    %2658 = vmatpush.msra.mxu0 0.0
    %2659 = vmatpush.msra.mxu0 0.0
    %2660 = vmatpush.msra.mxu0 0.0
    %2661 = vmatpush.msra.mxu0 0.0
    %2662 = vmatpush.msra.mxu0 0.0
    %2663 = vmatpush.msra.mxu0 0.0
    %2664 = vmatpush.msra.mxu0 0.0
    %2665 = vmatpush.msra.mxu0 %v2645
    %2666 = vmatpush.msra.mxu0 %v2644
    %2667 = vmatpush.msra.mxu0 %v2643
    %2668 = vmatpush.msra.mxu0 %v2642
    %2669 = vmatmul.f32.gmra.mxu0 %v2651
    %v2670 = vpop.f32.mrf.mxu0
    %v2671 = vadd.f32 %v2648, %v2670
    %2672 = vdwg.mxu0
    %vm2673 = vcmask 74752
    %2674 = vst.msk [vmem:[#allocation4] sm:$0x3] %vm2673, %v2671
    // Predicated region
    $region50: #{dqn_forward.1} parent=1 // pred_check
      _
    $region51: #{dqn_forward.1} parent=1 // pred_check_branch
      %2676 = sbr.rel (0) target = $region53
    $region52: #{dqn_forward.1} parent=1 // pred_region
      %2678 = vsyncadd [#allocation5], 0
      %s2680 = sshll.u32 [#allocation4], 4
      %s2681 = int_to_ptr.vmem [resolvable:$true] %s2680
      %s2682 = sshll.u32 %s12, 4
      %s2683 = int_to_ptr.hbm [resolvable:$true] %s2682
      %2685 = dma.vmem_to_hbm [thread:$0]  %s2681, 32, %s2683, [#allocation5]
    $region53: #{dqn_forward.1} parent=1 // pred_fallthru
      _
    // Predicated region
    $region54: #{dqn_forward.1} parent=1 // pred_check
      _
    $region55: #{dqn_forward.1} parent=1 // pred_check_branch
      %2687 = sbr.rel (0) target = $region57
    $region56: #{dqn_forward.1} parent=1 // pred_region
      %2689 = dma.done [#allocation5], 32
    $region57: #{dqn_forward.1} parent=1 // pred_fallthru
      _
    %2690 = vsyncpa [#allocation5], 1

</llo_original>
